<compile_context>
chip_gen: v5e
topology: v5e:2x2
jax: 0.10.0
libtpu: 0.0.40
codegen_flags: <defaults>
</compile_context>

<pallas_src>
import math
import functools

import numpy as np
import jax
import jax.numpy as jnp
from jax.experimental import pallas as pl
from jax.experimental.pallas import tpu as pltpu


_TM_MAX = 512          # row-tile cap for the (B*T)-tiled kernels


# --------------------------- hardware-derived knobs --------------------------

@functools.lru_cache(maxsize=None)
def _vmem_limit():
    """Scoped-VMEM budget derived from the actual chip (v7x 64 MiB, v5e/v6e 128 MiB)."""
    cap = 64 * 1024 * 1024                       # conservative fallback (v7x per-core)
    try:
        cap = int(pltpu.get_tpu_info().vmem_capacity_bytes)
    except Exception:
        pass
    return min((cap * 3) // 4, 100 * 1024 * 1024)


def _cparams(sem):
    return pltpu.CompilerParams(dimension_semantics=sem, vmem_limit_bytes=_vmem_limit())


def _cost(flops, bytes_accessed, transcendentals=0):
    try:
        return pl.CostEstimate(flops=int(flops), transcendentals=int(transcendentals),
                               bytes_accessed=int(bytes_accessed))
    except Exception:
        return None


def _probe_weight_pipeline():
    """Use single-buffered resident weights (pl.Buffered(1)) if this JAX supports it."""
    try:
        mode = pl.Buffered(1)

        def _k(x_ref, w_ref, o_ref):
            o_ref[...] = x_ref[...] + w_ref[...]

        f = pl.pallas_call(
            _k,
            out_shape=jax.ShapeDtypeStruct((16, 128), jnp.float32),
            grid=(2,),
            in_specs=[pl.BlockSpec((8, 128), lambda i: (i, 0)),
                      pl.BlockSpec((8, 128), lambda i: (0, 0), pipeline_mode=mode)],
            out_specs=pl.BlockSpec((8, 128), lambda i: (i, 0)),
        )
        jax.block_until_ready(f(jnp.zeros((16, 128), jnp.float32),
                                jnp.ones((8, 128), jnp.float32)))
        return {"pipeline_mode": mode}
    except Exception:
        return {}


_WEIGHT_PIPE = _probe_weight_pipeline()


def _wspec(shape):
    """BlockSpec for a grid-resident (constant block index) weight on a 1-D grid."""
    zeros = (0,) * len(shape)
    return pl.BlockSpec(shape, lambda i: zeros, **_WEIGHT_PIPE)


# ------------------------------- small helpers -------------------------------

def _row_plan(M):
    """Row tile + padded row count; prefer a divisor of M so no padding copy is needed."""
    if M <= _TM_MAX:
        return M, M
    cap = _TM_MAX - (_TM_MAX % 8)
    for tm in range(cap, 7, -8):
        if M % tm == 0:
            return tm, M
    tm = cap
    return tm, ((M + tm - 1) // tm) * tm


def _maybe_pad_rows(x, m_pad):
    M = x.shape[0]
    return x if m_pad == M else jnp.pad(x, ((0, m_pad - M), (0, 0)))


def _mm(x, w):
    """bf16 MXU matmul with f32 accumulation; weights are pre-cast to bf16 once."""
    return jnp.dot(x.astype(jnp.bfloat16), w, preferred_element_type=jnp.float32)


def _ln(x, g, b, eps=1e-5):
    mean = jnp.mean(x, axis=-1, keepdims=True)
    var = jnp.mean(jnp.square(x - mean), axis=-1, keepdims=True)
    return (x - mean) * jax.lax.rsqrt(var + eps) * g + b


# ----------------------------- Pallas kernel bodies --------------------------

# 1) y = LayerNorm(x @ w + b)   (encoder input projection + layer_norm_in, fused)
def _linear_ln_kernel(x_ref, w_ref, b_ref, g_ref, beta_ref, o_ref):
    h = _mm(x_ref[...], w_ref[...]) + b_ref[...]
    o_ref[...] = _ln(h, g_ref[...], beta_ref[...]).astype(o_ref.dtype)


# 2) y = x @ w                  (positional projection, no bias; bf16 out)
def _linear_kernel(x_ref, w_ref, o_ref):
    o_ref[...] = _mm(x_ref[...], w_ref[...]).astype(o_ref.dtype)


# 3) y = x + scale * FFN(LayerNorm(x))  -- pre-norm FFN sublayer, residual fused.
#    TODO(synk): PositionwiseFeedForward activation assumed ReLU (ESPnet default).
def _ln_ffn_res_kernel(x_ref, g_ref, b_ref, w1_ref, b1_ref, w2_ref, b2_ref, o_ref, *, scale):
    x = x_ref[...]
    nx = _ln(x, g_ref[...], b_ref[...])
    h = jnp.maximum(_mm(nx, w1_ref[...]) + b1_ref[...], 0.0)
    y = _mm(h, w2_ref[...]) + b2_ref[...]
    o_ref[...] = (x + scale * y).astype(o_ref.dtype)


# 4) qkv = LayerNorm(x) @ W_qkv + b_qkv  (fused Q/K/V projection, bf16 out)
def _ln_linear_kernel(x_ref, g_ref, b_ref, w_ref, bias_ref, o_ref):
    nx = _ln(x_ref[...], g_ref[...], b_ref[...])
    o_ref[...] = (_mm(nx, w_ref[...]) + bias_ref[...]).astype(o_ref.dtype)


# 5) y = x + ctx @ w_o + b_o  (attention output projection, residual fused)
def _res_linear_kernel(x_ref, c_ref, w_ref, b_ref, o_ref):
    o_ref[...] = (x_ref[...] + _mm(c_ref[...], w_ref[...]) + b_ref[...]).astype(o_ref.dtype)


# ---- fused relative-position attention (per (batch, head) grid point) -------

def _var_roll_right(x, shift):
    """Roll each row of x right by shift[t] (0 <= shift < T) using log2(T) static rolls."""
    T = x.shape[1]
    y = x
    b = 1
    while b < T:
        y = jnp.where((shift & b) != 0, jnp.roll(y, b, axis=1), y)
        b *= 2
    return y


def _rel_shift_onchip(x):
    """Legacy ESPnet rel_shift of a (T, T) score matrix, done on-chip (no HBM copy).

    Equivalent to: pad a zero column, reshape (T, T+1)->(T+1, T), drop the first row,
    reshape back.  Per row t:  out[t, j] = x[t, T-1+j-t]   for j <= t
                               out[t, t+1] = 0
                               out[t, j] = x[t+1, j-t-2]   for j >  t+1
    """
    T = x.shape[0]
    t_idx = jax.lax.broadcasted_iota(jnp.int32, (T, T), 0)
    j_idx = jax.lax.broadcasted_iota(jnp.int32, (T, T), 1)
    s_a = jnp.where(t_idx + 1 >= T, t_idx + 1 - T, t_idx + 1)
    s_b = jnp.where(t_idx + 2 >= T, t_idx + 2 - T, t_idx + 2)
    x_next = jnp.roll(x, -1, axis=0)                  # row t holds x[t+1]; last row masked
    a = _var_roll_right(x, s_a)
    b = _var_roll_right(x_next, s_b)
    zero = jnp.zeros_like(x)
    return jnp.where(j_idx <= t_idx, a, jnp.where(j_idx == t_idx + 1, zero, b))


def _attn_fused_kernel(q_ref, k_ref, v_ref, p_ref, u_ref, vb_ref, o_ref, *, scale):
    q = q_ref[0, 0].astype(jnp.float32)               # (T, dk)
    u = u_ref[0]                                       # (1, dk) f32
    vb = vb_ref[0]                                     # (1, dk) f32
    q_u = (q + u).astype(jnp.bfloat16)
    q_v = (q + vb).astype(jnp.bfloat16)
    k = k_ref[0, 0]                                    # (T, dk) bf16
    p = p_ref[0]                                       # (T, dk) bf16
    ac = jnp.dot(q_u, k.T, preferred_element_type=jnp.float32)      # (T, T)
    bd = jnp.dot(q_v, p.T, preferred_element_type=jnp.float32)      # (T, T)
    bd = _rel_shift_onchip(bd)
    s = (ac + bd) * scale
    m = jnp.max(s, axis=-1, keepdims=True)
    e = jnp.exp(s - m)
    probs = e * pl.reciprocal(jnp.sum(e, axis=-1, keepdims=True), approx=True)
    ctx = jnp.dot(probs.astype(jnp.bfloat16), v_ref[0, 0],
                  preferred_element_type=jnp.float32)
    o_ref[0, 0] = ctx.astype(o_ref.dtype)


# ---- full conv module per batch element --------------------------------------
#    LN -> pointwise1 + GLU (two matmuls) -> depthwise conv (roll + mask taps)
#       -> BatchNorm(eval) -> ReLU -> pointwise2 -> +residual
def _conv_module_kernel(x_ref, g_ref, b_ref, wa_ref, ba_ref, wg_ref, bg_ref,
                        dw_ref, dwb_ref, bng_ref, bnb_ref, bnm_ref, bnv_ref,
                        w2_ref, b2_ref, o_ref, *, ksize, pad):
    x = x_ref[0]                                       # (T, C) f32
    nx = _ln(x, g_ref[...], b_ref[...])
    a = _mm(nx, wa_ref[...]) + ba_ref[...]
    gate = _mm(nx, wg_ref[...]) + bg_ref[...]
    u = a * jax.nn.sigmoid(gate)                       # GLU
    T, C = u.shape
    row = jax.lax.broadcasted_iota(jnp.int32, (T, C), 0)
    dw = dw_ref[...]                                   # (ksize, C) f32
    acc = jnp.zeros((T, C), jnp.float32) + dwb_ref[...]
    for kk in range(ksize):                            # static tap loop
        off = kk - pad
        tap = u if off == 0 else jnp.roll(u, -off, axis=0)
        valid = (row + off >= 0) & (row + off < T)
        acc = acc + jnp.where(valid, tap, 0.0) * dw[kk:kk + 1, :]
    y = (acc - bnm_ref[...]) * jax.lax.rsqrt(bnv_ref[...] + 1e-5) * bng_ref[...] + bnb_ref[...]
    z = jnp.maximum(y, 0.0)                            # ReLU
    o_ref[0] = (x + _mm(z, w2_ref[...]) + b2_ref[...]).astype(o_ref.dtype)


# ------------------------------- kernel wrappers ------------------------------

def linear_ln(x2d, w, b, g, beta):
    M, K = x2d.shape
    N = w.shape[1]
    tm, m_pad = _row_plan(M)
    out = pl.pallas_call(
        _linear_ln_kernel,
        out_shape=jax.ShapeDtypeStruct((m_pad, N), jnp.float32),
        grid=(m_pad // tm,),
        in_specs=[pl.BlockSpec((tm, K), lambda i: (i, 0)),
                  _wspec((K, N)), _wspec((1, N)), _wspec((1, N)), _wspec((1, N))],
        out_specs=pl.BlockSpec((tm, N), lambda i: (i, 0)),
        compiler_params=_cparams(("parallel",)),
        cost_estimate=_cost(2 * M * K * N, 4 * M * (K + N) + 2 * K * N, M),
    )(_maybe_pad_rows(x2d, m_pad), w, b, g, beta)
    return out if m_pad == M else out[:M]


def linear(x2d, w, out_dtype=jnp.bfloat16):
    M, K = x2d.shape
    N = w.shape[1]
    tm, m_pad = _row_plan(M)
    out = pl.pallas_call(
        _linear_kernel,
        out_shape=jax.ShapeDtypeStruct((m_pad, N), out_dtype),
        grid=(m_pad // tm,),
        in_specs=[pl.BlockSpec((tm, K), lambda i: (i, 0)), _wspec((K, N))],
        out_specs=pl.BlockSpec((tm, N), lambda i: (i, 0)),
        compiler_params=_cparams(("parallel",)),
    )(_maybe_pad_rows(x2d, m_pad), w)
    return out if m_pad == M else out[:M]


def ln_ffn_res(x2d, g, b, w1, b1, w2, b2, scale):
    M, D = x2d.shape
    DI = w1.shape[1]
    tm, m_pad = _row_plan(M)
    out = pl.pallas_call(
        functools.partial(_ln_ffn_res_kernel, scale=scale),
        out_shape=jax.ShapeDtypeStruct((m_pad, D), jnp.float32),
        grid=(m_pad // tm,),
        in_specs=[pl.BlockSpec((tm, D), lambda i: (i, 0)),
                  _wspec((1, D)), _wspec((1, D)),
                  _wspec((D, DI)), _wspec((1, DI)),
                  _wspec((DI, D)), _wspec((1, D))],
        out_specs=pl.BlockSpec((tm, D), lambda i: (i, 0)),
        compiler_params=_cparams(("parallel",)),
        cost_estimate=_cost(4 * M * D * DI, 8 * M * D + 4 * D * DI, M),
    )(_maybe_pad_rows(x2d, m_pad), g, b, w1, b1, w2, b2)
    return out if m_pad == M else out[:M]


def ln_linear(x2d, g, b, w, bias):
    M, D = x2d.shape
    N = w.shape[1]
    tm, m_pad = _row_plan(M)
    out = pl.pallas_call(
        _ln_linear_kernel,
        out_shape=jax.ShapeDtypeStruct((m_pad, N), jnp.bfloat16),
        grid=(m_pad // tm,),
        in_specs=[pl.BlockSpec((tm, D), lambda i: (i, 0)),
                  _wspec((1, D)), _wspec((1, D)),
                  _wspec((D, N)), _wspec((1, N))],
        out_specs=pl.BlockSpec((tm, N), lambda i: (i, 0)),
        compiler_params=_cparams(("parallel",)),
        cost_estimate=_cost(2 * M * D * N, 4 * M * D + 2 * M * N + 2 * D * N, M),
    )(_maybe_pad_rows(x2d, m_pad), g, b, w, bias)
    return out if m_pad == M else out[:M]


def res_linear(x2d, ctx2d, w, b):
    M, D = x2d.shape
    K = ctx2d.shape[1]
    N = w.shape[1]
    tm, m_pad = _row_plan(M)
    out = pl.pallas_call(
        _res_linear_kernel,
        out_shape=jax.ShapeDtypeStruct((m_pad, N), jnp.float32),
        grid=(m_pad // tm,),
        in_specs=[pl.BlockSpec((tm, D), lambda i: (i, 0)),
                  pl.BlockSpec((tm, K), lambda i: (i, 0)),
                  _wspec((K, N)), _wspec((1, N))],
        out_specs=pl.BlockSpec((tm, N), lambda i: (i, 0)),
        compiler_params=_cparams(("parallel",)),
        cost_estimate=_cost(2 * M * K * N, 4 * M * (D + N) + 2 * M * K + 2 * K * N),
    )(_maybe_pad_rows(x2d, m_pad), _maybe_pad_rows(ctx2d, m_pad), w, b)
    return out if m_pad == M else out[:M]


def attn_fused(q, k, v, pos_h, u_bias, v_bias):
    """Fused rel-pos attention: ac + on-chip rel_shift(bd), softmax, P@V. Grid (B, H)."""
    B, H, T, dk = q.shape
    scale = 1.0 / math.sqrt(dk)
    return pl.pallas_call(
        functools.partial(_attn_fused_kernel, scale=scale),
        out_shape=jax.ShapeDtypeStruct((B, H, T, dk), jnp.bfloat16),
        grid=(B, H),
        in_specs=[pl.BlockSpec((1, 1, T, dk), lambda b, h: (b, h, 0, 0)),
                  pl.BlockSpec((1, 1, T, dk), lambda b, h: (b, h, 0, 0)),
                  pl.BlockSpec((1, 1, T, dk), lambda b, h: (b, h, 0, 0)),
                  pl.BlockSpec((1, T, dk), lambda b, h: (h, 0, 0)),
                  pl.BlockSpec((1, 1, dk), lambda b, h: (h, 0, 0)),
                  pl.BlockSpec((1, 1, dk), lambda b, h: (h, 0, 0))],
        out_specs=pl.BlockSpec((1, 1, T, dk), lambda b, h: (b, h, 0, 0)),
        compiler_params=_cparams(("parallel", "parallel")),
        cost_estimate=_cost(6 * B * H * T * T * dk,
                            8 * B * H * T * dk + 2 * H * T * dk,
                            B * H * T * T),
    )(q, k, v, pos_h, u_bias, v_bias)


def conv_module_block(p, x):
    """x + ConvModule(LayerNorm(x)); reference forward reuses norm_attn here."""
    B, T, C = x.shape
    ksize = p['dw_w'].shape[0]
    pad = (ksize - 1) // 2
    return pl.pallas_call(
        functools.partial(_conv_module_kernel, ksize=ksize, pad=pad),
        out_shape=jax.ShapeDtypeStruct((B, T, C), jnp.float32),
        grid=(B,),
        in_specs=[pl.BlockSpec((1, T, C), lambda i: (i, 0, 0)),
                  _wspec((1, C)), _wspec((1, C)),        # ln gamma/beta (norm_attn)
                  _wspec((C, C)), _wspec((1, C)),        # pw1 "value" half
                  _wspec((C, C)), _wspec((1, C)),        # pw1 "gate" half
                  _wspec((ksize, C)), _wspec((1, C)),    # depthwise w / b
                  _wspec((1, C)), _wspec((1, C)),        # bn gamma / beta
                  _wspec((1, C)), _wspec((1, C)),        # bn mean / var
                  _wspec((C, C)), _wspec((1, C))],       # pw2 w / b
        out_specs=pl.BlockSpec((1, T, C), lambda i: (i, 0, 0)),
        compiler_params=_cparams(("parallel",)),
        cost_estimate=_cost(6 * B * T * C * C + 2 * B * T * C * ksize,
                            8 * B * T * C + 6 * C * C),
    )(x, p['ln_attn_g'], p['ln_attn_b'], p['pw1a_w'], p['pw1a_b'],
      p['pw1g_w'], p['pw1g_b'], p['dw_w'], p['dw_b'],
      p['bn_g'], p['bn_b'], p['bn_m'], p['bn_v'], p['pw2_w'], p['pw2_b'])


# ------------------------------ glue / constants ------------------------------

def rel_positional_encoding(T, D):
    # TODO(synk): ESPnet legacy RelPositionalEncoding (reversed sinusoid), dropout = identity.
    position = np.arange(T - 1, -1, -1, dtype=np.float32)[:, None]
    div_term = np.exp(np.arange(0, D, 2, dtype=np.float32) * -(math.log(10000.0) / D))
    pe = np.zeros((T, D), dtype=np.float32)
    pe[:, 0::2] = np.sin(position * div_term)
    pe[:, 1::2] = np.cos(position * div_term)
    return jnp.asarray(pe)                            # (T, D)


# --------------------------- module forward passes ----------------------------

def attention_block(p, x2d, B, T, pos_emb):
    """x + RelPositionMultiHeadedAttention(norm_attn(x)); everything but the head
    reshuffle is fused in Pallas kernels (bd / rel_shift / softmax / PV on-chip)."""
    D = x2d.shape[1]
    H = p['pos_bias_u'].shape[0]
    dk = D // H
    qkv = ln_linear(x2d, p['ln_attn_g'], p['ln_attn_b'], p['w_qkv'], p['b_qkv'])  # (M,3D) bf16
    qkv = qkv.reshape(B, T, 3, H, dk).transpose(2, 0, 3, 1, 4)                    # (3,B,H,T,dk)
    q, k, v = qkv[0], qkv[1], qkv[2]
    pp = linear(pos_emb, p['wpos'])                                               # (T, D) bf16
    pos_h = pp.reshape(T, H, dk).transpose(1, 0, 2)                               # (H, T, dk)
    ctx = attn_fused(q, k, v, pos_h, p['pos_bias_u'], p['pos_bias_v'])            # (B,H,T,dk) bf16
    ctx2d = ctx.transpose(0, 2, 1, 3).reshape(B * T, D)
    return res_linear(x2d, ctx2d, p['wo'], p['bo'])                               # residual fused


def encoder_layer_forward(p, x2, B, T, pos_emb):
    D = x2.shape[1]
    # macaron FF (ff_scale = 0.5); pre-norm + residual fused; dropout == identity
    x2 = ln_ffn_res(x2, p['ln_ff1_g'], p['ln_ff1_b'],
                    p['ff1_w1'], p['ff1_b1'], p['ff1_w2'], p['ff1_b2'], scale=0.5)
    # self-attention (pre-norm with norm_attn), residual fused
    x2 = attention_block(p, x2, B, T, pos_emb)
    # conv module -- reference forward reuses norm_attn here (norm_conv unused)
    x2 = conv_module_block(p, x2.reshape(B, T, D)).reshape(B * T, D)
    # second FF (no ff_scale, exactly as written in the reference forward)
    x2 = ln_ffn_res(x2, p['ln_ff2_g'], p['ln_ff2_b'],
                    p['ff2_w1'], p['ff2_b1'], p['ff2_w2'], p['ff2_b2'], scale=1.0)
    return x2


def encoder_forward(params, x):
    B, T, Din = x.shape
    D = params['w_in'].shape[1]
    h = linear_ln(x.reshape(B * T, Din), params['w_in'], params['b_in'],
                  params['ln_in_g'], params['ln_in_b'])
    pos_emb = rel_positional_encoding(T, D)           # scaled x from pos-enc is discarded in ref
    x2 = h
    for lp in params['layers']:
        x2 = encoder_layer_forward(lp, x2, B, T, pos_emb)
    return x2.reshape(B, T, D)


# ------------------------------ parameter handling ----------------------------

def prepare_params(params):
    """One-time prep (outside the jitted forward): bf16 matmul weights, fused QKV,
    GLU column split, (H,1,dk) relative-position biases."""
    bf = lambda a: jnp.asarray(a, jnp.bfloat16)
    out = {
        'w_in': bf(params['w_in']), 'b_in': params['b_in'],
        'ln_in_g': params['ln_in_g'], 'ln_in_b': params['ln_in_b'],
        'layers': [],
    }
    for lp in params['layers']:
        D = lp['wq'].shape[0]
        out['layers'].append({
            'ln_ff1_g': lp['ln_ff1_g'], 'ln_ff1_b': lp['ln_ff1_b'],
            'ln_attn_g': lp['ln_attn_g'], 'ln_attn_b': lp['ln_attn_b'],
            'ln_ff2_g': lp['ln_ff2_g'], 'ln_ff2_b': lp['ln_ff2_b'],
            'ff1_w1': bf(lp['ff1_w1']), 'ff1_b1': lp['ff1_b1'],
            'ff1_w2': bf(lp['ff1_w2']), 'ff1_b2': lp['ff1_b2'],
            'ff2_w1': bf(lp['ff2_w1']), 'ff2_b1': lp['ff2_b1'],
            'ff2_w2': bf(lp['ff2_w2']), 'ff2_b2': lp['ff2_b2'],
            'w_qkv': bf(jnp.concatenate([lp['wq'], lp['wk'], lp['wv']], axis=1)),
            'b_qkv': jnp.concatenate([lp['bq'], lp['bk'], lp['bv']], axis=1),
            'wo': bf(lp['wo']), 'bo': lp['bo'],
            'wpos': bf(lp['wpos']),
            'pos_bias_u': lp['pos_bias_u'][:, None, :],    # (H, 1, dk) f32
            'pos_bias_v': lp['pos_bias_v'][:, None, :],
            'pw1a_w': bf(lp['pw1_w'][:, :D]), 'pw1a_b': lp['pw1_b'][:, :D],
            'pw1g_w': bf(lp['pw1_w'][:, D:]), 'pw1g_b': lp['pw1_b'][:, D:],
            'dw_w': lp['dw_w'], 'dw_b': lp['dw_b'],
            'bn_g': lp['bn_g'], 'bn_b': lp['bn_b'],
            'bn_m': lp['bn_m'], 'bn_v': lp['bn_v'],
            'pw2_w': bf(lp['pw2_w']), 'pw2_b': lp['pw2_b'],
        })
    return out


def init_params(key, *, d_input, d_model, d_inner, n_head, kernel_size, n_layers):
    dk = d_model // n_head
    keys = iter(jax.random.split(key, 4 + 32 * n_layers))

    def w(shape, scale=0.02):
        return scale * jax.random.normal(next(keys), shape, dtype=jnp.float32)

    zeros = lambda s: jnp.zeros(s, jnp.float32)
    ones = lambda s: jnp.ones(s, jnp.float32)

    params = {
        'w_in': w((d_input, d_model)), 'b_in': zeros((1, d_model)),
        'ln_in_g': ones((1, d_model)), 'ln_in_b': zeros((1, d_model)),
        'layers': [],
    }
    for _ in range(n_layers):
        params['layers'].append({
            'ln_ff1_g': ones((1, d_model)), 'ln_ff1_b': zeros((1, d_model)),
            'ln_attn_g': ones((1, d_model)), 'ln_attn_b': zeros((1, d_model)),
            'ln_ff2_g': ones((1, d_model)), 'ln_ff2_b': zeros((1, d_model)),
            'ff1_w1': w((d_model, d_inner)), 'ff1_b1': zeros((1, d_inner)),
            'ff1_w2': w((d_inner, d_model)), 'ff1_b2': zeros((1, d_model)),
            'ff2_w1': w((d_model, d_inner)), 'ff2_b1': zeros((1, d_inner)),
            'ff2_w2': w((d_inner, d_model)), 'ff2_b2': zeros((1, d_model)),
            'wq': w((d_model, d_model)), 'bq': zeros((1, d_model)),
            'wk': w((d_model, d_model)), 'bk': zeros((1, d_model)),
            'wv': w((d_model, d_model)), 'bv': zeros((1, d_model)),
            'wo': w((d_model, d_model)), 'bo': zeros((1, d_model)),
            'wpos': w((d_model, d_model)),
            'pos_bias_u': w((n_head, dk)), 'pos_bias_v': w((n_head, dk)),
            'pw1_w': w((d_model, 2 * d_model)), 'pw1_b': zeros((1, 2 * d_model)),
            'dw_w': w((kernel_size, d_model)), 'dw_b': zeros((1, d_model)),
            'bn_g': ones((1, d_model)), 'bn_b': zeros((1, d_model)),
            'bn_m': zeros((1, d_model)), 'bn_v': ones((1, d_model)),
            'pw2_w': w((d_model, d_model)), 'pw2_b': zeros((1, d_model)),
        })
    return params


# ------------------------------------ main -------------------------------------

if __name__ == "__main__":
    key = jax.random.PRNGKey(0)
    kp, kx = jax.random.split(key)
    B, T = 2, 8
    D_MODEL, D_INNER, N_HEAD, KSIZE, N_LAYERS = 32, 64, 4, 7, 2

    raw = init_params(kp, d_input=D_MODEL, d_model=D_MODEL, d_inner=D_INNER,
                      n_head=N_HEAD, kernel_size=KSIZE, n_layers=N_LAYERS)
    params = prepare_params(raw)
    x = jax.random.normal(kx, (B, T, D_MODEL), dtype=jnp.float32)

    fwd = jax.jit(encoder_forward)
    out = fwd(params, x)
    jax.block_until_ready(out)
    assert out.shape == (B, T, D_MODEL)
    assert bool(jnp.all(jnp.isfinite(out)))
    print("KERNEL_OK")
</pallas_src>

<mosaic_0001>
module attributes {stable_mosaic.version = 11 : i64} {
  func.func @_k(%arg0: i32, %arg1: memref<8x128xf32, #tpu.memory_space<vmem>>, %arg2: memref<8x128xf32, #tpu.memory_space<vmem>>, %arg3: memref<8x128xf32, #tpu.memory_space<vmem>>) attributes {dimension_semantics = [#tpu.dimension_semantics<arbitrary>], iteration_bounds = array<i64: 2>, scalar_prefetch = 0 : i64, scratch_operands = 0 : i64, tpu.core_type = #tpu.core_type<tc>, window_params = [{transform_indices = @transform_0, window_bounds = array<i64: 8, 128>}, {pipeline_mode = #tpu.pipeline_mode<synchronous>, transform_indices = @transform_1, window_bounds = array<i64: 8, 128>}, {transform_indices = @transform_2, window_bounds = array<i64: 8, 128>}]} {
    %c0 = arith.constant 0 : index
    %c0_0 = arith.constant 0 : index
    %0 = vector.load %arg1[%c0, %c0_0] : memref<8x128xf32, #tpu.memory_space<vmem>>, vector<8x128xf32>
    %c0_1 = arith.constant 0 : index
    %c0_2 = arith.constant 0 : index
    %1 = vector.load %arg2[%c0_1, %c0_2] : memref<8x128xf32, #tpu.memory_space<vmem>>, vector<8x128xf32>
    %2 = arith.addf %0, %1 : vector<8x128xf32>
    %c0_3 = arith.constant 0 : index
    %c0_4 = arith.constant 0 : index
    %3 = vector.load %arg3[%c0_3, %c0_4] : memref<8x128xf32, #tpu.memory_space<vmem>>, vector<8x128xf32>
    tpu.vector_store %arg3[%c0_3, %c0_4], %2 {strides = array<i32>} : memref<8x128xf32, #tpu.memory_space<vmem>>, vector<8x128xf32>,
    return
  }
  func.func @transform_0(%arg0: i32) -> (i32, i32) {
    %c0_i32 = arith.constant 0 : i32
    %c0_i32_0 = arith.constant 0 : i32
    return %arg0, %c0_i32 : i32, i32
  }
  func.func @transform_1(%arg0: i32) -> (i32, i32) {
    %c0_i32 = arith.constant 0 : i32
    %c0_i32_0 = arith.constant 0 : i32
    %c0_i32_1 = arith.constant 0 : i32
    return %c0_i32, %c0_i32_0 : i32, i32
  }
  func.func @transform_2(%arg0: i32) -> (i32, i32) {
    %c0_i32 = arith.constant 0 : i32
    %c0_i32_0 = arith.constant 0 : i32
    return %arg0, %c0_i32 : i32, i32
  }
}

module attributes {stable_mosaic.version = 11 : i64} {
  func.func @_ln_linear_kernel(%arg0: i32, %arg1: memref<16x32xf32, #tpu.memory_space<vmem>>, %arg2: memref<1x32xf32, #tpu.memory_space<vmem>>, %arg3: memref<1x32xf32, #tpu.memory_space<vmem>>, %arg4: memref<32x96xbf16, #tpu.memory_space<vmem>>, %arg5: memref<1x96xf32, #tpu.memory_space<vmem>>, %arg6: memref<16x96xbf16, #tpu.memory_space<vmem>>) attributes {dimension_semantics = [#tpu.dimension_semantics<parallel>], iteration_bounds = array<i64: 1>, scalar_prefetch = 0 : i64, scratch_operands = 0 : i64, tpu.core_type = #tpu.core_type<tc>, window_params = [{transform_indices = @transform_0, window_bounds = array<i64: 16, 32>}, {pipeline_mode = #tpu.pipeline_mode<synchronous>, transform_indices = @transform_1, window_bounds = array<i64: 1, 32>}, {pipeline_mode = #tpu.pipeline_mode<synchronous>, transform_indices = @transform_2, window_bounds = array<i64: 1, 32>}, {pipeline_mode = #tpu.pipeline_mode<synchronous>, transform_indices = @transform_3, window_bounds = array<i64: 32, 96>}, {pipeline_mode = #tpu.pipeline_mode<synchronous>, transform_indices = @transform_4, window_bounds = array<i64: 1, 96>}, {transform_indices = @transform_5, window_bounds = array<i64: 16, 96>}]} {
    %c0 = arith.constant 0 : index
    %c0_0 = arith.constant 0 : index
    %0 = vector.load %arg1[%c0, %c0_0] : memref<16x32xf32, #tpu.memory_space<vmem>>, vector<16x32xf32>
    %c0_1 = arith.constant 0 : index
    %c0_2 = arith.constant 0 : index
    %1 = vector.load %arg2[%c0_1, %c0_2] : memref<1x32xf32, #tpu.memory_space<vmem>>, vector<1x32xf32>
    %c0_3 = arith.constant 0 : index
    %c0_4 = arith.constant 0 : index
    %2 = vector.load %arg3[%c0_3, %c0_4] : memref<1x32xf32, #tpu.memory_space<vmem>>, vector<1x32xf32>
    %cst = arith.constant dense<0.000000e+00> : vector<16xf32>
    %3 = vector.multi_reduction <add>, %0, %cst [1] : vector<16x32xf32> to vector<16xf32>
    %4 = vector.shape_cast %3 : vector<16xf32> to vector<16x1xf32>
    %cst_5 = arith.constant 3.200000e+01 : f32
    %5 = vector.broadcast %cst_5 : f32 to vector<16x1xf32>
    %6 = arith.divf %4, %5 : vector<16x1xf32>
    %7 = vector.broadcast %6 : vector<16x1xf32> to vector<16x32xf32>
    %8 = arith.subf %0, %7 : vector<16x32xf32>
    %9 = arith.mulf %8, %8 : vector<16x32xf32>
    %cst_6 = arith.constant dense<0.000000e+00> : vector<16xf32>
    %10 = vector.multi_reduction <add>, %9, %cst_6 [1] : vector<16x32xf32> to vector<16xf32>
    %11 = vector.shape_cast %10 : vector<16xf32> to vector<16x1xf32>
    %cst_7 = arith.constant 3.200000e+01 : f32
    %12 = vector.broadcast %cst_7 : f32 to vector<16x1xf32>
    %13 = arith.divf %11, %12 : vector<16x1xf32>
    %14 = vector.broadcast %6 : vector<16x1xf32> to vector<16x32xf32>
    %15 = arith.subf %0, %14 : vector<16x32xf32>
    %cst_8 = arith.constant 9.99999974E-6 : f32
    %16 = vector.broadcast %cst_8 : f32 to vector<16x1xf32>
    %17 = arith.addf %13, %16 : vector<16x1xf32>
    %18 = math.rsqrt %17 : vector<16x1xf32>
    %19 = vector.broadcast %18 : vector<16x1xf32> to vector<16x32xf32>
    %20 = arith.mulf %15, %19 : vector<16x32xf32>
    %21 = vector.broadcast %1 : vector<1x32xf32> to vector<16x32xf32>
    %22 = arith.mulf %20, %21 : vector<16x32xf32>
    %23 = vector.broadcast %2 : vector<1x32xf32> to vector<16x32xf32>
    %24 = arith.addf %22, %23 : vector<16x32xf32>
    %c0_9 = arith.constant 0 : index
    %c0_10 = arith.constant 0 : index
    %25 = vector.load %arg4[%c0_9, %c0_10] : memref<32x96xbf16, #tpu.memory_space<vmem>>, vector<32x96xbf16>
    %26 = arith.truncf %24 : vector<16x32xf32> to vector<16x32xbf16>
    %cst_11 = arith.constant dense<0.000000e+00> : vector<16x96xf32>
    %27 = tpu.matmul %26, %25, %cst_11 {dimension_numbers = #tpu.dot_dimension_numbers<[1], [0], [0], [1], [0, 0, 1, 1], [], []>} : vector<16x32xbf16>, vector<32x96xbf16>, vector<16x96xf32> -> vector<16x96xf32>
    %c0_12 = arith.constant 0 : index
    %c0_13 = arith.constant 0 : index
    %28 = vector.load %arg5[%c0_12, %c0_13] : memref<1x96xf32, #tpu.memory_space<vmem>>, vector<1x96xf32>
    %29 = vector.broadcast %28 : vector<1x96xf32> to vector<16x96xf32>
    %30 = arith.addf %27, %29 : vector<16x96xf32>
    %31 = arith.truncf %30 : vector<16x96xf32> to vector<16x96xbf16>
    %c0_14 = arith.constant 0 : index
    %c0_15 = arith.constant 0 : index
    %32 = vector.load %arg6[%c0_14, %c0_15] : memref<16x96xbf16, #tpu.memory_space<vmem>>, vector<16x96xbf16>
    tpu.vector_store %arg6[%c0_14, %c0_15], %31 {strides = array<i32>} : memref<16x96xbf16, #tpu.memory_space<vmem>>, vector<16x96xbf16>,
    return
  }
  func.func @transform_0(%arg0: i32) -> (i32, i32) {
    %c0_i32 = arith.constant 0 : i32
    %c0_i32_0 = arith.constant 0 : i32
    return %arg0, %c0_i32 : i32, i32
  }
  func.func @transform_1(%arg0: i32) -> (i32, i32) {
    %c0_i32 = arith.constant 0 : i32
    %c0_i32_0 = arith.constant 0 : i32
    %c0_i32_1 = arith.constant 0 : i32
    return %c0_i32, %c0_i32_0 : i32, i32
  }
  func.func @transform_2(%arg0: i32) -> (i32, i32) {
    %c0_i32 = arith.constant 0 : i32
    %c0_i32_0 = arith.constant 0 : i32
    %c0_i32_1 = arith.constant 0 : i32
    return %c0_i32, %c0_i32_0 : i32, i32
  }
  func.func @transform_3(%arg0: i32) -> (i32, i32) {
    %c0_i32 = arith.constant 0 : i32
    %c0_i32_0 = arith.constant 0 : i32
    %c0_i32_1 = arith.constant 0 : i32
    return %c0_i32, %c0_i32_0 : i32, i32
  }
  func.func @transform_4(%arg0: i32) -> (i32, i32) {
    %c0_i32 = arith.constant 0 : i32
    %c0_i32_0 = arith.constant 0 : i32
    %c0_i32_1 = arith.constant 0 : i32
    return %c0_i32, %c0_i32_0 : i32, i32
  }
  func.func @transform_5(%arg0: i32) -> (i32, i32) {
    %c0_i32 = arith.constant 0 : i32
    %c0_i32_0 = arith.constant 0 : i32
    return %arg0, %c0_i32 : i32, i32
  }
}

module attributes {stable_mosaic.version = 11 : i64} {
  func.func @_ln_ffn_res_kernel(%arg0: i32, %arg1: memref<16x32xf32, #tpu.memory_space<vmem>>, %arg2: memref<1x32xf32, #tpu.memory_space<vmem>>, %arg3: memref<1x32xf32, #tpu.memory_space<vmem>>, %arg4: memref<32x64xbf16, #tpu.memory_space<vmem>>, %arg5: memref<1x64xf32, #tpu.memory_space<vmem>>, %arg6: memref<64x32xbf16, #tpu.memory_space<vmem>>, %arg7: memref<1x32xf32, #tpu.memory_space<vmem>>, %arg8: memref<16x32xf32, #tpu.memory_space<vmem>>) attributes {dimension_semantics = [#tpu.dimension_semantics<parallel>], iteration_bounds = array<i64: 1>, scalar_prefetch = 0 : i64, scratch_operands = 0 : i64, tpu.core_type = #tpu.core_type<tc>, window_params = [{transform_indices = @transform_0, window_bounds = array<i64: 16, 32>}, {pipeline_mode = #tpu.pipeline_mode<synchronous>, transform_indices = @transform_1, window_bounds = array<i64: 1, 32>}, {pipeline_mode = #tpu.pipeline_mode<synchronous>, transform_indices = @transform_2, window_bounds = array<i64: 1, 32>}, {pipeline_mode = #tpu.pipeline_mode<synchronous>, transform_indices = @transform_3, window_bounds = array<i64: 32, 64>}, {pipeline_mode = #tpu.pipeline_mode<synchronous>, transform_indices = @transform_4, window_bounds = array<i64: 1, 64>}, {pipeline_mode = #tpu.pipeline_mode<synchronous>, transform_indices = @transform_5, window_bounds = array<i64: 64, 32>}, {pipeline_mode = #tpu.pipeline_mode<synchronous>, transform_indices = @transform_6, window_bounds = array<i64: 1, 32>}, {transform_indices = @transform_7, window_bounds = array<i64: 16, 32>}]} {
    %c0 = arith.constant 0 : index
    %c0_0 = arith.constant 0 : index
    %0 = vector.load %arg1[%c0, %c0_0] : memref<16x32xf32, #tpu.memory_space<vmem>>, vector<16x32xf32>
    %c0_1 = arith.constant 0 : index
    %c0_2 = arith.constant 0 : index
    %1 = vector.load %arg2[%c0_1, %c0_2] : memref<1x32xf32, #tpu.memory_space<vmem>>, vector<1x32xf32>
    %c0_3 = arith.constant 0 : index
    %c0_4 = arith.constant 0 : index
    %2 = vector.load %arg3[%c0_3, %c0_4] : memref<1x32xf32, #tpu.memory_space<vmem>>, vector<1x32xf32>
    %cst = arith.constant dense<0.000000e+00> : vector<16xf32>
    %3 = vector.multi_reduction <add>, %0, %cst [1] : vector<16x32xf32> to vector<16xf32>
    %4 = vector.shape_cast %3 : vector<16xf32> to vector<16x1xf32>
    %cst_5 = arith.constant 3.200000e+01 : f32
    %5 = vector.broadcast %cst_5 : f32 to vector<16x1xf32>
    %6 = arith.divf %4, %5 : vector<16x1xf32>
    %7 = vector.broadcast %6 : vector<16x1xf32> to vector<16x32xf32>
    %8 = arith.subf %0, %7 : vector<16x32xf32>
    %9 = arith.mulf %8, %8 : vector<16x32xf32>
    %cst_6 = arith.constant dense<0.000000e+00> : vector<16xf32>
    %10 = vector.multi_reduction <add>, %9, %cst_6 [1] : vector<16x32xf32> to vector<16xf32>
    %11 = vector.shape_cast %10 : vector<16xf32> to vector<16x1xf32>
    %cst_7 = arith.constant 3.200000e+01 : f32
    %12 = vector.broadcast %cst_7 : f32 to vector<16x1xf32>
    %13 = arith.divf %11, %12 : vector<16x1xf32>
    %14 = vector.broadcast %6 : vector<16x1xf32> to vector<16x32xf32>
    %15 = arith.subf %0, %14 : vector<16x32xf32>
    %cst_8 = arith.constant 9.99999974E-6 : f32
    %16 = vector.broadcast %cst_8 : f32 to vector<16x1xf32>
    %17 = arith.addf %13, %16 : vector<16x1xf32>
    %18 = math.rsqrt %17 : vector<16x1xf32>
    %19 = vector.broadcast %18 : vector<16x1xf32> to vector<16x32xf32>
    %20 = arith.mulf %15, %19 : vector<16x32xf32>
    %21 = vector.broadcast %1 : vector<1x32xf32> to vector<16x32xf32>
    %22 = arith.mulf %20, %21 : vector<16x32xf32>
    %23 = vector.broadcast %2 : vector<1x32xf32> to vector<16x32xf32>
    %24 = arith.addf %22, %23 : vector<16x32xf32>
    %c0_9 = arith.constant 0 : index
    %c0_10 = arith.constant 0 : index
    %25 = vector.load %arg4[%c0_9, %c0_10] : memref<32x64xbf16, #tpu.memory_space<vmem>>, vector<32x64xbf16>
    %26 = arith.truncf %24 : vector<16x32xf32> to vector<16x32xbf16>
    %cst_11 = arith.constant dense<0.000000e+00> : vector<16x64xf32>
    %27 = tpu.matmul %26, %25, %cst_11 {dimension_numbers = #tpu.dot_dimension_numbers<[1], [0], [0], [1], [0, 0, 1, 1], [], []>} : vector<16x32xbf16>, vector<32x64xbf16>, vector<16x64xf32> -> vector<16x64xf32>
    %c0_12 = arith.constant 0 : index
    %c0_13 = arith.constant 0 : index
    %28 = vector.load %arg5[%c0_12, %c0_13] : memref<1x64xf32, #tpu.memory_space<vmem>>, vector<1x64xf32>
    %29 = vector.broadcast %28 : vector<1x64xf32> to vector<16x64xf32>
    %30 = arith.addf %27, %29 : vector<16x64xf32>
    %cst_14 = arith.constant 0.000000e+00 : f32
    %31 = vector.broadcast %cst_14 : f32 to vector<16x64xf32>
    %32 = arith.maximumf %30, %31 : vector<16x64xf32>
    %c0_15 = arith.constant 0 : index
    %c0_16 = arith.constant 0 : index
    %33 = vector.load %arg6[%c0_15, %c0_16] : memref<64x32xbf16, #tpu.memory_space<vmem>>, vector<64x32xbf16>
    %34 = arith.truncf %32 : vector<16x64xf32> to vector<16x64xbf16>
    %cst_17 = arith.constant dense<0.000000e+00> : vector<16x32xf32>
    %35 = tpu.matmul %34, %33, %cst_17 {dimension_numbers = #tpu.dot_dimension_numbers<[1], [0], [0], [1], [0, 0, 1, 1], [], []>} : vector<16x64xbf16>, vector<64x32xbf16>, vector<16x32xf32> -> vector<16x32xf32>
    %c0_18 = arith.constant 0 : index
    %c0_19 = arith.constant 0 : index
    %36 = vector.load %arg7[%c0_18, %c0_19] : memref<1x32xf32, #tpu.memory_space<vmem>>, vector<1x32xf32>
    %37 = vector.broadcast %36 : vector<1x32xf32> to vector<16x32xf32>
    %38 = arith.addf %35, %37 : vector<16x32xf32>
    %cst_20 = arith.constant 5.000000e-01 : f32
    %39 = vector.broadcast %cst_20 : f32 to vector<16x32xf32>
    %40 = arith.mulf %39, %38 : vector<16x32xf32>
    %41 = arith.addf %0, %40 : vector<16x32xf32>
    %c0_21 = arith.constant 0 : index
    %c0_22 = arith.constant 0 : index
    %42 = vector.load %arg8[%c0_21, %c0_22] : memref<16x32xf32, #tpu.memory_space<vmem>>, vector<16x32xf32>
    tpu.vector_store %arg8[%c0_21, %c0_22], %41 {strides = array<i32>} : memref<16x32xf32, #tpu.memory_space<vmem>>, vector<16x32xf32>,
    return
  }
  func.func @transform_0(%arg0: i32) -> (i32, i32) {
    %c0_i32 = arith.constant 0 : i32
    %c0_i32_0 = arith.constant 0 : i32
    return %arg0, %c0_i32 : i32, i32
  }
  func.func @transform_1(%arg0: i32) -> (i32, i32) {
    %c0_i32 = arith.constant 0 : i32
    %c0_i32_0 = arith.constant 0 : i32
    %c0_i32_1 = arith.constant 0 : i32
    return %c0_i32, %c0_i32_0 : i32, i32
  }
  func.func @transform_2(%arg0: i32) -> (i32, i32) {
    %c0_i32 = arith.constant 0 : i32
    %c0_i32_0 = arith.constant 0 : i32
    %c0_i32_1 = arith.constant 0 : i32
    return %c0_i32, %c0_i32_0 : i32, i32
  }
  func.func @transform_3(%arg0: i32) -> (i32, i32) {
    %c0_i32 = arith.constant 0 : i32
    %c0_i32_0 = arith.constant 0 : i32
    %c0_i32_1 = arith.constant 0 : i32
    return %c0_i32, %c0_i32_0 : i32, i32
  }
  func.func @transform_4(%arg0: i32) -> (i32, i32) {
    %c0_i32 = arith.constant 0 : i32
    %c0_i32_0 = arith.constant 0 : i32
    %c0_i32_1 = arith.constant 0 : i32
    return %c0_i32, %c0_i32_0 : i32, i32
  }
  func.func @transform_5(%arg0: i32) -> (i32, i32) {
    %c0_i32 = arith.constant 0 : i32
    %c0_i32_0 = arith.constant 0 : i32
    %c0_i32_1 = arith.constant 0 : i32
    return %c0_i32, %c0_i32_0 : i32, i32
  }
  func.func @transform_6(%arg0: i32) -> (i32, i32) {
    %c0_i32 = arith.constant 0 : i32
    %c0_i32_0 = arith.constant 0 : i32
    %c0_i32_1 = arith.constant 0 : i32
    return %c0_i32, %c0_i32_0 : i32, i32
  }
  func.func @transform_7(%arg0: i32) -> (i32, i32) {
    %c0_i32 = arith.constant 0 : i32
    %c0_i32_0 = arith.constant 0 : i32
    return %arg0, %c0_i32 : i32, i32
  }
}

module attributes {stable_mosaic.version = 11 : i64} {
  func.func @_linear_ln_kernel(%arg0: i32, %arg1: memref<16x32xf32, #tpu.memory_space<vmem>>, %arg2: memref<32x32xbf16, #tpu.memory_space<vmem>>, %arg3: memref<1x32xf32, #tpu.memory_space<vmem>>, %arg4: memref<1x32xf32, #tpu.memory_space<vmem>>, %arg5: memref<1x32xf32, #tpu.memory_space<vmem>>, %arg6: memref<16x32xf32, #tpu.memory_space<vmem>>) attributes {dimension_semantics = [#tpu.dimension_semantics<parallel>], iteration_bounds = array<i64: 1>, scalar_prefetch = 0 : i64, scratch_operands = 0 : i64, tpu.core_type = #tpu.core_type<tc>, window_params = [{transform_indices = @transform_0, window_bounds = array<i64: 16, 32>}, {pipeline_mode = #tpu.pipeline_mode<synchronous>, transform_indices = @transform_1, window_bounds = array<i64: 32, 32>}, {pipeline_mode = #tpu.pipeline_mode<synchronous>, transform_indices = @transform_2, window_bounds = array<i64: 1, 32>}, {pipeline_mode = #tpu.pipeline_mode<synchronous>, transform_indices = @transform_3, window_bounds = array<i64: 1, 32>}, {pipeline_mode = #tpu.pipeline_mode<synchronous>, transform_indices = @transform_4, window_bounds = array<i64: 1, 32>}, {transform_indices = @transform_5, window_bounds = array<i64: 16, 32>}]} {
    %c0 = arith.constant 0 : index
    %c0_0 = arith.constant 0 : index
    %0 = vector.load %arg1[%c0, %c0_0] : memref<16x32xf32, #tpu.memory_space<vmem>>, vector<16x32xf32>
    %c0_1 = arith.constant 0 : index
    %c0_2 = arith.constant 0 : index
    %1 = vector.load %arg2[%c0_1, %c0_2] : memref<32x32xbf16, #tpu.memory_space<vmem>>, vector<32x32xbf16>
    %2 = arith.truncf %0 : vector<16x32xf32> to vector<16x32xbf16>
    %cst = arith.constant dense<0.000000e+00> : vector<16x32xf32>
    %3 = tpu.matmul %2, %1, %cst {dimension_numbers = #tpu.dot_dimension_numbers<[1], [0], [0], [1], [0, 0, 1, 1], [], []>} : vector<16x32xbf16>, vector<32x32xbf16>, vector<16x32xf32> -> vector<16x32xf32>
    %c0_3 = arith.constant 0 : index
    %c0_4 = arith.constant 0 : index
    %4 = vector.load %arg3[%c0_3, %c0_4] : memref<1x32xf32, #tpu.memory_space<vmem>>, vector<1x32xf32>
    %5 = vector.broadcast %4 : vector<1x32xf32> to vector<16x32xf32>
    %6 = arith.addf %3, %5 : vector<16x32xf32>
    %c0_5 = arith.constant 0 : index
    %c0_6 = arith.constant 0 : index
    %7 = vector.load %arg4[%c0_5, %c0_6] : memref<1x32xf32, #tpu.memory_space<vmem>>, vector<1x32xf32>
    %c0_7 = arith.constant 0 : index
    %c0_8 = arith.constant 0 : index
    %8 = vector.load %arg5[%c0_7, %c0_8] : memref<1x32xf32, #tpu.memory_space<vmem>>, vector<1x32xf32>
    %cst_9 = arith.constant dense<0.000000e+00> : vector<16xf32>
    %9 = vector.multi_reduction <add>, %6, %cst_9 [1] : vector<16x32xf32> to vector<16xf32>
    %10 = vector.shape_cast %9 : vector<16xf32> to vector<16x1xf32>
    %cst_10 = arith.constant 3.200000e+01 : f32
    %11 = vector.broadcast %cst_10 : f32 to vector<16x1xf32>
    %12 = arith.divf %10, %11 : vector<16x1xf32>
    %13 = vector.broadcast %12 : vector<16x1xf32> to vector<16x32xf32>
    %14 = arith.subf %6, %13 : vector<16x32xf32>
    %15 = arith.mulf %14, %14 : vector<16x32xf32>
    %cst_11 = arith.constant dense<0.000000e+00> : vector<16xf32>
    %16 = vector.multi_reduction <add>, %15, %cst_11 [1] : vector<16x32xf32> to vector<16xf32>
    %17 = vector.shape_cast %16 : vector<16xf32> to vector<16x1xf32>
    %cst_12 = arith.constant 3.200000e+01 : f32
    %18 = vector.broadcast %cst_12 : f32 to vector<16x1xf32>
    %19 = arith.divf %17, %18 : vector<16x1xf32>
    %20 = vector.broadcast %12 : vector<16x1xf32> to vector<16x32xf32>
    %21 = arith.subf %6, %20 : vector<16x32xf32>
    %cst_13 = arith.constant 9.99999974E-6 : f32
    %22 = vector.broadcast %cst_13 : f32 to vector<16x1xf32>
    %23 = arith.addf %19, %22 : vector<16x1xf32>
    %24 = math.rsqrt %23 : vector<16x1xf32>
    %25 = vector.broadcast %24 : vector<16x1xf32> to vector<16x32xf32>
    %26 = arith.mulf %21, %25 : vector<16x32xf32>
    %27 = vector.broadcast %7 : vector<1x32xf32> to vector<16x32xf32>
    %28 = arith.mulf %26, %27 : vector<16x32xf32>
    %29 = vector.broadcast %8 : vector<1x32xf32> to vector<16x32xf32>
    %30 = arith.addf %28, %29 : vector<16x32xf32>
    %c0_14 = arith.constant 0 : index
    %c0_15 = arith.constant 0 : index
    %31 = vector.load %arg6[%c0_14, %c0_15] : memref<16x32xf32, #tpu.memory_space<vmem>>, vector<16x32xf32>
    tpu.vector_store %arg6[%c0_14, %c0_15], %30 {strides = array<i32>} : memref<16x32xf32, #tpu.memory_space<vmem>>, vector<16x32xf32>,
    return
  }
  func.func @transform_0(%arg0: i32) -> (i32, i32) {
    %c0_i32 = arith.constant 0 : i32
    %c0_i32_0 = arith.constant 0 : i32
    return %arg0, %c0_i32 : i32, i32
  }
  func.func @transform_1(%arg0: i32) -> (i32, i32) {
    %c0_i32 = arith.constant 0 : i32
    %c0_i32_0 = arith.constant 0 : i32
    %c0_i32_1 = arith.constant 0 : i32
    return %c0_i32, %c0_i32_0 : i32, i32
  }
  func.func @transform_2(%arg0: i32) -> (i32, i32) {
    %c0_i32 = arith.constant 0 : i32
    %c0_i32_0 = arith.constant 0 : i32
    %c0_i32_1 = arith.constant 0 : i32
    return %c0_i32, %c0_i32_0 : i32, i32
  }
  func.func @transform_3(%arg0: i32) -> (i32, i32) {
    %c0_i32 = arith.constant 0 : i32
    %c0_i32_0 = arith.constant 0 : i32
    %c0_i32_1 = arith.constant 0 : i32
    return %c0_i32, %c0_i32_0 : i32, i32
  }
  func.func @transform_4(%arg0: i32) -> (i32, i32) {
    %c0_i32 = arith.constant 0 : i32
    %c0_i32_0 = arith.constant 0 : i32
    %c0_i32_1 = arith.constant 0 : i32
    return %c0_i32, %c0_i32_0 : i32, i32
  }
  func.func @transform_5(%arg0: i32) -> (i32, i32) {
    %c0_i32 = arith.constant 0 : i32
    %c0_i32_0 = arith.constant 0 : i32
    return %arg0, %c0_i32 : i32, i32
  }
}

module attributes {stable_mosaic.version = 11 : i64} {
  func.func @_linear_kernel(%arg0: i32, %arg1: memref<8x32xf32, #tpu.memory_space<vmem>>, %arg2: memref<32x32xbf16, #tpu.memory_space<vmem>>, %arg3: memref<8x32xbf16, #tpu.memory_space<vmem>>) attributes {dimension_semantics = [#tpu.dimension_semantics<parallel>], iteration_bounds = array<i64: 1>, scalar_prefetch = 0 : i64, scratch_operands = 0 : i64, tpu.core_type = #tpu.core_type<tc>, window_params = [{transform_indices = @transform_0, window_bounds = array<i64: 8, 32>}, {pipeline_mode = #tpu.pipeline_mode<synchronous>, transform_indices = @transform_1, window_bounds = array<i64: 32, 32>}, {transform_indices = @transform_2, window_bounds = array<i64: 8, 32>}]} {
    %c0 = arith.constant 0 : index
    %c0_0 = arith.constant 0 : index
    %0 = vector.load %arg1[%c0, %c0_0] : memref<8x32xf32, #tpu.memory_space<vmem>>, vector<8x32xf32>
    %c0_1 = arith.constant 0 : index
    %c0_2 = arith.constant 0 : index
    %1 = vector.load %arg2[%c0_1, %c0_2] : memref<32x32xbf16, #tpu.memory_space<vmem>>, vector<32x32xbf16>
    %2 = arith.truncf %0 : vector<8x32xf32> to vector<8x32xbf16>
    %cst = arith.constant dense<0.000000e+00> : vector<8x32xf32>
    %3 = tpu.matmul %2, %1, %cst {dimension_numbers = #tpu.dot_dimension_numbers<[1], [0], [0], [1], [0, 0, 1, 1], [], []>} : vector<8x32xbf16>, vector<32x32xbf16>, vector<8x32xf32> -> vector<8x32xf32>
    %4 = arith.truncf %3 : vector<8x32xf32> to vector<8x32xbf16>
    %c0_3 = arith.constant 0 : index
    %c0_4 = arith.constant 0 : index
    %5 = vector.load %arg3[%c0_3, %c0_4] : memref<8x32xbf16, #tpu.memory_space<vmem>>, vector<8x32xbf16>
    tpu.vector_store %arg3[%c0_3, %c0_4], %4 {strides = array<i32>} : memref<8x32xbf16, #tpu.memory_space<vmem>>, vector<8x32xbf16>,
    return
  }
  func.func @transform_0(%arg0: i32) -> (i32, i32) {
    %c0_i32 = arith.constant 0 : i32
    %c0_i32_0 = arith.constant 0 : i32
    return %arg0, %c0_i32 : i32, i32
  }
  func.func @transform_1(%arg0: i32) -> (i32, i32) {
    %c0_i32 = arith.constant 0 : i32
    %c0_i32_0 = arith.constant 0 : i32
    %c0_i32_1 = arith.constant 0 : i32
    return %c0_i32, %c0_i32_0 : i32, i32
  }
  func.func @transform_2(%arg0: i32) -> (i32, i32) {
    %c0_i32 = arith.constant 0 : i32
    %c0_i32_0 = arith.constant 0 : i32
    return %arg0, %c0_i32 : i32, i32
  }
}

module attributes {stable_mosaic.version = 11 : i64} {
  func.func @_attn_fused_kernel(%arg0: i32, %arg1: i32, %arg2: memref<1x1x8x8xbf16, #tpu.memory_space<vmem>>, %arg3: memref<1x1x8x8xbf16, #tpu.memory_space<vmem>>, %arg4: memref<1x1x8x8xbf16, #tpu.memory_space<vmem>>, %arg5: memref<1x8x8xbf16, #tpu.memory_space<vmem>>, %arg6: memref<1x1x8xf32, #tpu.memory_space<vmem>>, %arg7: memref<1x1x8xf32, #tpu.memory_space<vmem>>, %arg8: memref<1x1x8x8xbf16, #tpu.memory_space<vmem>>) attributes {dimension_semantics = [#tpu.dimension_semantics<parallel>, #tpu.dimension_semantics<parallel>], iteration_bounds = array<i64: 2, 4>, scalar_prefetch = 0 : i64, scratch_operands = 0 : i64, tpu.core_type = #tpu.core_type<tc>, window_params = [{transform_indices = @transform_0, window_bounds = array<i64: 1, 1, 8, 8>}, {transform_indices = @transform_1, window_bounds = array<i64: 1, 1, 8, 8>}, {transform_indices = @transform_2, window_bounds = array<i64: 1, 1, 8, 8>}, {transform_indices = @transform_3, window_bounds = array<i64: 1, 8, 8>}, {transform_indices = @transform_4, window_bounds = array<i64: 1, 1, 8>}, {transform_indices = @transform_5, window_bounds = array<i64: 1, 1, 8>}, {transform_indices = @transform_6, window_bounds = array<i64: 1, 1, 8, 8>}]} {
    %c0 = arith.constant 0 : index
    %c0_0 = arith.constant 0 : index
    %c0_1 = arith.constant 0 : index
    %c0_2 = arith.constant 0 : index
    %0 = vector.load %arg2[%c0, %c0_0, %c0_1, %c0_2] : memref<1x1x8x8xbf16, #tpu.memory_space<vmem>>, vector<1x1x8x8xbf16>
    %1 = vector.shape_cast %0 : vector<1x1x8x8xbf16> to vector<8x8xbf16>
    %2 = arith.extf %1 : vector<8x8xbf16> to vector<8x8xf32>
    %c0_3 = arith.constant 0 : index
    %c0_4 = arith.constant 0 : index
    %c0_5 = arith.constant 0 : index
    %3 = vector.load %arg6[%c0_3, %c0_4, %c0_5] : memref<1x1x8xf32, #tpu.memory_space<vmem>>, vector<1x1x8xf32>
    %4 = vector.shape_cast %3 : vector<1x1x8xf32> to vector<1x8xf32>
    %c0_6 = arith.constant 0 : index
    %c0_7 = arith.constant 0 : index
    %c0_8 = arith.constant 0 : index
    %5 = vector.load %arg7[%c0_6, %c0_7, %c0_8] : memref<1x1x8xf32, #tpu.memory_space<vmem>>, vector<1x1x8xf32>
    %6 = vector.shape_cast %5 : vector<1x1x8xf32> to vector<1x8xf32>
    %7 = vector.broadcast %4 : vector<1x8xf32> to vector<8x8xf32>
    %8 = arith.addf %2, %7 : vector<8x8xf32>
    %9 = arith.truncf %8 : vector<8x8xf32> to vector<8x8xbf16>
    %10 = vector.broadcast %6 : vector<1x8xf32> to vector<8x8xf32>
    %11 = arith.addf %2, %10 : vector<8x8xf32>
    %12 = arith.truncf %11 : vector<8x8xf32> to vector<8x8xbf16>
    %c0_9 = arith.constant 0 : index
    %c0_10 = arith.constant 0 : index
    %c0_11 = arith.constant 0 : index
    %c0_12 = arith.constant 0 : index
    %13 = vector.load %arg3[%c0_9, %c0_10, %c0_11, %c0_12] : memref<1x1x8x8xbf16, #tpu.memory_space<vmem>>, vector<1x1x8x8xbf16>
    %14 = vector.shape_cast %13 : vector<1x1x8x8xbf16> to vector<8x8xbf16>
    %c0_13 = arith.constant 0 : index
    %c0_14 = arith.constant 0 : index
    %c0_15 = arith.constant 0 : index
    %15 = vector.load %arg5[%c0_13, %c0_14, %c0_15] : memref<1x8x8xbf16, #tpu.memory_space<vmem>>, vector<1x8x8xbf16>
    %16 = vector.shape_cast %15 : vector<1x8x8xbf16> to vector<8x8xbf16>
    %17 = tpu.transpose %14, [1, 0] : vector<8x8xbf16> -> vector<8x8xbf16>
    %cst = arith.constant dense<0.000000e+00> : vector<8x8xf32>
    %18 = tpu.matmul %9, %17, %cst {dimension_numbers = #tpu.dot_dimension_numbers<[1], [0], [0], [1], [0, 0, 1, 1], [], []>} : vector<8x8xbf16>, vector<8x8xbf16>, vector<8x8xf32> -> vector<8x8xf32>
    %19 = tpu.transpose %16, [1, 0] : vector<8x8xbf16> -> vector<8x8xbf16>
    %cst_16 = arith.constant dense<0.000000e+00> : vector<8x8xf32>
    %20 = tpu.matmul %12, %19, %cst_16 {dimension_numbers = #tpu.dot_dimension_numbers<[1], [0], [0], [1], [0, 0, 1, 1], [], []>} : vector<8x8xbf16>, vector<8x8xbf16>, vector<8x8xf32> -> vector<8x8xf32>
    %21 = tpu.iota {dimensions = array<i32: 0>} : vector<8x8xi32>
    %22 = tpu.iota {dimensions = array<i32: 1>} : vector<8x8xi32>
    %c1_i32 = arith.constant 1 : i32
    %23 = vector.broadcast %c1_i32 : i32 to vector<8x8xi32>
    %24 = arith.addi %21, %23 : vector<8x8xi32>
    %c8_i32 = arith.constant 8 : i32
    %25 = vector.broadcast %c8_i32 : i32 to vector<8x8xi32>
    %26 = arith.cmpi sge, %24, %25 : vector<8x8xi32>
    %c1_i32_17 = arith.constant 1 : i32
    %27 = vector.broadcast %c1_i32_17 : i32 to vector<8x8xi32>
    %28 = arith.addi %21, %27 : vector<8x8xi32>
    %c8_i32_18 = arith.constant 8 : i32
    %29 = vector.broadcast %c8_i32_18 : i32 to vector<8x8xi32>
    %30 = arith.subi %28, %29 : vector<8x8xi32>
    %c1_i32_19 = arith.constant 1 : i32
    %31 = vector.broadcast %c1_i32_19 : i32 to vector<8x8xi32>
    %32 = arith.addi %21, %31 : vector<8x8xi32>
    %33 = arith.select %26, %30, %32 : vector<8x8xi1>, vector<8x8xi32>
    %c2_i32 = arith.constant 2 : i32
    %34 = vector.broadcast %c2_i32 : i32 to vector<8x8xi32>
    %35 = arith.addi %21, %34 : vector<8x8xi32>
    %c8_i32_20 = arith.constant 8 : i32
    %36 = vector.broadcast %c8_i32_20 : i32 to vector<8x8xi32>
    %37 = arith.cmpi sge, %35, %36 : vector<8x8xi32>
    %c2_i32_21 = arith.constant 2 : i32
    %38 = vector.broadcast %c2_i32_21 : i32 to vector<8x8xi32>
    %39 = arith.addi %21, %38 : vector<8x8xi32>
    %c8_i32_22 = arith.constant 8 : i32
    %40 = vector.broadcast %c8_i32_22 : i32 to vector<8x8xi32>
    %41 = arith.subi %39, %40 : vector<8x8xi32>
    %c2_i32_23 = arith.constant 2 : i32
    %42 = vector.broadcast %c2_i32_23 : i32 to vector<8x8xi32>
    %43 = arith.addi %21, %42 : vector<8x8xi32>
    %44 = arith.select %37, %41, %43 : vector<8x8xi1>, vector<8x8xi32>
    %45 = vector.extract_strided_slice %20 {offsets = [1, 0], sizes = [7, 8], strides = [1, 1]} : vector<8x8xf32> to vector<7x8xf32>
    %46 = vector.extract_strided_slice %20 {offsets = [0, 0], sizes = [1, 8], strides = [1, 1]} : vector<8x8xf32> to vector<1x8xf32>
    %47 = tpu.concatenate %45, %46 in 0 : vector<7x8xf32>, vector<1x8xf32> -> vector<8x8xf32>
    %c1_i32_24 = arith.constant 1 : i32
    %48 = vector.broadcast %c1_i32_24 : i32 to vector<8x8xi32>
    %49 = arith.andi %33, %48 : vector<8x8xi32>
    %c0_i32 = arith.constant 0 : i32
    %50 = vector.broadcast %c0_i32 : i32 to vector<8x8xi32>
    %51 = arith.cmpi ne, %49, %50 : vector<8x8xi32>
    %52 = vector.extract_strided_slice %20 {offsets = [0, 7], sizes = [8, 1], strides = [1, 1]} : vector<8x8xf32> to vector<8x1xf32>
    %53 = vector.extract_strided_slice %20 {offsets = [0, 0], sizes = [8, 7], strides = [1, 1]} : vector<8x8xf32> to vector<8x7xf32>
    %54 = tpu.concatenate %52, %53 in 1 : vector<8x1xf32>, vector<8x7xf32> -> vector<8x8xf32>
    %55 = arith.select %51, %54, %20 : vector<8x8xi1>, vector<8x8xf32>
    %c2_i32_25 = arith.constant 2 : i32
    %56 = vector.broadcast %c2_i32_25 : i32 to vector<8x8xi32>
    %57 = arith.andi %33, %56 : vector<8x8xi32>
    %c0_i32_26 = arith.constant 0 : i32
    %58 = vector.broadcast %c0_i32_26 : i32 to vector<8x8xi32>
    %59 = arith.cmpi ne, %57, %58 : vector<8x8xi32>
    %60 = vector.extract_strided_slice %55 {offsets = [0, 6], sizes = [8, 2], strides = [1, 1]} : vector<8x8xf32> to vector<8x2xf32>
    %61 = vector.extract_strided_slice %55 {offsets = [0, 0], sizes = [8, 6], strides = [1, 1]} : vector<8x8xf32> to vector<8x6xf32>
    %62 = tpu.concatenate %60, %61 in 1 : vector<8x2xf32>, vector<8x6xf32> -> vector<8x8xf32>
    %63 = arith.select %59, %62, %55 : vector<8x8xi1>, vector<8x8xf32>
    %c4_i32 = arith.constant 4 : i32
    %64 = vector.broadcast %c4_i32 : i32 to vector<8x8xi32>
    %65 = arith.andi %33, %64 : vector<8x8xi32>
    %c0_i32_27 = arith.constant 0 : i32
    %66 = vector.broadcast %c0_i32_27 : i32 to vector<8x8xi32>
    %67 = arith.cmpi ne, %65, %66 : vector<8x8xi32>
    %68 = vector.extract_strided_slice %63 {offsets = [0, 4], sizes = [8, 4], strides = [1, 1]} : vector<8x8xf32> to vector<8x4xf32>
    %69 = vector.extract_strided_slice %63 {offsets = [0, 0], sizes = [8, 4], strides = [1, 1]} : vector<8x8xf32> to vector<8x4xf32>
    %70 = tpu.concatenate %68, %69 in 1 : vector<8x4xf32>, vector<8x4xf32> -> vector<8x8xf32>
    %71 = arith.select %67, %70, %63 : vector<8x8xi1>, vector<8x8xf32>
    %c1_i32_28 = arith.constant 1 : i32
    %72 = vector.broadcast %c1_i32_28 : i32 to vector<8x8xi32>
    %73 = arith.andi %44, %72 : vector<8x8xi32>
    %c0_i32_29 = arith.constant 0 : i32
    %74 = vector.broadcast %c0_i32_29 : i32 to vector<8x8xi32>
    %75 = arith.cmpi ne, %73, %74 : vector<8x8xi32>
    %76 = vector.extract_strided_slice %47 {offsets = [0, 7], sizes = [8, 1], strides = [1, 1]} : vector<8x8xf32> to vector<8x1xf32>
    %77 = vector.extract_strided_slice %47 {offsets = [0, 0], sizes = [8, 7], strides = [1, 1]} : vector<8x8xf32> to vector<8x7xf32>
    %78 = tpu.concatenate %76, %77 in 1 : vector<8x1xf32>, vector<8x7xf32> -> vector<8x8xf32>
    %79 = arith.select %75, %78, %47 : vector<8x8xi1>, vector<8x8xf32>
    %c2_i32_30 = arith.constant 2 : i32
    %80 = vector.broadcast %c2_i32_30 : i32 to vector<8x8xi32>
    %81 = arith.andi %44, %80 : vector<8x8xi32>
    %c0_i32_31 = arith.constant 0 : i32
    %82 = vector.broadcast %c0_i32_31 : i32 to vector<8x8xi32>
    %83 = arith.cmpi ne, %81, %82 : vector<8x8xi32>
    %84 = vector.extract_strided_slice %79 {offsets = [0, 6], sizes = [8, 2], strides = [1, 1]} : vector<8x8xf32> to vector<8x2xf32>
    %85 = vector.extract_strided_slice %79 {offsets = [0, 0], sizes = [8, 6], strides = [1, 1]} : vector<8x8xf32> to vector<8x6xf32>
    %86 = tpu.concatenate %84, %85 in 1 : vector<8x2xf32>, vector<8x6xf32> -> vector<8x8xf32>
    %87 = arith.select %83, %86, %79 : vector<8x8xi1>, vector<8x8xf32>
    %c4_i32_32 = arith.constant 4 : i32
    %88 = vector.broadcast %c4_i32_32 : i32 to vector<8x8xi32>
    %89 = arith.andi %44, %88 : vector<8x8xi32>
    %c0_i32_33 = arith.constant 0 : i32
    %90 = vector.broadcast %c0_i32_33 : i32 to vector<8x8xi32>
    %91 = arith.cmpi ne, %89, %90 : vector<8x8xi32>
    %92 = vector.extract_strided_slice %87 {offsets = [0, 4], sizes = [8, 4], strides = [1, 1]} : vector<8x8xf32> to vector<8x4xf32>
    %93 = vector.extract_strided_slice %87 {offsets = [0, 0], sizes = [8, 4], strides = [1, 1]} : vector<8x8xf32> to vector<8x4xf32>
    %94 = tpu.concatenate %92, %93 in 1 : vector<8x4xf32>, vector<8x4xf32> -> vector<8x8xf32>
    %95 = arith.select %91, %94, %87 : vector<8x8xi1>, vector<8x8xf32>
    %cst_34 = arith.constant 0.000000e+00 : f32
    %96 = vector.broadcast %cst_34 : f32 to vector<8x8xf32>
    %97 = arith.cmpi sle, %22, %21 : vector<8x8xi32>
    %c1_i32_35 = arith.constant 1 : i32
    %98 = vector.broadcast %c1_i32_35 : i32 to vector<8x8xi32>
    %99 = arith.addi %21, %98 : vector<8x8xi32>
    %100 = arith.cmpi eq, %22, %99 : vector<8x8xi32>
    %101 = arith.select %100, %96, %95 : vector<8x8xi1>, vector<8x8xf32>
    %102 = arith.select %97, %71, %101 : vector<8x8xi1>, vector<8x8xf32>
    %103 = arith.addf %18, %102 : vector<8x8xf32>
    %cst_36 = arith.constant 0.353553385 : f32
    %104 = vector.broadcast %cst_36 : f32 to vector<8x8xf32>
    %105 = arith.mulf %103, %104 : vector<8x8xf32>
    %cst_37 = arith.constant dense<0xFF800000> : vector<8xf32>
    %106 = vector.multi_reduction <maximumf>, %105, %cst_37 [1] : vector<8x8xf32> to vector<8xf32>
    %107 = vector.shape_cast %106 : vector<8xf32> to vector<8x1xf32>
    %108 = vector.broadcast %107 : vector<8x1xf32> to vector<8x8xf32>
    %109 = arith.subf %105, %108 : vector<8x8xf32>
    %110 = math.exp %109 : vector<8x8xf32>
    %cst_38 = arith.constant dense<0.000000e+00> : vector<8xf32>
    %111 = vector.multi_reduction <add>, %110, %cst_38 [1] : vector<8x8xf32> to vector<8xf32>
    %112 = vector.shape_cast %111 : vector<8xf32> to vector<8x1xf32>
    %113 = tpu.reciprocal %112 {approx = true} : vector<8x1xf32> -> vector<8x1xf32>
    %114 = vector.broadcast %113 : vector<8x1xf32> to vector<8x8xf32>
    %115 = arith.mulf %110, %114 : vector<8x8xf32>
    %116 = arith.truncf %115 : vector<8x8xf32> to vector<8x8xbf16>
    %c0_39 = arith.constant 0 : index
    %c0_40 = arith.constant 0 : index
    %c0_41 = arith.constant 0 : index
    %c0_42 = arith.constant 0 : index
    %117 = vector.load %arg4[%c0_39, %c0_40, %c0_41, %c0_42] : memref<1x1x8x8xbf16, #tpu.memory_space<vmem>>, vector<1x1x8x8xbf16>
    %118 = vector.shape_cast %117 : vector<1x1x8x8xbf16> to vector<8x8xbf16>
    %cst_43 = arith.constant dense<0.000000e+00> : vector<8x8xf32>
    %119 = tpu.matmul %116, %118, %cst_43 {dimension_numbers = #tpu.dot_dimension_numbers<[1], [0], [0], [1], [0, 0, 1, 1], [], []>} : vector<8x8xbf16>, vector<8x8xbf16>, vector<8x8xf32> -> vector<8x8xf32>
    %120 = arith.truncf %119 : vector<8x8xf32> to vector<8x8xbf16>
    %c0_44 = arith.constant 0 : index
    %c0_45 = arith.constant 0 : index
    %c0_46 = arith.constant 0 : index
    %c0_47 = arith.constant 0 : index
    %121 = vector.load %arg8[%c0_44, %c0_45, %c0_46, %c0_47] : memref<1x1x8x8xbf16, #tpu.memory_space<vmem>>, vector<1x1x8x8xbf16>
    %122 = vector.shape_cast %121 : vector<1x1x8x8xbf16> to vector<8x8xbf16>
    %123 = vector.shape_cast %120 : vector<8x8xbf16> to vector<1x1x8x8xbf16>
    tpu.vector_store %arg8[%c0_44, %c0_45, %c0_46, %c0_47], %123 {strides = array<i32>} : memref<1x1x8x8xbf16, #tpu.memory_space<vmem>>, vector<1x1x8x8xbf16>,
    return
  }
  func.func @transform_0(%arg0: i32, %arg1: i32) -> (i32, i32, i32, i32) {
    %c0_i32 = arith.constant 0 : i32
    %c0_i32_0 = arith.constant 0 : i32
    %c0_i32_1 = arith.constant 0 : i32
    return %arg0, %arg1, %c0_i32, %c0_i32_0 : i32, i32, i32, i32
  }
  func.func @transform_1(%arg0: i32, %arg1: i32) -> (i32, i32, i32, i32) {
    %c0_i32 = arith.constant 0 : i32
    %c0_i32_0 = arith.constant 0 : i32
    %c0_i32_1 = arith.constant 0 : i32
    return %arg0, %arg1, %c0_i32, %c0_i32_0 : i32, i32, i32, i32
  }
  func.func @transform_2(%arg0: i32, %arg1: i32) -> (i32, i32, i32, i32) {
    %c0_i32 = arith.constant 0 : i32
    %c0_i32_0 = arith.constant 0 : i32
    %c0_i32_1 = arith.constant 0 : i32
    return %arg0, %arg1, %c0_i32, %c0_i32_0 : i32, i32, i32, i32
  }
  func.func @transform_3(%arg0: i32, %arg1: i32) -> (i32, i32, i32) {
    %c0_i32 = arith.constant 0 : i32
    %c0_i32_0 = arith.constant 0 : i32
    %c0_i32_1 = arith.constant 0 : i32
    return %arg1, %c0_i32, %c0_i32_0 : i32, i32, i32
  }
  func.func @transform_4(%arg0: i32, %arg1: i32) -> (i32, i32, i32) {
    %c0_i32 = arith.constant 0 : i32
    %c0_i32_0 = arith.constant 0 : i32
    %c0_i32_1 = arith.constant 0 : i32
    return %arg1, %c0_i32, %c0_i32_0 : i32, i32, i32
  }
  func.func @transform_5(%arg0: i32, %arg1: i32) -> (i32, i32, i32) {
    %c0_i32 = arith.constant 0 : i32
    %c0_i32_0 = arith.constant 0 : i32
    %c0_i32_1 = arith.constant 0 : i32
    return %arg1, %c0_i32, %c0_i32_0 : i32, i32, i32
  }
  func.func @transform_6(%arg0: i32, %arg1: i32) -> (i32, i32, i32, i32) {
    %c0_i32 = arith.constant 0 : i32
    %c0_i32_0 = arith.constant 0 : i32
    %c0_i32_1 = arith.constant 0 : i32
    return %arg0, %arg1, %c0_i32, %c0_i32_0 : i32, i32, i32, i32
  }
}

module attributes {stable_mosaic.version = 11 : i64} {
  func.func @_res_linear_kernel(%arg0: i32, %arg1: memref<16x32xf32, #tpu.memory_space<vmem>>, %arg2: memref<16x32xbf16, #tpu.memory_space<vmem>>, %arg3: memref<32x32xbf16, #tpu.memory_space<vmem>>, %arg4: memref<1x32xf32, #tpu.memory_space<vmem>>, %arg5: memref<16x32xf32, #tpu.memory_space<vmem>>) attributes {dimension_semantics = [#tpu.dimension_semantics<parallel>], iteration_bounds = array<i64: 1>, scalar_prefetch = 0 : i64, scratch_operands = 0 : i64, tpu.core_type = #tpu.core_type<tc>, window_params = [{transform_indices = @transform_0, window_bounds = array<i64: 16, 32>}, {transform_indices = @transform_1, window_bounds = array<i64: 16, 32>}, {pipeline_mode = #tpu.pipeline_mode<synchronous>, transform_indices = @transform_2, window_bounds = array<i64: 32, 32>}, {pipeline_mode = #tpu.pipeline_mode<synchronous>, transform_indices = @transform_3, window_bounds = array<i64: 1, 32>}, {transform_indices = @transform_4, window_bounds = array<i64: 16, 32>}]} {
    %c0 = arith.constant 0 : index
    %c0_0 = arith.constant 0 : index
    %0 = vector.load %arg1[%c0, %c0_0] : memref<16x32xf32, #tpu.memory_space<vmem>>, vector<16x32xf32>
    %c0_1 = arith.constant 0 : index
    %c0_2 = arith.constant 0 : index
    %1 = vector.load %arg2[%c0_1, %c0_2] : memref<16x32xbf16, #tpu.memory_space<vmem>>, vector<16x32xbf16>
    %c0_3 = arith.constant 0 : index
    %c0_4 = arith.constant 0 : index
    %2 = vector.load %arg3[%c0_3, %c0_4] : memref<32x32xbf16, #tpu.memory_space<vmem>>, vector<32x32xbf16>
    %cst = arith.constant dense<0.000000e+00> : vector<16x32xf32>
    %3 = tpu.matmul %1, %2, %cst {dimension_numbers = #tpu.dot_dimension_numbers<[1], [0], [0], [1], [0, 0, 1, 1], [], []>} : vector<16x32xbf16>, vector<32x32xbf16>, vector<16x32xf32> -> vector<16x32xf32>
    %4 = arith.addf %0, %3 : vector<16x32xf32>
    %c0_5 = arith.constant 0 : index
    %c0_6 = arith.constant 0 : index
    %5 = vector.load %arg4[%c0_5, %c0_6] : memref<1x32xf32, #tpu.memory_space<vmem>>, vector<1x32xf32>
    %6 = vector.broadcast %5 : vector<1x32xf32> to vector<16x32xf32>
    %7 = arith.addf %4, %6 : vector<16x32xf32>
    %c0_7 = arith.constant 0 : index
    %c0_8 = arith.constant 0 : index
    %8 = vector.load %arg5[%c0_7, %c0_8] : memref<16x32xf32, #tpu.memory_space<vmem>>, vector<16x32xf32>
    tpu.vector_store %arg5[%c0_7, %c0_8], %7 {strides = array<i32>} : memref<16x32xf32, #tpu.memory_space<vmem>>, vector<16x32xf32>,
    return
  }
  func.func @transform_0(%arg0: i32) -> (i32, i32) {
    %c0_i32 = arith.constant 0 : i32
    %c0_i32_0 = arith.constant 0 : i32
    return %arg0, %c0_i32 : i32, i32
  }
  func.func @transform_1(%arg0: i32) -> (i32, i32) {
    %c0_i32 = arith.constant 0 : i32
    %c0_i32_0 = arith.constant 0 : i32
    return %arg0, %c0_i32 : i32, i32
  }
  func.func @transform_2(%arg0: i32) -> (i32, i32) {
    %c0_i32 = arith.constant 0 : i32
    %c0_i32_0 = arith.constant 0 : i32
    %c0_i32_1 = arith.constant 0 : i32
    return %c0_i32, %c0_i32_0 : i32, i32
  }
  func.func @transform_3(%arg0: i32) -> (i32, i32) {
    %c0_i32 = arith.constant 0 : i32
    %c0_i32_0 = arith.constant 0 : i32
    %c0_i32_1 = arith.constant 0 : i32
    return %c0_i32, %c0_i32_0 : i32, i32
  }
  func.func @transform_4(%arg0: i32) -> (i32, i32) {
    %c0_i32 = arith.constant 0 : i32
    %c0_i32_0 = arith.constant 0 : i32
    return %arg0, %c0_i32 : i32, i32
  }
}

module attributes {stable_mosaic.version = 11 : i64} {
  func.func @_ln_ffn_res_kernel(%arg0: i32, %arg1: memref<16x32xf32, #tpu.memory_space<vmem>>, %arg2: memref<1x32xf32, #tpu.memory_space<vmem>>, %arg3: memref<1x32xf32, #tpu.memory_space<vmem>>, %arg4: memref<32x64xbf16, #tpu.memory_space<vmem>>, %arg5: memref<1x64xf32, #tpu.memory_space<vmem>>, %arg6: memref<64x32xbf16, #tpu.memory_space<vmem>>, %arg7: memref<1x32xf32, #tpu.memory_space<vmem>>, %arg8: memref<16x32xf32, #tpu.memory_space<vmem>>) attributes {dimension_semantics = [#tpu.dimension_semantics<parallel>], iteration_bounds = array<i64: 1>, scalar_prefetch = 0 : i64, scratch_operands = 0 : i64, tpu.core_type = #tpu.core_type<tc>, window_params = [{transform_indices = @transform_0, window_bounds = array<i64: 16, 32>}, {pipeline_mode = #tpu.pipeline_mode<synchronous>, transform_indices = @transform_1, window_bounds = array<i64: 1, 32>}, {pipeline_mode = #tpu.pipeline_mode<synchronous>, transform_indices = @transform_2, window_bounds = array<i64: 1, 32>}, {pipeline_mode = #tpu.pipeline_mode<synchronous>, transform_indices = @transform_3, window_bounds = array<i64: 32, 64>}, {pipeline_mode = #tpu.pipeline_mode<synchronous>, transform_indices = @transform_4, window_bounds = array<i64: 1, 64>}, {pipeline_mode = #tpu.pipeline_mode<synchronous>, transform_indices = @transform_5, window_bounds = array<i64: 64, 32>}, {pipeline_mode = #tpu.pipeline_mode<synchronous>, transform_indices = @transform_6, window_bounds = array<i64: 1, 32>}, {transform_indices = @transform_7, window_bounds = array<i64: 16, 32>}]} {
    %c0 = arith.constant 0 : index
    %c0_0 = arith.constant 0 : index
    %0 = vector.load %arg1[%c0, %c0_0] : memref<16x32xf32, #tpu.memory_space<vmem>>, vector<16x32xf32>
    %c0_1 = arith.constant 0 : index
    %c0_2 = arith.constant 0 : index
    %1 = vector.load %arg2[%c0_1, %c0_2] : memref<1x32xf32, #tpu.memory_space<vmem>>, vector<1x32xf32>
    %c0_3 = arith.constant 0 : index
    %c0_4 = arith.constant 0 : index
    %2 = vector.load %arg3[%c0_3, %c0_4] : memref<1x32xf32, #tpu.memory_space<vmem>>, vector<1x32xf32>
    %cst = arith.constant dense<0.000000e+00> : vector<16xf32>
    %3 = vector.multi_reduction <add>, %0, %cst [1] : vector<16x32xf32> to vector<16xf32>
    %4 = vector.shape_cast %3 : vector<16xf32> to vector<16x1xf32>
    %cst_5 = arith.constant 3.200000e+01 : f32
    %5 = vector.broadcast %cst_5 : f32 to vector<16x1xf32>
    %6 = arith.divf %4, %5 : vector<16x1xf32>
    %7 = vector.broadcast %6 : vector<16x1xf32> to vector<16x32xf32>
    %8 = arith.subf %0, %7 : vector<16x32xf32>
    %9 = arith.mulf %8, %8 : vector<16x32xf32>
    %cst_6 = arith.constant dense<0.000000e+00> : vector<16xf32>
    %10 = vector.multi_reduction <add>, %9, %cst_6 [1] : vector<16x32xf32> to vector<16xf32>
    %11 = vector.shape_cast %10 : vector<16xf32> to vector<16x1xf32>
    %cst_7 = arith.constant 3.200000e+01 : f32
    %12 = vector.broadcast %cst_7 : f32 to vector<16x1xf32>
    %13 = arith.divf %11, %12 : vector<16x1xf32>
    %14 = vector.broadcast %6 : vector<16x1xf32> to vector<16x32xf32>
    %15 = arith.subf %0, %14 : vector<16x32xf32>
    %cst_8 = arith.constant 9.99999974E-6 : f32
    %16 = vector.broadcast %cst_8 : f32 to vector<16x1xf32>
    %17 = arith.addf %13, %16 : vector<16x1xf32>
    %18 = math.rsqrt %17 : vector<16x1xf32>
    %19 = vector.broadcast %18 : vector<16x1xf32> to vector<16x32xf32>
    %20 = arith.mulf %15, %19 : vector<16x32xf32>
    %21 = vector.broadcast %1 : vector<1x32xf32> to vector<16x32xf32>
    %22 = arith.mulf %20, %21 : vector<16x32xf32>
    %23 = vector.broadcast %2 : vector<1x32xf32> to vector<16x32xf32>
    %24 = arith.addf %22, %23 : vector<16x32xf32>
    %c0_9 = arith.constant 0 : index
    %c0_10 = arith.constant 0 : index
    %25 = vector.load %arg4[%c0_9, %c0_10] : memref<32x64xbf16, #tpu.memory_space<vmem>>, vector<32x64xbf16>
    %26 = arith.truncf %24 : vector<16x32xf32> to vector<16x32xbf16>
    %cst_11 = arith.constant dense<0.000000e+00> : vector<16x64xf32>
    %27 = tpu.matmul %26, %25, %cst_11 {dimension_numbers = #tpu.dot_dimension_numbers<[1], [0], [0], [1], [0, 0, 1, 1], [], []>} : vector<16x32xbf16>, vector<32x64xbf16>, vector<16x64xf32> -> vector<16x64xf32>
    %c0_12 = arith.constant 0 : index
    %c0_13 = arith.constant 0 : index
    %28 = vector.load %arg5[%c0_12, %c0_13] : memref<1x64xf32, #tpu.memory_space<vmem>>, vector<1x64xf32>
    %29 = vector.broadcast %28 : vector<1x64xf32> to vector<16x64xf32>
    %30 = arith.addf %27, %29 : vector<16x64xf32>
    %cst_14 = arith.constant 0.000000e+00 : f32
    %31 = vector.broadcast %cst_14 : f32 to vector<16x64xf32>
    %32 = arith.maximumf %30, %31 : vector<16x64xf32>
    %c0_15 = arith.constant 0 : index
    %c0_16 = arith.constant 0 : index
    %33 = vector.load %arg6[%c0_15, %c0_16] : memref<64x32xbf16, #tpu.memory_space<vmem>>, vector<64x32xbf16>
    %34 = arith.truncf %32 : vector<16x64xf32> to vector<16x64xbf16>
    %cst_17 = arith.constant dense<0.000000e+00> : vector<16x32xf32>
    %35 = tpu.matmul %34, %33, %cst_17 {dimension_numbers = #tpu.dot_dimension_numbers<[1], [0], [0], [1], [0, 0, 1, 1], [], []>} : vector<16x64xbf16>, vector<64x32xbf16>, vector<16x32xf32> -> vector<16x32xf32>
    %c0_18 = arith.constant 0 : index
    %c0_19 = arith.constant 0 : index
    %36 = vector.load %arg7[%c0_18, %c0_19] : memref<1x32xf32, #tpu.memory_space<vmem>>, vector<1x32xf32>
    %37 = vector.broadcast %36 : vector<1x32xf32> to vector<16x32xf32>
    %38 = arith.addf %35, %37 : vector<16x32xf32>
    %cst_20 = arith.constant 1.000000e+00 : f32
    %39 = vector.broadcast %cst_20 : f32 to vector<16x32xf32>
    %40 = arith.mulf %39, %38 : vector<16x32xf32>
    %41 = arith.addf %0, %40 : vector<16x32xf32>
    %c0_21 = arith.constant 0 : index
    %c0_22 = arith.constant 0 : index
    %42 = vector.load %arg8[%c0_21, %c0_22] : memref<16x32xf32, #tpu.memory_space<vmem>>, vector<16x32xf32>
    tpu.vector_store %arg8[%c0_21, %c0_22], %41 {strides = array<i32>} : memref<16x32xf32, #tpu.memory_space<vmem>>, vector<16x32xf32>,
    return
  }
  func.func @transform_0(%arg0: i32) -> (i32, i32) {
    %c0_i32 = arith.constant 0 : i32
    %c0_i32_0 = arith.constant 0 : i32
    return %arg0, %c0_i32 : i32, i32
  }
  func.func @transform_1(%arg0: i32) -> (i32, i32) {
    %c0_i32 = arith.constant 0 : i32
    %c0_i32_0 = arith.constant 0 : i32
    %c0_i32_1 = arith.constant 0 : i32
    return %c0_i32, %c0_i32_0 : i32, i32
  }
  func.func @transform_2(%arg0: i32) -> (i32, i32) {
    %c0_i32 = arith.constant 0 : i32
    %c0_i32_0 = arith.constant 0 : i32
    %c0_i32_1 = arith.constant 0 : i32
    return %c0_i32, %c0_i32_0 : i32, i32
  }
  func.func @transform_3(%arg0: i32) -> (i32, i32) {
    %c0_i32 = arith.constant 0 : i32
    %c0_i32_0 = arith.constant 0 : i32
    %c0_i32_1 = arith.constant 0 : i32
    return %c0_i32, %c0_i32_0 : i32, i32
  }
  func.func @transform_4(%arg0: i32) -> (i32, i32) {
    %c0_i32 = arith.constant 0 : i32
    %c0_i32_0 = arith.constant 0 : i32
    %c0_i32_1 = arith.constant 0 : i32
    return %c0_i32, %c0_i32_0 : i32, i32
  }
  func.func @transform_5(%arg0: i32) -> (i32, i32) {
    %c0_i32 = arith.constant 0 : i32
    %c0_i32_0 = arith.constant 0 : i32
    %c0_i32_1 = arith.constant 0 : i32
    return %c0_i32, %c0_i32_0 : i32, i32
  }
  func.func @transform_6(%arg0: i32) -> (i32, i32) {
    %c0_i32 = arith.constant 0 : i32
    %c0_i32_0 = arith.constant 0 : i32
    %c0_i32_1 = arith.constant 0 : i32
    return %c0_i32, %c0_i32_0 : i32, i32
  }
  func.func @transform_7(%arg0: i32) -> (i32, i32) {
    %c0_i32 = arith.constant 0 : i32
    %c0_i32_0 = arith.constant 0 : i32
    return %arg0, %c0_i32 : i32, i32
  }
}

module attributes {stable_mosaic.version = 11 : i64} {
  func.func @_conv_module_kernel(%arg0: i32, %arg1: memref<1x8x32xf32, #tpu.memory_space<vmem>>, %arg2: memref<1x32xf32, #tpu.memory_space<vmem>>, %arg3: memref<1x32xf32, #tpu.memory_space<vmem>>, %arg4: memref<32x32xbf16, #tpu.memory_space<vmem>>, %arg5: memref<1x32xf32, #tpu.memory_space<vmem>>, %arg6: memref<32x32xbf16, #tpu.memory_space<vmem>>, %arg7: memref<1x32xf32, #tpu.memory_space<vmem>>, %arg8: memref<7x32xf32, #tpu.memory_space<vmem>>, %arg9: memref<1x32xf32, #tpu.memory_space<vmem>>, %arg10: memref<1x32xf32, #tpu.memory_space<vmem>>, %arg11: memref<1x32xf32, #tpu.memory_space<vmem>>, %arg12: memref<1x32xf32, #tpu.memory_space<vmem>>, %arg13: memref<1x32xf32, #tpu.memory_space<vmem>>, %arg14: memref<32x32xbf16, #tpu.memory_space<vmem>>, %arg15: memref<1x32xf32, #tpu.memory_space<vmem>>, %arg16: memref<1x8x32xf32, #tpu.memory_space<vmem>>) attributes {dimension_semantics = [#tpu.dimension_semantics<parallel>], iteration_bounds = array<i64: 2>, scalar_prefetch = 0 : i64, scratch_operands = 0 : i64, tpu.core_type = #tpu.core_type<tc>, window_params = [{transform_indices = @transform_0, window_bounds = array<i64: 1, 8, 32>}, {pipeline_mode = #tpu.pipeline_mode<synchronous>, transform_indices = @transform_1, window_bounds = array<i64: 1, 32>}, {pipeline_mode = #tpu.pipeline_mode<synchronous>, transform_indices = @transform_2, window_bounds = array<i64: 1, 32>}, {pipeline_mode = #tpu.pipeline_mode<synchronous>, transform_indices = @transform_3, window_bounds = array<i64: 32, 32>}, {pipeline_mode = #tpu.pipeline_mode<synchronous>, transform_indices = @transform_4, window_bounds = array<i64: 1, 32>}, {pipeline_mode = #tpu.pipeline_mode<synchronous>, transform_indices = @transform_5, window_bounds = array<i64: 32, 32>}, {pipeline_mode = #tpu.pipeline_mode<synchronous>, transform_indices = @transform_6, window_bounds = array<i64: 1, 32>}, {pipeline_mode = #tpu.pipeline_mode<synchronous>, transform_indices = @transform_7, window_bounds = array<i64: 7, 32>}, {pipeline_mode = #tpu.pipeline_mode<synchronous>, transform_indices = @transform_8, window_bounds = array<i64: 1, 32>}, {pipeline_mode = #tpu.pipeline_mode<synchronous>, transform_indices = @transform_9, window_bounds = array<i64: 1, 32>}, {pipeline_mode = #tpu.pipeline_mode<synchronous>, transform_indices = @transform_10, window_bounds = array<i64: 1, 32>}, {pipeline_mode = #tpu.pipeline_mode<synchronous>, transform_indices = @transform_11, window_bounds = array<i64: 1, 32>}, {pipeline_mode = #tpu.pipeline_mode<synchronous>, transform_indices = @transform_12, window_bounds = array<i64: 1, 32>}, {pipeline_mode = #tpu.pipeline_mode<synchronous>, transform_indices = @transform_13, window_bounds = array<i64: 32, 32>}, {pipeline_mode = #tpu.pipeline_mode<synchronous>, transform_indices = @transform_14, window_bounds = array<i64: 1, 32>}, {transform_indices = @transform_15, window_bounds = array<i64: 1, 8, 32>}]} {
    %c0 = arith.constant 0 : index
    %c0_0 = arith.constant 0 : index
    %c0_1 = arith.constant 0 : index
    %0 = vector.load %arg1[%c0, %c0_0, %c0_1] : memref<1x8x32xf32, #tpu.memory_space<vmem>>, vector<1x8x32xf32>
    %1 = vector.shape_cast %0 : vector<1x8x32xf32> to vector<8x32xf32>
    %c0_2 = arith.constant 0 : index
    %c0_3 = arith.constant 0 : index
    %2 = vector.load %arg2[%c0_2, %c0_3] : memref<1x32xf32, #tpu.memory_space<vmem>>, vector<1x32xf32>
    %c0_4 = arith.constant 0 : index
    %c0_5 = arith.constant 0 : index
    %3 = vector.load %arg3[%c0_4, %c0_5] : memref<1x32xf32, #tpu.memory_space<vmem>>, vector<1x32xf32>
    %cst = arith.constant dense<0.000000e+00> : vector<8xf32>
    %4 = vector.multi_reduction <add>, %1, %cst [1] : vector<8x32xf32> to vector<8xf32>
    %5 = vector.shape_cast %4 : vector<8xf32> to vector<8x1xf32>
    %cst_6 = arith.constant 3.200000e+01 : f32
    %6 = vector.broadcast %cst_6 : f32 to vector<8x1xf32>
    %7 = arith.divf %5, %6 : vector<8x1xf32>
    %8 = vector.broadcast %7 : vector<8x1xf32> to vector<8x32xf32>
    %9 = arith.subf %1, %8 : vector<8x32xf32>
    %10 = arith.mulf %9, %9 : vector<8x32xf32>
    %cst_7 = arith.constant dense<0.000000e+00> : vector<8xf32>
    %11 = vector.multi_reduction <add>, %10, %cst_7 [1] : vector<8x32xf32> to vector<8xf32>
    %12 = vector.shape_cast %11 : vector<8xf32> to vector<8x1xf32>
    %cst_8 = arith.constant 3.200000e+01 : f32
    %13 = vector.broadcast %cst_8 : f32 to vector<8x1xf32>
    %14 = arith.divf %12, %13 : vector<8x1xf32>
    %15 = vector.broadcast %7 : vector<8x1xf32> to vector<8x32xf32>
    %16 = arith.subf %1, %15 : vector<8x32xf32>
    %cst_9 = arith.constant 9.99999974E-6 : f32
    %17 = vector.broadcast %cst_9 : f32 to vector<8x1xf32>
    %18 = arith.addf %14, %17 : vector<8x1xf32>
    %19 = math.rsqrt %18 : vector<8x1xf32>
    %20 = vector.broadcast %19 : vector<8x1xf32> to vector<8x32xf32>
    %21 = arith.mulf %16, %20 : vector<8x32xf32>
    %22 = vector.broadcast %2 : vector<1x32xf32> to vector<8x32xf32>
    %23 = arith.mulf %21, %22 : vector<8x32xf32>
    %24 = vector.broadcast %3 : vector<1x32xf32> to vector<8x32xf32>
    %25 = arith.addf %23, %24 : vector<8x32xf32>
    %c0_10 = arith.constant 0 : index
    %c0_11 = arith.constant 0 : index
    %26 = vector.load %arg4[%c0_10, %c0_11] : memref<32x32xbf16, #tpu.memory_space<vmem>>, vector<32x32xbf16>
    %27 = arith.truncf %25 : vector<8x32xf32> to vector<8x32xbf16>
    %cst_12 = arith.constant dense<0.000000e+00> : vector<8x32xf32>
    %28 = tpu.matmul %27, %26, %cst_12 {dimension_numbers = #tpu.dot_dimension_numbers<[1], [0], [0], [1], [0, 0, 1, 1], [], []>} : vector<8x32xbf16>, vector<32x32xbf16>, vector<8x32xf32> -> vector<8x32xf32>
    %c0_13 = arith.constant 0 : index
    %c0_14 = arith.constant 0 : index
    %29 = vector.load %arg5[%c0_13, %c0_14] : memref<1x32xf32, #tpu.memory_space<vmem>>, vector<1x32xf32>
    %30 = vector.broadcast %29 : vector<1x32xf32> to vector<8x32xf32>
    %31 = arith.addf %28, %30 : vector<8x32xf32>
    %c0_15 = arith.constant 0 : index
    %c0_16 = arith.constant 0 : index
    %32 = vector.load %arg6[%c0_15, %c0_16] : memref<32x32xbf16, #tpu.memory_space<vmem>>, vector<32x32xbf16>
    %33 = arith.truncf %25 : vector<8x32xf32> to vector<8x32xbf16>
    %cst_17 = arith.constant dense<0.000000e+00> : vector<8x32xf32>
    %34 = tpu.matmul %33, %32, %cst_17 {dimension_numbers = #tpu.dot_dimension_numbers<[1], [0], [0], [1], [0, 0, 1, 1], [], []>} : vector<8x32xbf16>, vector<32x32xbf16>, vector<8x32xf32> -> vector<8x32xf32>
    %c0_18 = arith.constant 0 : index
    %c0_19 = arith.constant 0 : index
    %35 = vector.load %arg7[%c0_18, %c0_19] : memref<1x32xf32, #tpu.memory_space<vmem>>, vector<1x32xf32>
    %36 = vector.broadcast %35 : vector<1x32xf32> to vector<8x32xf32>
    %37 = arith.addf %34, %36 : vector<8x32xf32>
    %38 = arith.negf %37 : vector<8x32xf32>
    %39 = math.exp %38 : vector<8x32xf32>
    %cst_20 = arith.constant 1.000000e+00 : f32
    %40 = vector.broadcast %cst_20 : f32 to vector<8x32xf32>
    %41 = arith.addf %40, %39 : vector<8x32xf32>
    %42 = arith.divf %40, %41 : vector<8x32xf32>
    %43 = arith.mulf %31, %42 : vector<8x32xf32>
    %44 = tpu.iota {dimensions = array<i32: 0>} : vector<8x32xi32>
    %c0_21 = arith.constant 0 : index
    %c0_22 = arith.constant 0 : index
    %45 = vector.load %arg8[%c0_21, %c0_22] : memref<7x32xf32, #tpu.memory_space<vmem>>, vector<7x32xf32>
    %cst_23 = arith.constant 0.000000e+00 : f32
    %46 = vector.broadcast %cst_23 : f32 to vector<8x32xf32>
    %c0_24 = arith.constant 0 : index
    %c0_25 = arith.constant 0 : index
    %47 = vector.load %arg9[%c0_24, %c0_25] : memref<1x32xf32, #tpu.memory_space<vmem>>, vector<1x32xf32>
    %48 = vector.broadcast %47 : vector<1x32xf32> to vector<8x32xf32>
    %49 = arith.addf %46, %48 : vector<8x32xf32>
    %50 = vector.extract_strided_slice %43 {offsets = [5, 0], sizes = [3, 32], strides = [1, 1]} : vector<8x32xf32> to vector<3x32xf32>
    %51 = vector.extract_strided_slice %43 {offsets = [0, 0], sizes = [5, 32], strides = [1, 1]} : vector<8x32xf32> to vector<5x32xf32>
    %52 = tpu.concatenate %50, %51 in 0 : vector<3x32xf32>, vector<5x32xf32> -> vector<8x32xf32>
    %c-3_i32 = arith.constant -3 : i32
    %53 = vector.broadcast %c-3_i32 : i32 to vector<8x32xi32>
    %54 = arith.addi %44, %53 : vector<8x32xi32>
    %c0_i32 = arith.constant 0 : i32
    %55 = vector.broadcast %c0_i32 : i32 to vector<8x32xi32>
    %56 = arith.cmpi sge, %54, %55 : vector<8x32xi32>
    %c-3_i32_26 = arith.constant -3 : i32
    %57 = vector.broadcast %c-3_i32_26 : i32 to vector<8x32xi32>
    %58 = arith.addi %44, %57 : vector<8x32xi32>
    %c8_i32 = arith.constant 8 : i32
    %59 = vector.broadcast %c8_i32 : i32 to vector<8x32xi32>
    %60 = arith.cmpi slt, %58, %59 : vector<8x32xi32>
    %61 = arith.andi %56, %60 : vector<8x32xi1>
    %cst_27 = arith.constant 0.000000e+00 : f32
    %62 = vector.broadcast %cst_27 : f32 to vector<8x32xf32>
    %63 = arith.select %61, %52, %62 : vector<8x32xi1>, vector<8x32xf32>
    %64 = vector.extract_strided_slice %45 {offsets = [0, 0], sizes = [1, 32], strides = [1, 1]} : vector<7x32xf32> to vector<1x32xf32>
    %65 = vector.broadcast %64 : vector<1x32xf32> to vector<8x32xf32>
    %66 = arith.mulf %63, %65 : vector<8x32xf32>
    %67 = arith.addf %49, %66 : vector<8x32xf32>
    %68 = vector.extract_strided_slice %43 {offsets = [6, 0], sizes = [2, 32], strides = [1, 1]} : vector<8x32xf32> to vector<2x32xf32>
    %69 = vector.extract_strided_slice %43 {offsets = [0, 0], sizes = [6, 32], strides = [1, 1]} : vector<8x32xf32> to vector<6x32xf32>
    %70 = tpu.concatenate %68, %69 in 0 : vector<2x32xf32>, vector<6x32xf32> -> vector<8x32xf32>
    %c-2_i32 = arith.constant -2 : i32
    %71 = vector.broadcast %c-2_i32 : i32 to vector<8x32xi32>
    %72 = arith.addi %44, %71 : vector<8x32xi32>
    %c0_i32_28 = arith.constant 0 : i32
    %73 = vector.broadcast %c0_i32_28 : i32 to vector<8x32xi32>
    %74 = arith.cmpi sge, %72, %73 : vector<8x32xi32>
    %c-2_i32_29 = arith.constant -2 : i32
    %75 = vector.broadcast %c-2_i32_29 : i32 to vector<8x32xi32>
    %76 = arith.addi %44, %75 : vector<8x32xi32>
    %c8_i32_30 = arith.constant 8 : i32
    %77 = vector.broadcast %c8_i32_30 : i32 to vector<8x32xi32>
    %78 = arith.cmpi slt, %76, %77 : vector<8x32xi32>
    %79 = arith.andi %74, %78 : vector<8x32xi1>
    %cst_31 = arith.constant 0.000000e+00 : f32
    %80 = vector.broadcast %cst_31 : f32 to vector<8x32xf32>
    %81 = arith.select %79, %70, %80 : vector<8x32xi1>, vector<8x32xf32>
    %82 = vector.extract_strided_slice %45 {offsets = [1, 0], sizes = [1, 32], strides = [1, 1]} : vector<7x32xf32> to vector<1x32xf32>
    %83 = vector.broadcast %82 : vector<1x32xf32> to vector<8x32xf32>
    %84 = arith.mulf %81, %83 : vector<8x32xf32>
    %85 = arith.addf %67, %84 : vector<8x32xf32>
    %86 = vector.extract_strided_slice %43 {offsets = [7, 0], sizes = [1, 32], strides = [1, 1]} : vector<8x32xf32> to vector<1x32xf32>
    %87 = vector.extract_strided_slice %43 {offsets = [0, 0], sizes = [7, 32], strides = [1, 1]} : vector<8x32xf32> to vector<7x32xf32>
    %88 = tpu.concatenate %86, %87 in 0 : vector<1x32xf32>, vector<7x32xf32> -> vector<8x32xf32>
    %c-1_i32 = arith.constant -1 : i32
    %89 = vector.broadcast %c-1_i32 : i32 to vector<8x32xi32>
    %90 = arith.addi %44, %89 : vector<8x32xi32>
    %c0_i32_32 = arith.constant 0 : i32
    %91 = vector.broadcast %c0_i32_32 : i32 to vector<8x32xi32>
    %92 = arith.cmpi sge, %90, %91 : vector<8x32xi32>
    %c-1_i32_33 = arith.constant -1 : i32
    %93 = vector.broadcast %c-1_i32_33 : i32 to vector<8x32xi32>
    %94 = arith.addi %44, %93 : vector<8x32xi32>
    %c8_i32_34 = arith.constant 8 : i32
    %95 = vector.broadcast %c8_i32_34 : i32 to vector<8x32xi32>
    %96 = arith.cmpi slt, %94, %95 : vector<8x32xi32>
    %97 = arith.andi %92, %96 : vector<8x32xi1>
    %cst_35 = arith.constant 0.000000e+00 : f32
    %98 = vector.broadcast %cst_35 : f32 to vector<8x32xf32>
    %99 = arith.select %97, %88, %98 : vector<8x32xi1>, vector<8x32xf32>
    %100 = vector.extract_strided_slice %45 {offsets = [2, 0], sizes = [1, 32], strides = [1, 1]} : vector<7x32xf32> to vector<1x32xf32>
    %101 = vector.broadcast %100 : vector<1x32xf32> to vector<8x32xf32>
    %102 = arith.mulf %99, %101 : vector<8x32xf32>
    %103 = arith.addf %85, %102 : vector<8x32xf32>
    %c0_i32_36 = arith.constant 0 : i32
    %104 = vector.broadcast %c0_i32_36 : i32 to vector<8x32xi32>
    %105 = arith.addi %44, %104 : vector<8x32xi32>
    %c0_i32_37 = arith.constant 0 : i32
    %106 = vector.broadcast %c0_i32_37 : i32 to vector<8x32xi32>
    %107 = arith.cmpi sge, %105, %106 : vector<8x32xi32>
    %c0_i32_38 = arith.constant 0 : i32
    %108 = vector.broadcast %c0_i32_38 : i32 to vector<8x32xi32>
    %109 = arith.addi %44, %108 : vector<8x32xi32>
    %c8_i32_39 = arith.constant 8 : i32
    %110 = vector.broadcast %c8_i32_39 : i32 to vector<8x32xi32>
    %111 = arith.cmpi slt, %109, %110 : vector<8x32xi32>
    %112 = arith.andi %107, %111 : vector<8x32xi1>
    %cst_40 = arith.constant 0.000000e+00 : f32
    %113 = vector.broadcast %cst_40 : f32 to vector<8x32xf32>
    %114 = arith.select %112, %43, %113 : vector<8x32xi1>, vector<8x32xf32>
    %115 = vector.extract_strided_slice %45 {offsets = [3, 0], sizes = [1, 32], strides = [1, 1]} : vector<7x32xf32> to vector<1x32xf32>
    %116 = vector.broadcast %115 : vector<1x32xf32> to vector<8x32xf32>
    %117 = arith.mulf %114, %116 : vector<8x32xf32>
    %118 = arith.addf %103, %117 : vector<8x32xf32>
    %119 = vector.extract_strided_slice %43 {offsets = [1, 0], sizes = [7, 32], strides = [1, 1]} : vector<8x32xf32> to vector<7x32xf32>
    %120 = vector.extract_strided_slice %43 {offsets = [0, 0], sizes = [1, 32], strides = [1, 1]} : vector<8x32xf32> to vector<1x32xf32>
    %121 = tpu.concatenate %119, %120 in 0 : vector<7x32xf32>, vector<1x32xf32> -> vector<8x32xf32>
    %c1_i32 = arith.constant 1 : i32
    %122 = vector.broadcast %c1_i32 : i32 to vector<8x32xi32>
    %123 = arith.addi %44, %122 : vector<8x32xi32>
    %c0_i32_41 = arith.constant 0 : i32
    %124 = vector.broadcast %c0_i32_41 : i32 to vector<8x32xi32>
    %125 = arith.cmpi sge, %123, %124 : vector<8x32xi32>
    %c1_i32_42 = arith.constant 1 : i32
    %126 = vector.broadcast %c1_i32_42 : i32 to vector<8x32xi32>
    %127 = arith.addi %44, %126 : vector<8x32xi32>
    %c8_i32_43 = arith.constant 8 : i32
    %128 = vector.broadcast %c8_i32_43 : i32 to vector<8x32xi32>
    %129 = arith.cmpi slt, %127, %128 : vector<8x32xi32>
    %130 = arith.andi %125, %129 : vector<8x32xi1>
    %cst_44 = arith.constant 0.000000e+00 : f32
    %131 = vector.broadcast %cst_44 : f32 to vector<8x32xf32>
    %132 = arith.select %130, %121, %131 : vector<8x32xi1>, vector<8x32xf32>
    %133 = vector.extract_strided_slice %45 {offsets = [4, 0], sizes = [1, 32], strides = [1, 1]} : vector<7x32xf32> to vector<1x32xf32>
    %134 = vector.broadcast %133 : vector<1x32xf32> to vector<8x32xf32>
    %135 = arith.mulf %132, %134 : vector<8x32xf32>
    %136 = arith.addf %118, %135 : vector<8x32xf32>
    %137 = vector.extract_strided_slice %43 {offsets = [2, 0], sizes = [6, 32], strides = [1, 1]} : vector<8x32xf32> to vector<6x32xf32>
    %138 = vector.extract_strided_slice %43 {offsets = [0, 0], sizes = [2, 32], strides = [1, 1]} : vector<8x32xf32> to vector<2x32xf32>
    %139 = tpu.concatenate %137, %138 in 0 : vector<6x32xf32>, vector<2x32xf32> -> vector<8x32xf32>
    %c2_i32 = arith.constant 2 : i32
    %140 = vector.broadcast %c2_i32 : i32 to vector<8x32xi32>
    %141 = arith.addi %44, %140 : vector<8x32xi32>
    %c0_i32_45 = arith.constant 0 : i32
    %142 = vector.broadcast %c0_i32_45 : i32 to vector<8x32xi32>
    %143 = arith.cmpi sge, %141, %142 : vector<8x32xi32>
    %c2_i32_46 = arith.constant 2 : i32
    %144 = vector.broadcast %c2_i32_46 : i32 to vector<8x32xi32>
    %145 = arith.addi %44, %144 : vector<8x32xi32>
    %c8_i32_47 = arith.constant 8 : i32
    %146 = vector.broadcast %c8_i32_47 : i32 to vector<8x32xi32>
    %147 = arith.cmpi slt, %145, %146 : vector<8x32xi32>
    %148 = arith.andi %143, %147 : vector<8x32xi1>
    %cst_48 = arith.constant 0.000000e+00 : f32
    %149 = vector.broadcast %cst_48 : f32 to vector<8x32xf32>
    %150 = arith.select %148, %139, %149 : vector<8x32xi1>, vector<8x32xf32>
    %151 = vector.extract_strided_slice %45 {offsets = [5, 0], sizes = [1, 32], strides = [1, 1]} : vector<7x32xf32> to vector<1x32xf32>
    %152 = vector.broadcast %151 : vector<1x32xf32> to vector<8x32xf32>
    %153 = arith.mulf %150, %152 : vector<8x32xf32>
    %154 = arith.addf %136, %153 : vector<8x32xf32>
    %155 = vector.extract_strided_slice %43 {offsets = [3, 0], sizes = [5, 32], strides = [1, 1]} : vector<8x32xf32> to vector<5x32xf32>
    %156 = vector.extract_strided_slice %43 {offsets = [0, 0], sizes = [3, 32], strides = [1, 1]} : vector<8x32xf32> to vector<3x32xf32>
    %157 = tpu.concatenate %155, %156 in 0 : vector<5x32xf32>, vector<3x32xf32> -> vector<8x32xf32>
    %c3_i32 = arith.constant 3 : i32
    %158 = vector.broadcast %c3_i32 : i32 to vector<8x32xi32>
    %159 = arith.addi %44, %158 : vector<8x32xi32>
    %c0_i32_49 = arith.constant 0 : i32
    %160 = vector.broadcast %c0_i32_49 : i32 to vector<8x32xi32>
    %161 = arith.cmpi sge, %159, %160 : vector<8x32xi32>
    %c3_i32_50 = arith.constant 3 : i32
    %162 = vector.broadcast %c3_i32_50 : i32 to vector<8x32xi32>
    %163 = arith.addi %44, %162 : vector<8x32xi32>
    %c8_i32_51 = arith.constant 8 : i32
    %164 = vector.broadcast %c8_i32_51 : i32 to vector<8x32xi32>
    %165 = arith.cmpi slt, %163, %164 : vector<8x32xi32>
    %166 = arith.andi %161, %165 : vector<8x32xi1>
    %cst_52 = arith.constant 0.000000e+00 : f32
    %167 = vector.broadcast %cst_52 : f32 to vector<8x32xf32>
    %168 = arith.select %166, %157, %167 : vector<8x32xi1>, vector<8x32xf32>
    %169 = vector.extract_strided_slice %45 {offsets = [6, 0], sizes = [1, 32], strides = [1, 1]} : vector<7x32xf32> to vector<1x32xf32>
    %170 = vector.broadcast %169 : vector<1x32xf32> to vector<8x32xf32>
    %171 = arith.mulf %168, %170 : vector<8x32xf32>
    %172 = arith.addf %154, %171 : vector<8x32xf32>
    %c0_53 = arith.constant 0 : index
    %c0_54 = arith.constant 0 : index
    %173 = vector.load %arg12[%c0_53, %c0_54] : memref<1x32xf32, #tpu.memory_space<vmem>>, vector<1x32xf32>
    %174 = vector.broadcast %173 : vector<1x32xf32> to vector<8x32xf32>
    %175 = arith.subf %172, %174 : vector<8x32xf32>
    %c0_55 = arith.constant 0 : index
    %c0_56 = arith.constant 0 : index
    %176 = vector.load %arg13[%c0_55, %c0_56] : memref<1x32xf32, #tpu.memory_space<vmem>>, vector<1x32xf32>
    %cst_57 = arith.constant 9.99999974E-6 : f32
    %177 = vector.broadcast %cst_57 : f32 to vector<1x32xf32>
    %178 = arith.addf %176, %177 : vector<1x32xf32>
    %179 = math.rsqrt %178 : vector<1x32xf32>
    %180 = vector.broadcast %179 : vector<1x32xf32> to vector<8x32xf32>
    %181 = arith.mulf %175, %180 : vector<8x32xf32>
    %c0_58 = arith.constant 0 : index
    %c0_59 = arith.constant 0 : index
    %182 = vector.load %arg10[%c0_58, %c0_59] : memref<1x32xf32, #tpu.memory_space<vmem>>, vector<1x32xf32>
    %183 = vector.broadcast %182 : vector<1x32xf32> to vector<8x32xf32>
    %184 = arith.mulf %181, %183 : vector<8x32xf32>
    %c0_60 = arith.constant 0 : index
    %c0_61 = arith.constant 0 : index
    %185 = vector.load %arg11[%c0_60, %c0_61] : memref<1x32xf32, #tpu.memory_space<vmem>>, vector<1x32xf32>
    %186 = vector.broadcast %185 : vector<1x32xf32> to vector<8x32xf32>
    %187 = arith.addf %184, %186 : vector<8x32xf32>
    %cst_62 = arith.constant 0.000000e+00 : f32
    %188 = vector.broadcast %cst_62 : f32 to vector<8x32xf32>
    %189 = arith.maximumf %187, %188 : vector<8x32xf32>
    %c0_63 = arith.constant 0 : index
    %c0_64 = arith.constant 0 : index
    %190 = vector.load %arg14[%c0_63, %c0_64] : memref<32x32xbf16, #tpu.memory_space<vmem>>, vector<32x32xbf16>
    %191 = arith.truncf %189 : vector<8x32xf32> to vector<8x32xbf16>
    %cst_65 = arith.constant dense<0.000000e+00> : vector<8x32xf32>
    %192 = tpu.matmul %191, %190, %cst_65 {dimension_numbers = #tpu.dot_dimension_numbers<[1], [0], [0], [1], [0, 0, 1, 1], [], []>} : vector<8x32xbf16>, vector<32x32xbf16>, vector<8x32xf32> -> vector<8x32xf32>
    %193 = arith.addf %1, %192 : vector<8x32xf32>
    %c0_66 = arith.constant 0 : index
    %c0_67 = arith.constant 0 : index
    %194 = vector.load %arg15[%c0_66, %c0_67] : memref<1x32xf32, #tpu.memory_space<vmem>>, vector<1x32xf32>
    %195 = vector.broadcast %194 : vector<1x32xf32> to vector<8x32xf32>
    %196 = arith.addf %193, %195 : vector<8x32xf32>
    %c0_68 = arith.constant 0 : index
    %c0_69 = arith.constant 0 : index
    %c0_70 = arith.constant 0 : index
    %197 = vector.load %arg16[%c0_68, %c0_69, %c0_70] : memref<1x8x32xf32, #tpu.memory_space<vmem>>, vector<1x8x32xf32>
    %198 = vector.shape_cast %197 : vector<1x8x32xf32> to vector<8x32xf32>
    %199 = vector.shape_cast %196 : vector<8x32xf32> to vector<1x8x32xf32>
    tpu.vector_store %arg16[%c0_68, %c0_69, %c0_70], %199 {strides = array<i32>} : memref<1x8x32xf32, #tpu.memory_space<vmem>>, vector<1x8x32xf32>,
    return
  }
  func.func @transform_0(%arg0: i32) -> (i32, i32, i32) {
    %c0_i32 = arith.constant 0 : i32
    %c0_i32_0 = arith.constant 0 : i32
    %c0_i32_1 = arith.constant 0 : i32
    return %arg0, %c0_i32, %c0_i32_0 : i32, i32, i32
  }
  func.func @transform_1(%arg0: i32) -> (i32, i32) {
    %c0_i32 = arith.constant 0 : i32
    %c0_i32_0 = arith.constant 0 : i32
    %c0_i32_1 = arith.constant 0 : i32
    return %c0_i32, %c0_i32_0 : i32, i32
  }
  func.func @transform_2(%arg0: i32) -> (i32, i32) {
    %c0_i32 = arith.constant 0 : i32
    %c0_i32_0 = arith.constant 0 : i32
    %c0_i32_1 = arith.constant 0 : i32
    return %c0_i32, %c0_i32_0 : i32, i32
  }
  func.func @transform_3(%arg0: i32) -> (i32, i32) {
    %c0_i32 = arith.constant 0 : i32
    %c0_i32_0 = arith.constant 0 : i32
    %c0_i32_1 = arith.constant 0 : i32
    return %c0_i32, %c0_i32_0 : i32, i32
  }
  func.func @transform_4(%arg0: i32) -> (i32, i32) {
    %c0_i32 = arith.constant 0 : i32
    %c0_i32_0 = arith.constant 0 : i32
    %c0_i32_1 = arith.constant 0 : i32
    return %c0_i32, %c0_i32_0 : i32, i32
  }
  func.func @transform_5(%arg0: i32) -> (i32, i32) {
    %c0_i32 = arith.constant 0 : i32
    %c0_i32_0 = arith.constant 0 : i32
    %c0_i32_1 = arith.constant 0 : i32
    return %c0_i32, %c0_i32_0 : i32, i32
  }
  func.func @transform_6(%arg0: i32) -> (i32, i32) {
    %c0_i32 = arith.constant 0 : i32
    %c0_i32_0 = arith.constant 0 : i32
    %c0_i32_1 = arith.constant 0 : i32
    return %c0_i32, %c0_i32_0 : i32, i32
  }
  func.func @transform_7(%arg0: i32) -> (i32, i32) {
    %c0_i32 = arith.constant 0 : i32
    %c0_i32_0 = arith.constant 0 : i32
    %c0_i32_1 = arith.constant 0 : i32
    return %c0_i32, %c0_i32_0 : i32, i32
  }
  func.func @transform_8(%arg0: i32) -> (i32, i32) {
    %c0_i32 = arith.constant 0 : i32
    %c0_i32_0 = arith.constant 0 : i32
    %c0_i32_1 = arith.constant 0 : i32
    return %c0_i32, %c0_i32_0 : i32, i32
  }
  func.func @transform_9(%arg0: i32) -> (i32, i32) {
    %c0_i32 = arith.constant 0 : i32
    %c0_i32_0 = arith.constant 0 : i32
    %c0_i32_1 = arith.constant 0 : i32
    return %c0_i32, %c0_i32_0 : i32, i32
  }
  func.func @transform_10(%arg0: i32) -> (i32, i32) {
    %c0_i32 = arith.constant 0 : i32
    %c0_i32_0 = arith.constant 0 : i32
    %c0_i32_1 = arith.constant 0 : i32
    return %c0_i32, %c0_i32_0 : i32, i32
  }
  func.func @transform_11(%arg0: i32) -> (i32, i32) {
    %c0_i32 = arith.constant 0 : i32
    %c0_i32_0 = arith.constant 0 : i32
    %c0_i32_1 = arith.constant 0 : i32
    return %c0_i32, %c0_i32_0 : i32, i32
  }
  func.func @transform_12(%arg0: i32) -> (i32, i32) {
    %c0_i32 = arith.constant 0 : i32
    %c0_i32_0 = arith.constant 0 : i32
    %c0_i32_1 = arith.constant 0 : i32
    return %c0_i32, %c0_i32_0 : i32, i32
  }
  func.func @transform_13(%arg0: i32) -> (i32, i32) {
    %c0_i32 = arith.constant 0 : i32
    %c0_i32_0 = arith.constant 0 : i32
    %c0_i32_1 = arith.constant 0 : i32
    return %c0_i32, %c0_i32_0 : i32, i32
  }
  func.func @transform_14(%arg0: i32) -> (i32, i32) {
    %c0_i32 = arith.constant 0 : i32
    %c0_i32_0 = arith.constant 0 : i32
    %c0_i32_1 = arith.constant 0 : i32
    return %c0_i32, %c0_i32_0 : i32, i32
  }
  func.func @transform_15(%arg0: i32) -> (i32, i32, i32) {
    %c0_i32 = arith.constant 0 : i32
    %c0_i32_0 = arith.constant 0 : i32
    %c0_i32_1 = arith.constant 0 : i32
    return %arg0, %c0_i32, %c0_i32_0 : i32, i32, i32
  }
}

module attributes {stable_mosaic.version = 11 : i64} {
  func.func @_ln_ffn_res_kernel(%arg0: i32, %arg1: memref<16x32xf32, #tpu.memory_space<vmem>>, %arg2: memref<1x32xf32, #tpu.memory_space<vmem>>, %arg3: memref<1x32xf32, #tpu.memory_space<vmem>>, %arg4: memref<32x64xbf16, #tpu.memory_space<vmem>>, %arg5: memref<1x64xf32, #tpu.memory_space<vmem>>, %arg6: memref<64x32xbf16, #tpu.memory_space<vmem>>, %arg7: memref<1x32xf32, #tpu.memory_space<vmem>>, %arg8: memref<16x32xf32, #tpu.memory_space<vmem>>) attributes {dimension_semantics = [#tpu.dimension_semantics<parallel>], iteration_bounds = array<i64: 1>, scalar_prefetch = 0 : i64, scratch_operands = 0 : i64, tpu.core_type = #tpu.core_type<tc>, window_params = [{transform_indices = @transform_0, window_bounds = array<i64: 16, 32>}, {pipeline_mode = #tpu.pipeline_mode<synchronous>, transform_indices = @transform_1, window_bounds = array<i64: 1, 32>}, {pipeline_mode = #tpu.pipeline_mode<synchronous>, transform_indices = @transform_2, window_bounds = array<i64: 1, 32>}, {pipeline_mode = #tpu.pipeline_mode<synchronous>, transform_indices = @transform_3, window_bounds = array<i64: 32, 64>}, {pipeline_mode = #tpu.pipeline_mode<synchronous>, transform_indices = @transform_4, window_bounds = array<i64: 1, 64>}, {pipeline_mode = #tpu.pipeline_mode<synchronous>, transform_indices = @transform_5, window_bounds = array<i64: 64, 32>}, {pipeline_mode = #tpu.pipeline_mode<synchronous>, transform_indices = @transform_6, window_bounds = array<i64: 1, 32>}, {transform_indices = @transform_7, window_bounds = array<i64: 16, 32>}]} {
    %c0 = arith.constant 0 : index
    %c0_0 = arith.constant 0 : index
    %0 = vector.load %arg1[%c0, %c0_0] : memref<16x32xf32, #tpu.memory_space<vmem>>, vector<16x32xf32>
    %c0_1 = arith.constant 0 : index
    %c0_2 = arith.constant 0 : index
    %1 = vector.load %arg2[%c0_1, %c0_2] : memref<1x32xf32, #tpu.memory_space<vmem>>, vector<1x32xf32>
    %c0_3 = arith.constant 0 : index
    %c0_4 = arith.constant 0 : index
    %2 = vector.load %arg3[%c0_3, %c0_4] : memref<1x32xf32, #tpu.memory_space<vmem>>, vector<1x32xf32>
    %cst = arith.constant dense<0.000000e+00> : vector<16xf32>
    %3 = vector.multi_reduction <add>, %0, %cst [1] : vector<16x32xf32> to vector<16xf32>
    %4 = vector.shape_cast %3 : vector<16xf32> to vector<16x1xf32>
    %cst_5 = arith.constant 3.200000e+01 : f32
    %5 = vector.broadcast %cst_5 : f32 to vector<16x1xf32>
    %6 = arith.divf %4, %5 : vector<16x1xf32>
    %7 = vector.broadcast %6 : vector<16x1xf32> to vector<16x32xf32>
    %8 = arith.subf %0, %7 : vector<16x32xf32>
    %9 = arith.mulf %8, %8 : vector<16x32xf32>
    %cst_6 = arith.constant dense<0.000000e+00> : vector<16xf32>
    %10 = vector.multi_reduction <add>, %9, %cst_6 [1] : vector<16x32xf32> to vector<16xf32>
    %11 = vector.shape_cast %10 : vector<16xf32> to vector<16x1xf32>
    %cst_7 = arith.constant 3.200000e+01 : f32
    %12 = vector.broadcast %cst_7 : f32 to vector<16x1xf32>
    %13 = arith.divf %11, %12 : vector<16x1xf32>
    %14 = vector.broadcast %6 : vector<16x1xf32> to vector<16x32xf32>
    %15 = arith.subf %0, %14 : vector<16x32xf32>
    %cst_8 = arith.constant 9.99999974E-6 : f32
    %16 = vector.broadcast %cst_8 : f32 to vector<16x1xf32>
    %17 = arith.addf %13, %16 : vector<16x1xf32>
    %18 = math.rsqrt %17 : vector<16x1xf32>
    %19 = vector.broadcast %18 : vector<16x1xf32> to vector<16x32xf32>
    %20 = arith.mulf %15, %19 : vector<16x32xf32>
    %21 = vector.broadcast %1 : vector<1x32xf32> to vector<16x32xf32>
    %22 = arith.mulf %20, %21 : vector<16x32xf32>
    %23 = vector.broadcast %2 : vector<1x32xf32> to vector<16x32xf32>
    %24 = arith.addf %22, %23 : vector<16x32xf32>
    %c0_9 = arith.constant 0 : index
    %c0_10 = arith.constant 0 : index
    %25 = vector.load %arg4[%c0_9, %c0_10] : memref<32x64xbf16, #tpu.memory_space<vmem>>, vector<32x64xbf16>
    %26 = arith.truncf %24 : vector<16x32xf32> to vector<16x32xbf16>
    %cst_11 = arith.constant dense<0.000000e+00> : vector<16x64xf32>
    %27 = tpu.matmul %26, %25, %cst_11 {dimension_numbers = #tpu.dot_dimension_numbers<[1], [0], [0], [1], [0, 0, 1, 1], [], []>} : vector<16x32xbf16>, vector<32x64xbf16>, vector<16x64xf32> -> vector<16x64xf32>
    %c0_12 = arith.constant 0 : index
    %c0_13 = arith.constant 0 : index
    %28 = vector.load %arg5[%c0_12, %c0_13] : memref<1x64xf32, #tpu.memory_space<vmem>>, vector<1x64xf32>
    %29 = vector.broadcast %28 : vector<1x64xf32> to vector<16x64xf32>
    %30 = arith.addf %27, %29 : vector<16x64xf32>
    %cst_14 = arith.constant 0.000000e+00 : f32
    %31 = vector.broadcast %cst_14 : f32 to vector<16x64xf32>
    %32 = arith.maximumf %30, %31 : vector<16x64xf32>
    %c0_15 = arith.constant 0 : index
    %c0_16 = arith.constant 0 : index
    %33 = vector.load %arg6[%c0_15, %c0_16] : memref<64x32xbf16, #tpu.memory_space<vmem>>, vector<64x32xbf16>
    %34 = arith.truncf %32 : vector<16x64xf32> to vector<16x64xbf16>
    %cst_17 = arith.constant dense<0.000000e+00> : vector<16x32xf32>
    %35 = tpu.matmul %34, %33, %cst_17 {dimension_numbers = #tpu.dot_dimension_numbers<[1], [0], [0], [1], [0, 0, 1, 1], [], []>} : vector<16x64xbf16>, vector<64x32xbf16>, vector<16x32xf32> -> vector<16x32xf32>
    %c0_18 = arith.constant 0 : index
    %c0_19 = arith.constant 0 : index
    %36 = vector.load %arg7[%c0_18, %c0_19] : memref<1x32xf32, #tpu.memory_space<vmem>>, vector<1x32xf32>
    %37 = vector.broadcast %36 : vector<1x32xf32> to vector<16x32xf32>
    %38 = arith.addf %35, %37 : vector<16x32xf32>
    %cst_20 = arith.constant 1.000000e+00 : f32
    %39 = vector.broadcast %cst_20 : f32 to vector<16x32xf32>
    %40 = arith.mulf %39, %38 : vector<16x32xf32>
    %41 = arith.addf %0, %40 : vector<16x32xf32>
    %c0_21 = arith.constant 0 : index
    %c0_22 = arith.constant 0 : index
    %42 = vector.load %arg8[%c0_21, %c0_22] : memref<16x32xf32, #tpu.memory_space<vmem>>, vector<16x32xf32>
    tpu.vector_store %arg8[%c0_21, %c0_22], %41 {strides = array<i32>} : memref<16x32xf32, #tpu.memory_space<vmem>>, vector<16x32xf32>,
    return
  }
  func.func @transform_0(%arg0: i32) -> (i32, i32) {
    %c0_i32 = arith.constant 0 : i32
    %c0_i32_0 = arith.constant 0 : i32
    return %arg0, %c0_i32 : i32, i32
  }
  func.func @transform_1(%arg0: i32) -> (i32, i32) {
    %c0_i32 = arith.constant 0 : i32
    %c0_i32_0 = arith.constant 0 : i32
    %c0_i32_1 = arith.constant 0 : i32
    return %c0_i32, %c0_i32_0 : i32, i32
  }
  func.func @transform_2(%arg0: i32) -> (i32, i32) {
    %c0_i32 = arith.constant 0 : i32
    %c0_i32_0 = arith.constant 0 : i32
    %c0_i32_1 = arith.constant 0 : i32
    return %c0_i32, %c0_i32_0 : i32, i32
  }
  func.func @transform_3(%arg0: i32) -> (i32, i32) {
    %c0_i32 = arith.constant 0 : i32
    %c0_i32_0 = arith.constant 0 : i32
    %c0_i32_1 = arith.constant 0 : i32
    return %c0_i32, %c0_i32_0 : i32, i32
  }
  func.func @transform_4(%arg0: i32) -> (i32, i32) {
    %c0_i32 = arith.constant 0 : i32
    %c0_i32_0 = arith.constant 0 : i32
    %c0_i32_1 = arith.constant 0 : i32
    return %c0_i32, %c0_i32_0 : i32, i32
  }
  func.func @transform_5(%arg0: i32) -> (i32, i32) {
    %c0_i32 = arith.constant 0 : i32
    %c0_i32_0 = arith.constant 0 : i32
    %c0_i32_1 = arith.constant 0 : i32
    return %c0_i32, %c0_i32_0 : i32, i32
  }
  func.func @transform_6(%arg0: i32) -> (i32, i32) {
    %c0_i32 = arith.constant 0 : i32
    %c0_i32_0 = arith.constant 0 : i32
    %c0_i32_1 = arith.constant 0 : i32
    return %c0_i32, %c0_i32_0 : i32, i32
  }
  func.func @transform_7(%arg0: i32) -> (i32, i32) {
    %c0_i32 = arith.constant 0 : i32
    %c0_i32_0 = arith.constant 0 : i32
    return %arg0, %c0_i32 : i32, i32
  }
}

</mosaic_0001>

<llo_original>
// kernel: tpu_custom_call.1
$region0: #{tpu_custom_call.1}
  #allocation0 [shape = 'u32[]', space=smem, size = 0x4, offset = 0x4, fixed_abs, tag = 'smem constant byte address 0x4 - core index']
  #allocation1 [shape = 'u32[72,128]{1,0:T(1,128)}', space=vmem, size = 0x9000, scoped, tag = 'internal scratch']
  %s0 = inlined_call_operand.hbm [shape: f32[16,128], index: 0, kind: input, shape index: {}]
  %s1 = inlined_call_operand.hbm [shape: f32[8,128], index: 1, kind: input, shape index: {}]
  %s2 = inlined_call_operand.hbm [shape: f32[16,128], index: 2, kind: output, shape index: {}]
  %s3 = sld [smem:[#allocation0]]
  $region49: #{tpu_custom_call.1} parent=0
    _
  %s5 = ssub.s32 1, %s3
  %s6 = scalar_select 0, %s5, %s3
  $region1: #{tpu_custom_call.1} parent=0
    #allocation2 [shape = 'u8[8192]{0}', space=vmem, size = 0x2000, scoped, tag = 'input window, operand 0']
    #allocation3 [shape = 's32[2]{0}', space=sflag, size = 0x8, scoped, tag = 'scoped memory for tpu_custom_call.1']
    #allocation4 [shape = 's32[2]{0}', space=sflag, size = 0x8, scoped, tag = 'scoped memory for tpu_custom_call.1']
    #allocation5 [shape = 'u8[4096]{0}', space=vmem, size = 0x1000, scoped, tag = 'input window, operand 1, single buffered']
    #allocation6 [shape = 's32[1]{0}', space=sflag, size = 0x4, scoped, tag = 'scoped memory for tpu_custom_call.1']
    #allocation7 [shape = 'u8[8192]{0}', space=vmem, size = 0x2000, scoped, tag = 'output window, operand 0']
    %7 = vsyncpa [#allocation3], 0
    %s8 = scalar_lea.sflag [#allocation3], 1
    %9 = vsyncpa %s8, 0
    %10 = vsyncpa [#allocation6], 0
    %11 = vsyncpa [#allocation4], 0
    %s12 = scalar_lea.sflag [#allocation4], 1
    %13 = vsyncpa %s12, 0
    loop: start=0, step=1, limit=4
    $region2: #{tpu_custom_call.1} parent=1 // loop_pre_header
      _
    $region3: #{tpu_custom_call.1} parent=1 // loop_header
      %s15 = sphi 0, %s19
      %p16 = scmp.ge.s32.totalorder %s15, 4
      %s25 = sphi 0, %s27
      %s28 = sphi 0, %s25
      %s29 = sphi 0, %s28
      %s45 = sphi 0, %s29
      %s49 = sphi 0, %s49
      %s51 = sphi 0, %s49
      %s52 = sphi 0, %s51
      %s66 = sphi 0, %s52
      %s72 = sphi 0, %s74
      %s75 = sphi 0, %s72
      %s76 = sphi 0, %s75
      %s92 = sphi 0, %s76
    $region4: #{tpu_custom_call.1} parent=1 // loop_header_branch
      %18 = sbr.rel (%p16) target = $region8
    $region5: #{tpu_custom_call.1} parent=1 // loop_body
      %s20 = ssub.s32 %s15, 1
      %s21 = ssub.s32 %s15, 2
      %s22 = sadd.s32 %s15, 1
      %s23 = ssub.s32 %s15, %s22
      %p24 = scmp.eq.s32.totalorder %s23, 0
      %s26 = sadd.s32 %s25, 1
      %s27 = scalar_select %p24, %s25, %s26
      %p30 = pneg %p24
      %p31 = scmp.eq.s32.totalorder %s15, 1
      %p32 = por %p30, %p31
      %p33 = scmp.ne.s32.totalorder %s25, %s28
      %p34 = scmp.eq.s32.totalorder %s15, 0
      %p35 = por %p33, %p34
      %p36 = scmp.ne.s32.totalorder %s25, %s28
      %p37 = scmp.eq.s32.totalorder %s20, 1
      %p38 = por %p36, %p37
      %p39 = scmp.ne.s32.totalorder %s28, %s29
      %p40 = scmp.eq.s32.totalorder %s20, 0
      %p41 = por %p39, %p40
      %p42 = scmp.ne.s32.totalorder %s28, %s29
      %p43 = scmp.eq.s32.totalorder %s21, 1
      %p44 = por %p42, %p43
      %p46 = scmp.ne.s32.totalorder %s29, %s45
      %p47 = scmp.eq.s32.totalorder %s21, 0
      %p48 = por %p46, %p47
      %s50 = sadd.s32 %s49, 1
      %p53 = scmp.eq.s32.totalorder %s15, 1
      %p54 = scmp.ne.s32.totalorder %s49, %s51
      %p55 = scmp.eq.s32.totalorder %s15, 0
      %p56 = por %p54, %p55
      %p57 = scmp.ne.s32.totalorder %s49, %s51
      %p58 = scmp.eq.s32.totalorder %s20, 1
      %p59 = por %p57, %p58
      %p60 = scmp.ne.s32.totalorder %s51, %s52
      %p61 = scmp.eq.s32.totalorder %s20, 0
      %p62 = por %p60, %p61
      %p63 = scmp.ne.s32.totalorder %s51, %s52
      %p64 = scmp.eq.s32.totalorder %s21, 1
      %p65 = por %p63, %p64
      %p67 = scmp.ne.s32.totalorder %s52, %s66
      %p68 = scmp.eq.s32.totalorder %s21, 0
      %p69 = por %p67, %p68
      %s70 = ssub.s32 %s15, %s22
      %p71 = scmp.eq.s32.totalorder %s70, 0
      %s73 = sadd.s32 %s72, 1
      %s74 = scalar_select %p71, %s72, %s73
      %p77 = pneg %p71
      %p78 = scmp.eq.s32.totalorder %s15, 1
      %p79 = por %p77, %p78
      %p80 = scmp.ne.s32.totalorder %s72, %s75
      %p81 = scmp.eq.s32.totalorder %s15, 0
      %p82 = por %p80, %p81
      %p83 = scmp.ne.s32.totalorder %s72, %s75
      %p84 = scmp.eq.s32.totalorder %s20, 1
      %p85 = por %p83, %p84
      %p86 = scmp.ne.s32.totalorder %s75, %s76
      %p87 = scmp.eq.s32.totalorder %s20, 0
      %p88 = por %p86, %p87
      %p89 = scmp.ne.s32.totalorder %s75, %s76
      %p90 = scmp.eq.s32.totalorder %s21, 1
      %p91 = por %p89, %p90
      %p93 = scmp.ne.s32.totalorder %s76, %s92
      %p94 = scmp.eq.s32.totalorder %s21, 0
      %p95 = por %p93, %p94
      %p96 = scmp.le.s32.totalorder 1, %s15
      %p97 = scmp.lt.s32.totalorder %s15, 3
      %p98 = pnand %p96, %p97
      %p99 = pneg %p98
      // Predicated region
      $region9: #{tpu_custom_call.1} parent=5 // pred_check
        _
      $region10: #{tpu_custom_call.1} parent=5 // pred_check_branch
        %101 = sbr.rel (%p98) target = $region12
      $region11: #{tpu_custom_call.1} parent=5 // pred_region
        %s102 = ssub.s32 %s15, 1
        // Predicated region
        $region13: #{tpu_custom_call.1} parent=11 // pred_check
          %p103 = pneg %p62
        $region14: #{tpu_custom_call.1} parent=11 // pred_check_branch
          %105 = sbr.rel (%p103) target = $region16
        $region15: #{tpu_custom_call.1} parent=11 // pred_region
          %107 = vsyncadd [#allocation6], 0
          %s109 = sshll.u32 %s1, 4
          %s110 = int_to_ptr.hbm [resolvable:$true] %s109
          %s111 = sshll.u32 [#allocation5], 4
          %s112 = int_to_ptr.vmem [resolvable:$true] %s111
          %114 = dma.hbm_to_vmem [thread:$0]  %s110, 128, %s112, [#allocation6]
        $region16: #{tpu_custom_call.1} parent=11 // pred_fallthru
          _
      $region12: #{tpu_custom_call.1} parent=5 // pred_fallthru
        _
      %p115 = scmp.lt.s32.totalorder %s15, 2
      // Predicated region
      $region17: #{tpu_custom_call.1} parent=5 // pred_check
        %p116 = pneg %p115
      $region18: #{tpu_custom_call.1} parent=5 // pred_check_branch
        %118 = sbr.rel (%p116) target = $region20
      $region19: #{tpu_custom_call.1} parent=5 // pred_region
        // Predicated region
        $region21: #{tpu_custom_call.1} parent=19 // pred_check
          %p119 = pneg %p35
        $region22: #{tpu_custom_call.1} parent=19 // pred_check_branch
          %121 = sbr.rel (%p119) target = $region24
        $region23: #{tpu_custom_call.1} parent=19 // pred_region
          %s122 = sand.u32 %s25, 1
          %s123 = scalar_lea.sflag [#allocation3], %s122
          %s124 = sand.u32 %s25, 1
          %s125 = smul.addr %s124, 8
          %s126 = scalar_lea.vmem [#allocation2], %s125
          %128 = vsyncadd %s123, 0
          %s129 = smul.addr %s15, 8
          %s130 = scalar_lea.hbm %s0, %s129
          %s132 = sshll.u32 %s130, 4
          %s133 = int_to_ptr.hbm [resolvable:$true] %s132
          %s134 = sshll.u32 %s126, 4
          %s135 = int_to_ptr.vmem [resolvable:$true] %s134
          %137 = dma.hbm_to_vmem [thread:$0]  %s133, 128, %s135, %s123
        $region24: #{tpu_custom_call.1} parent=19 // pred_fallthru
          _
      $region20: #{tpu_custom_call.1} parent=5 // pred_fallthru
        _
      %p138 = scmp.le.s32.totalorder 1, %s15
      %p139 = scmp.lt.s32.totalorder %s15, 3
      %p140 = pnand %p138, %p139
      %p141 = pneg %p140
      // Predicated region
      $region25: #{tpu_custom_call.1} parent=5 // pred_check
        _
      $region26: #{tpu_custom_call.1} parent=5 // pred_check_branch
        %143 = sbr.rel (%p140) target = $region28
      $region27: #{tpu_custom_call.1} parent=5 // pred_region
        %s144 = ssub.s32 %s15, 1
        %s145 = sand.u32 %s28, 1
        %s146 = scalar_lea.sflag [#allocation3], %s145
        %s147 = sand.u32 %s28, 1
        %s148 = smul.addr %s147, 8
        %s149 = scalar_lea.vmem [#allocation2], %s148
        // Predicated region
        $region29: #{tpu_custom_call.1} parent=27 // pred_check
          %p150 = pneg %p41
        $region30: #{tpu_custom_call.1} parent=27 // pred_check_branch
          %152 = sbr.rel (%p150) target = $region32
        $region31: #{tpu_custom_call.1} parent=27 // pred_region
          %154 = dma.done %s146, 128
        $region32: #{tpu_custom_call.1} parent=27 // pred_fallthru
          _
        // Predicated region
        $region33: #{tpu_custom_call.1} parent=27 // pred_check
          %p155 = pneg %p62
        $region34: #{tpu_custom_call.1} parent=27 // pred_check_branch
          %157 = sbr.rel (%p155) target = $region36
        $region35: #{tpu_custom_call.1} parent=27 // pred_region
          %159 = dma.done [#allocation6], 128
        $region36: #{tpu_custom_call.1} parent=27 // pred_fallthru
          _
        %s160 = sand.u32 %s28, 1
        %s161 = scalar_lea.sflag [#allocation3], %s160
        %s162 = sand.u32 %s28, 1
        %s163 = smul.addr %s162, 8
        %s164 = scalar_lea.vmem [#allocation2], %s163
        %p165 = pneg %p41
        %p166 = pneg %p38
        %p167 = pneg %p62
        %p168 = pneg %p59
        %p169 = pneg %p88
        %p170 = pneg %p85
        %s171 = sand.u32 %s75, 1
        %s172 = scalar_lea.sflag [#allocation4], %s171
        %s173 = sand.u32 %s75, 1
        %s174 = smul.addr %s173, 8
        %s175 = scalar_lea.vmem [#allocation7], %s174
        %v176 = vld [vmem:[%s149] sm:$0xff]
        %v177 = vld [vmem:[#allocation5] sm:$0xff]
        %v178 = vadd.f32 %v176, %v177
        %179 = vst [vmem:[%s175] sm:$0xff] %v178
        %s180 = sand.u32 %s75, 1
        %s181 = scalar_lea.sflag [#allocation4], %s180
        %s182 = sand.u32 %s75, 1
        %s183 = smul.addr %s182, 8
        %s184 = scalar_lea.vmem [#allocation7], %s183
        // Predicated region
        $region37: #{tpu_custom_call.1} parent=27 // pred_check
          %p185 = pneg %p85
        $region38: #{tpu_custom_call.1} parent=27 // pred_check_branch
          %187 = sbr.rel (%p185) target = $region40
        $region39: #{tpu_custom_call.1} parent=27 // pred_region
          %189 = vsyncadd %s181, 0
          %s190 = smul.addr %s20, 8
          %s191 = scalar_lea.hbm %s2, %s190
          %s193 = sshll.u32 %s184, 4
          %s194 = int_to_ptr.vmem [resolvable:$true] %s193
          %s195 = sshll.u32 %s191, 4
          %s196 = int_to_ptr.hbm [resolvable:$true] %s195
          %198 = dma.vmem_to_hbm [thread:$0]  %s194, 128, %s196, %s181
        $region40: #{tpu_custom_call.1} parent=27 // pred_fallthru
          _
      $region28: #{tpu_custom_call.1} parent=5 // pred_fallthru
        _
      %p199 = scmp.le.s32.totalorder 2, %s15
      // Predicated region
      $region41: #{tpu_custom_call.1} parent=5 // pred_check
        %p200 = pneg %p199
      $region42: #{tpu_custom_call.1} parent=5 // pred_check_branch
        %202 = sbr.rel (%p200) target = $region44
      $region43: #{tpu_custom_call.1} parent=5 // pred_region
        %s203 = ssub.s32 %s15, 2
        // Predicated region
        $region45: #{tpu_custom_call.1} parent=43 // pred_check
          %p204 = pneg %p91
        $region46: #{tpu_custom_call.1} parent=43 // pred_check_branch
          %206 = sbr.rel (%p204) target = $region48
        $region47: #{tpu_custom_call.1} parent=43 // pred_region
          %s207 = sand.u32 %s76, 1
          %s208 = scalar_lea.sflag [#allocation4], %s207
          %s209 = sand.u32 %s76, 1
          %s210 = smul.addr %s209, 8
          %s211 = scalar_lea.vmem [#allocation7], %s210
          %213 = dma.done %s208, 128
        $region48: #{tpu_custom_call.1} parent=43 // pred_fallthru
          _
      $region44: #{tpu_custom_call.1} parent=5 // pred_fallthru
        _
    $region6: #{tpu_custom_call.1} parent=1 // loop_footer
      %s19 = sadd.s32 1, %s15
    $region7: #{tpu_custom_call.1} parent=1 // loop_footer_branch
      %14 = sbr.rel target = $region3
    $region8: #{tpu_custom_call.1} parent=1 // loop_exit
      _
    %214 = vsyncpa [#allocation3], 1
    %s215 = scalar_lea.sflag [#allocation3], 1
    %216 = vsyncpa %s215, 1
    %217 = vsyncpa [#allocation6], 1
    %218 = vsyncpa [#allocation4], 1
    %s219 = scalar_lea.sflag [#allocation4], 1
    %220 = vsyncpa %s219, 1

// kernel: encoder_forward.17
$region0: #{encoder_forward.17}
  #allocation0 [shape = 'u32[]', space=smem, size = 0x4, offset = 0x4, fixed_abs, tag = 'smem constant byte address 0x4 - core index']
  #allocation1 [shape = 'u32[72,128]{1,0:T(1,128)}', space=vmem, size = 0x9000, scoped, tag = 'internal scratch']
  %s0 = inlined_call_operand.vmem [shape: f32[16,32], index: 0, kind: input, shape index: {}]
  %s1 = inlined_call_operand.vmem [shape: f32[1,32], index: 1, kind: input, shape index: {}]
  %s2 = inlined_call_operand.vmem [shape: f32[1,32], index: 2, kind: input, shape index: {}]
  %s3 = inlined_call_operand.vmem [shape: bf16[32,96], index: 3, kind: input, shape index: {}]
  %s4 = inlined_call_operand.vmem [shape: f32[1,96], index: 4, kind: input, shape index: {}]
  %s5 = inlined_call_operand.vmem [shape: bf16[16,96], index: 5, kind: output, shape index: {}]
  %s6 = sld [smem:[#allocation0]]
  $region30: #{encoder_forward.17} parent=0
    _
  %s8 = ssub.s32 1, %s6
  %s9 = scalar_select 0, %s8, %s6
  // Predicated region
  $region2: #{encoder_forward.17} parent=0 // pred_check
    _
  $region3: #{encoder_forward.17} parent=0 // pred_check_branch
    %11 = sbr.rel (0) target = $region5
  $region4: #{encoder_forward.17} parent=0 // pred_region
    _
  $region5: #{encoder_forward.17} parent=0 // pred_fallthru
    _
  // Predicated region
  $region6: #{encoder_forward.17} parent=0 // pred_check
    _
  $region7: #{encoder_forward.17} parent=0 // pred_check_branch
    %13 = sbr.rel (0) target = $region9
  $region8: #{encoder_forward.17} parent=0 // pred_region
    _
  $region9: #{encoder_forward.17} parent=0 // pred_fallthru
    _
  // Predicated region
  $region10: #{encoder_forward.17} parent=0 // pred_check
    _
  $region11: #{encoder_forward.17} parent=0 // pred_check_branch
    %15 = sbr.rel (0) target = $region13
  $region12: #{encoder_forward.17} parent=0 // pred_region
    _
  $region13: #{encoder_forward.17} parent=0 // pred_fallthru
    _
  // Predicated region
  $region14: #{encoder_forward.17} parent=0 // pred_check
    _
  $region15: #{encoder_forward.17} parent=0 // pred_check_branch
    %17 = sbr.rel (0) target = $region17
  $region16: #{encoder_forward.17} parent=0 // pred_region
    _
  $region17: #{encoder_forward.17} parent=0 // pred_fallthru
    _
  // Predicated region
  $region18: #{encoder_forward.17} parent=0 // pred_check
    _
  $region19: #{encoder_forward.17} parent=0 // pred_check_branch
    %19 = sbr.rel (0) target = $region21
  $region20: #{encoder_forward.17} parent=0 // pred_region
    _
  $region21: #{encoder_forward.17} parent=0 // pred_fallthru
    _
  %v21 = vld [vmem:[%s0] sm:$0xff]
  %v22 = vld [vmem:[%s0 + $0x8] sm:$0xff]
  %v23 = vld [vmem:[%s1] sm:$0x1]
  %v24 = vld [vmem:[%s2] sm:$0x1]
  %vm25 = vcmask 261120
  %v26 = vsel %vm25, %v21, 0.0
  %27 = vadd.xlane.f32.xlu0 %v26
  %v28 = vpop.xlane.xlu0 %27
  %v29 = vsel %vm25, %v22, 0.0
  %30 = vadd.xlane.f32.xlu0 %v29
  %v31 = vpop.xlane.xlu0 %30
  %v32 = vrcp.pop 32.0
  %v33 = vmul.f32 32.0, %v32
  %v34 = vsub.f32 1.0, %v33
  %v35 = vmul.f32 %v32, %v34
  %v36 = vadd.f32 %v32, %v35
  %vm37 = vweird.f32 %v32
  %v38 = vsel %vm37, %v32, %v36
  %v39 = vmul.f32 %v28, %v38
  %v40 = vmul.f32 %v31, %v38
  %v41 = vsub.f32 %v21, %v39
  %v42 = vsub.f32 %v22, %v40
  %v43 = vmul.f32 %v41, %v41
  %v44 = vmul.f32 %v42, %v42
  %v45 = vsel %vm25, %v43, 0.0
  %46 = vadd.xlane.f32.xlu0 %v45
  %v47 = vpop.xlane.xlu0 %46
  %v48 = vsel %vm25, %v44, 0.0
  %49 = vadd.xlane.f32.xlu0 %v48
  %v50 = vpop.xlane.xlu0 %49
  %v51 = vmul.f32 %v47, %v38
  %v52 = vmul.f32 %v50, %v38
  %v53 = vadd.f32 %v51, 1e-05
  %v54 = vadd.f32 %v52, 1e-05
  %v55 = vrsqrt.pop %v53
  %v56 = vmul.f32 %v55, %v53
  %v57 = vmul.f32 %v56, %v55
  %v58 = vmul.f32 0.5, %v57
  %v59 = vsub.f32 1.5, %v58
  %v60 = vmul.f32 %v55, %v59
  %vm61 = vweird.f32 %v53
  %vm62 = vweird.f32 %v55
  %vm63 = vmor %vm61, %vm62
  %v64 = vsel %vm63, %v55, %v60
  %v65 = vrsqrt.pop %v54
  %v66 = vmul.f32 %v65, %v54
  %v67 = vmul.f32 %v66, %v65
  %v68 = vmul.f32 0.5, %v67
  %v69 = vsub.f32 1.5, %v68
  %v70 = vmul.f32 %v65, %v69
  %vm71 = vweird.f32 %v54
  %vm72 = vweird.f32 %v65
  %vm73 = vmor %vm71, %vm72
  %v74 = vsel %vm73, %v65, %v70
  %v75 = vmul.f32 %v41, %v64
  %v76 = vmul.f32 %v42, %v74
  %v78 = vperm.slane %v23, 0
  %v80 = vmul.f32 %v75, %v78
  %v81 = vmul.f32 %v76, %v78
  %v83 = vperm.slane %v24, 0
  %v85 = vadd.f32 %v80, %v83
  %v86 = vadd.f32 %v81, %v83
  %v87 = vld [vmem:[%s3] sm:$0xf]
  %v88 = vld [vmem:[%s3 + $0x4] sm:$0xf]
  %v89 = vld [vmem:[%s3 + $0x8] sm:$0xf]
  %v90 = vld [vmem:[%s3 + $0xc] sm:$0xf]
  %v91 = vpack.c.bf16 %v86, %v85
  %v92 = vld [vmem:[%s4] sm:$0x1]
  %v94 = vperm.slane %v92, 0
  %v100 = vunpack.c.l.b16 %v87
  %v101 = vunpack.c.l.b16 %v88
  %v102 = vunpack.c.l.b16 %v89
  %v103 = vunpack.c.l.b16 %v90
  %v104 = vpack.c.b16 %v101, %v100
  %v105 = vpack.c.b16 %v103, %v102
  %v109 = vsel %vm25, %v91, 0
  %111 = vmatpush.bf16.msra.mxu0 0
  %112 = vmatpush.bf16.msra.mxu0 0
  %113 = vmatpush.bf16.msra.mxu0 0
  %114 = vmatpush.bf16.msra.mxu0 0
  %115 = vmatpush.bf16.msra.mxu0 0
  %116 = vmatpush.bf16.msra.mxu0 0
  %117 = vmatpush.bf16.msra.mxu0 %v105
  %118 = vmatpush.bf16.msra.mxu0 %v104
  %119 = vmatmul.bf16.gmra.mxu0 %v109
  %v120 = vpop.f32.mrf.mxu0
  %v121 = vadd.f32 %v94, %v120
  %v122 = vpop.f32.mrf.mxu0
  %v123 = vadd.f32 %v94, %v122
  %124 = vdwg.mxu0
  %v125 = vpack.c.bf16 %v121, %v121
  %v126 = vpack.c.bf16 %v123, %v123
  %vm127 = vcmask 781312
  %128 = vst.msk [vmem:[%s5] sm:$0xf] %vm127, %v125
  %129 = vst.msk [vmem:[%s5 + $0x4] sm:$0xf] %vm127, %v126
  // Predicated region
  $region22: #{encoder_forward.17} parent=0 // pred_check
    _
  $region23: #{encoder_forward.17} parent=0 // pred_check_branch
    %131 = sbr.rel (0) target = $region25
  $region24: #{encoder_forward.17} parent=0 // pred_region
    _
  $region25: #{encoder_forward.17} parent=0 // pred_fallthru
    _
  // Predicated region
  $region26: #{encoder_forward.17} parent=0 // pred_check
    _
  $region27: #{encoder_forward.17} parent=0 // pred_check_branch
    %133 = sbr.rel (0) target = $region29
  $region28: #{encoder_forward.17} parent=0 // pred_region
    _
  $region29: #{encoder_forward.17} parent=0 // pred_fallthru
    _

// kernel: encoder_forward.15
$region0: #{encoder_forward.15}
  #allocation0 [shape = 'u32[]', space=smem, size = 0x4, offset = 0x4, fixed_abs, tag = 'smem constant byte address 0x4 - core index']
  #allocation1 [shape = 'u32[72,128]{1,0:T(1,128)}', space=vmem, size = 0x9000, scoped, tag = 'internal scratch']
  %s0 = inlined_call_operand.vmem [shape: f32[16,32], index: 0, kind: input, shape index: {}]
  %s1 = inlined_call_operand.vmem [shape: bf16[32,32], index: 1, kind: input, shape index: {}]
  %s2 = inlined_call_operand.vmem [shape: f32[1,32], index: 2, kind: input, shape index: {}]
  %s3 = inlined_call_operand.vmem [shape: f32[1,32], index: 3, kind: input, shape index: {}]
  %s4 = inlined_call_operand.vmem [shape: f32[1,32], index: 4, kind: input, shape index: {}]
  %s5 = inlined_call_operand.vmem [shape: f32[16,32], index: 5, kind: output, shape index: {}]
  %s6 = sld [smem:[#allocation0]]
  $region30: #{encoder_forward.15} parent=0
    _
  %s8 = ssub.s32 1, %s6
  %s9 = scalar_select 0, %s8, %s6
  // Predicated region
  $region2: #{encoder_forward.15} parent=0 // pred_check
    _
  $region3: #{encoder_forward.15} parent=0 // pred_check_branch
    %11 = sbr.rel (0) target = $region5
  $region4: #{encoder_forward.15} parent=0 // pred_region
    _
  $region5: #{encoder_forward.15} parent=0 // pred_fallthru
    _
  // Predicated region
  $region6: #{encoder_forward.15} parent=0 // pred_check
    _
  $region7: #{encoder_forward.15} parent=0 // pred_check_branch
    %13 = sbr.rel (0) target = $region9
  $region8: #{encoder_forward.15} parent=0 // pred_region
    _
  $region9: #{encoder_forward.15} parent=0 // pred_fallthru
    _
  // Predicated region
  $region10: #{encoder_forward.15} parent=0 // pred_check
    _
  $region11: #{encoder_forward.15} parent=0 // pred_check_branch
    %15 = sbr.rel (0) target = $region13
  $region12: #{encoder_forward.15} parent=0 // pred_region
    _
  $region13: #{encoder_forward.15} parent=0 // pred_fallthru
    _
  // Predicated region
  $region14: #{encoder_forward.15} parent=0 // pred_check
    _
  $region15: #{encoder_forward.15} parent=0 // pred_check_branch
    %17 = sbr.rel (0) target = $region17
  $region16: #{encoder_forward.15} parent=0 // pred_region
    _
  $region17: #{encoder_forward.15} parent=0 // pred_fallthru
    _
  // Predicated region
  $region18: #{encoder_forward.15} parent=0 // pred_check
    _
  $region19: #{encoder_forward.15} parent=0 // pred_check_branch
    %19 = sbr.rel (0) target = $region21
  $region20: #{encoder_forward.15} parent=0 // pred_region
    _
  $region21: #{encoder_forward.15} parent=0 // pred_fallthru
    _
  %v21 = vld [vmem:[%s0] sm:$0xff]
  %v22 = vld [vmem:[%s0 + $0x8] sm:$0xff]
  %v23 = vld [vmem:[%s1] sm:$0xf]
  %v24 = vld [vmem:[%s1 + $0x4] sm:$0xf]
  %v25 = vld [vmem:[%s1 + $0x8] sm:$0xf]
  %v26 = vld [vmem:[%s1 + $0xc] sm:$0xf]
  %v27 = vpack.c.bf16 %v22, %v21
  %v28 = vld [vmem:[%s2] sm:$0x1]
  %v30 = vperm.slane %v28, 0
  %v36 = vunpack.c.l.b16 %v23
  %v37 = vunpack.c.l.b16 %v24
  %v38 = vunpack.c.l.b16 %v25
  %v39 = vunpack.c.l.b16 %v26
  %v40 = vpack.c.b16 %v37, %v36
  %v41 = vpack.c.b16 %v39, %v38
  %vm44 = vcmask 261120
  %v46 = vsel %vm44, %v27, 0
  %48 = vmatpush.bf16.msra.mxu0 0
  %49 = vmatpush.bf16.msra.mxu0 0
  %50 = vmatpush.bf16.msra.mxu0 0
  %51 = vmatpush.bf16.msra.mxu0 0
  %52 = vmatpush.bf16.msra.mxu0 0
  %53 = vmatpush.bf16.msra.mxu0 0
  %54 = vmatpush.bf16.msra.mxu0 %v41
  %55 = vmatpush.bf16.msra.mxu0 %v40
  %56 = vmatmul.bf16.gmra.mxu0 %v46
  %v57 = vpop.f32.mrf.mxu0
  %v58 = vadd.f32 %v30, %v57
  %v59 = vpop.f32.mrf.mxu0
  %v60 = vadd.f32 %v30, %v59
  %61 = vdwg.mxu0
  %v62 = vld [vmem:[%s3] sm:$0x1]
  %v63 = vld [vmem:[%s4] sm:$0x1]
  %v64 = vsel %vm44, %v58, 0.0
  %65 = vadd.xlane.f32.xlu0 %v64
  %v66 = vpop.xlane.xlu0 %65
  %v67 = vsel %vm44, %v60, 0.0
  %68 = vadd.xlane.f32.xlu0 %v67
  %v69 = vpop.xlane.xlu0 %68
  %v70 = vrcp.pop 32.0
  %v71 = vmul.f32 32.0, %v70
  %v72 = vsub.f32 1.0, %v71
  %v73 = vmul.f32 %v70, %v72
  %v74 = vadd.f32 %v70, %v73
  %vm75 = vweird.f32 %v70
  %v76 = vsel %vm75, %v70, %v74
  %v77 = vmul.f32 %v66, %v76
  %v78 = vmul.f32 %v69, %v76
  %v79 = vsub.f32 %v58, %v77
  %v80 = vsub.f32 %v60, %v78
  %v81 = vmul.f32 %v79, %v79
  %v82 = vmul.f32 %v80, %v80
  %v83 = vsel %vm44, %v81, 0.0
  %84 = vadd.xlane.f32.xlu0 %v83
  %v85 = vpop.xlane.xlu0 %84
  %v86 = vsel %vm44, %v82, 0.0
  %87 = vadd.xlane.f32.xlu0 %v86
  %v88 = vpop.xlane.xlu0 %87
  %v89 = vmul.f32 %v85, %v76
  %v90 = vmul.f32 %v88, %v76
  %v91 = vadd.f32 %v89, 1e-05
  %v92 = vadd.f32 %v90, 1e-05
  %v93 = vrsqrt.pop %v91
  %v94 = vmul.f32 %v93, %v91
  %v95 = vmul.f32 %v94, %v93
  %v96 = vmul.f32 0.5, %v95
  %v97 = vsub.f32 1.5, %v96
  %v98 = vmul.f32 %v93, %v97
  %vm99 = vweird.f32 %v91
  %vm100 = vweird.f32 %v93
  %vm101 = vmor %vm99, %vm100
  %v102 = vsel %vm101, %v93, %v98
  %v103 = vrsqrt.pop %v92
  %v104 = vmul.f32 %v103, %v92
  %v105 = vmul.f32 %v104, %v103
  %v106 = vmul.f32 0.5, %v105
  %v107 = vsub.f32 1.5, %v106
  %v108 = vmul.f32 %v103, %v107
  %vm109 = vweird.f32 %v92
  %vm110 = vweird.f32 %v103
  %vm111 = vmor %vm109, %vm110
  %v112 = vsel %vm111, %v103, %v108
  %v113 = vmul.f32 %v79, %v102
  %v114 = vmul.f32 %v80, %v112
  %v116 = vperm.slane %v62, 0
  %v118 = vmul.f32 %v113, %v116
  %v119 = vmul.f32 %v114, %v116
  %v121 = vperm.slane %v63, 0
  %v123 = vadd.f32 %v118, %v121
  %v124 = vadd.f32 %v119, %v121
  %125 = vst.msk [vmem:[%s5] sm:$0xff] %vm44, %v123
  %126 = vst.msk [vmem:[%s5 + $0x8] sm:$0xff] %vm44, %v124
  // Predicated region
  $region22: #{encoder_forward.15} parent=0 // pred_check
    _
  $region23: #{encoder_forward.15} parent=0 // pred_check_branch
    %128 = sbr.rel (0) target = $region25
  $region24: #{encoder_forward.15} parent=0 // pred_region
    _
  $region25: #{encoder_forward.15} parent=0 // pred_fallthru
    _
  // Predicated region
  $region26: #{encoder_forward.15} parent=0 // pred_check
    _
  $region27: #{encoder_forward.15} parent=0 // pred_check_branch
    %130 = sbr.rel (0) target = $region29
  $region28: #{encoder_forward.15} parent=0 // pred_region
    _
  $region29: #{encoder_forward.15} parent=0 // pred_fallthru
    _

// kernel: encoder_forward.16
$region0: #{encoder_forward.16}
  #allocation0 [shape = 'u32[]', space=smem, size = 0x4, offset = 0x4, fixed_abs, tag = 'smem constant byte address 0x4 - core index']
  #allocation1 [shape = 'u32[72,128]{1,0:T(1,128)}', space=vmem, size = 0x9000, scoped, tag = 'internal scratch']
  %s0 = inlined_call_operand.vmem [shape: f32[16,32], index: 0, kind: input, shape index: {}]
  %s1 = inlined_call_operand.vmem [shape: f32[1,32], index: 1, kind: input, shape index: {}]
  %s2 = inlined_call_operand.vmem [shape: f32[1,32], index: 2, kind: input, shape index: {}]
  %s3 = inlined_call_operand.vmem [shape: bf16[32,64], index: 3, kind: input, shape index: {}]
  %s4 = inlined_call_operand.vmem [shape: f32[1,64], index: 4, kind: input, shape index: {}]
  %s5 = inlined_call_operand.vmem [shape: bf16[64,32], index: 5, kind: input, shape index: {}]
  %s6 = inlined_call_operand.vmem [shape: f32[1,32], index: 6, kind: input, shape index: {}]
  %s7 = inlined_call_operand.vmem [shape: f32[16,32], index: 7, kind: output, shape index: {}]
  %s8 = sld [smem:[#allocation0]]
  $region38: #{encoder_forward.16} parent=0
    _
  %s10 = ssub.s32 1, %s8
  %s11 = scalar_select 0, %s10, %s8
  // Predicated region
  $region2: #{encoder_forward.16} parent=0 // pred_check
    _
  $region3: #{encoder_forward.16} parent=0 // pred_check_branch
    %13 = sbr.rel (0) target = $region5
  $region4: #{encoder_forward.16} parent=0 // pred_region
    _
  $region5: #{encoder_forward.16} parent=0 // pred_fallthru
    _
  // Predicated region
  $region6: #{encoder_forward.16} parent=0 // pred_check
    _
  $region7: #{encoder_forward.16} parent=0 // pred_check_branch
    %15 = sbr.rel (0) target = $region9
  $region8: #{encoder_forward.16} parent=0 // pred_region
    _
  $region9: #{encoder_forward.16} parent=0 // pred_fallthru
    _
  // Predicated region
  $region10: #{encoder_forward.16} parent=0 // pred_check
    _
  $region11: #{encoder_forward.16} parent=0 // pred_check_branch
    %17 = sbr.rel (0) target = $region13
  $region12: #{encoder_forward.16} parent=0 // pred_region
    _
  $region13: #{encoder_forward.16} parent=0 // pred_fallthru
    _
  // Predicated region
  $region14: #{encoder_forward.16} parent=0 // pred_check
    _
  $region15: #{encoder_forward.16} parent=0 // pred_check_branch
    %19 = sbr.rel (0) target = $region17
  $region16: #{encoder_forward.16} parent=0 // pred_region
    _
  $region17: #{encoder_forward.16} parent=0 // pred_fallthru
    _
  // Predicated region
  $region18: #{encoder_forward.16} parent=0 // pred_check
    _
  $region19: #{encoder_forward.16} parent=0 // pred_check_branch
    %21 = sbr.rel (0) target = $region21
  $region20: #{encoder_forward.16} parent=0 // pred_region
    _
  $region21: #{encoder_forward.16} parent=0 // pred_fallthru
    _
  // Predicated region
  $region22: #{encoder_forward.16} parent=0 // pred_check
    _
  $region23: #{encoder_forward.16} parent=0 // pred_check_branch
    %23 = sbr.rel (0) target = $region25
  $region24: #{encoder_forward.16} parent=0 // pred_region
    _
  $region25: #{encoder_forward.16} parent=0 // pred_fallthru
    _
  // Predicated region
  $region26: #{encoder_forward.16} parent=0 // pred_check
    _
  $region27: #{encoder_forward.16} parent=0 // pred_check_branch
    %25 = sbr.rel (0) target = $region29
  $region28: #{encoder_forward.16} parent=0 // pred_region
    _
  $region29: #{encoder_forward.16} parent=0 // pred_fallthru
    _
  %v27 = vld [vmem:[%s0] sm:$0xff]
  %v28 = vld [vmem:[%s0 + $0x8] sm:$0xff]
  %v29 = vld [vmem:[%s1] sm:$0x1]
  %v30 = vld [vmem:[%s2] sm:$0x1]
  %vm31 = vcmask 261120
  %v32 = vsel %vm31, %v27, 0.0
  %33 = vadd.xlane.f32.xlu0 %v32
  %v34 = vpop.xlane.xlu0 %33
  %v35 = vsel %vm31, %v28, 0.0
  %36 = vadd.xlane.f32.xlu0 %v35
  %v37 = vpop.xlane.xlu0 %36
  %v38 = vrcp.pop 32.0
  %v39 = vmul.f32 32.0, %v38
  %v40 = vsub.f32 1.0, %v39
  %v41 = vmul.f32 %v38, %v40
  %v42 = vadd.f32 %v38, %v41
  %vm43 = vweird.f32 %v38
  %v44 = vsel %vm43, %v38, %v42
  %v45 = vmul.f32 %v34, %v44
  %v46 = vmul.f32 %v37, %v44
  %v47 = vsub.f32 %v27, %v45
  %v48 = vsub.f32 %v28, %v46
  %v49 = vmul.f32 %v47, %v47
  %v50 = vmul.f32 %v48, %v48
  %v51 = vsel %vm31, %v49, 0.0
  %52 = vadd.xlane.f32.xlu0 %v51
  %v53 = vpop.xlane.xlu0 %52
  %v54 = vsel %vm31, %v50, 0.0
  %55 = vadd.xlane.f32.xlu0 %v54
  %v56 = vpop.xlane.xlu0 %55
  %v57 = vmul.f32 %v53, %v44
  %v58 = vmul.f32 %v56, %v44
  %v59 = vadd.f32 %v57, 1e-05
  %v60 = vadd.f32 %v58, 1e-05
  %v61 = vrsqrt.pop %v59
  %v62 = vmul.f32 %v61, %v59
  %v63 = vmul.f32 %v62, %v61
  %v64 = vmul.f32 0.5, %v63
  %v65 = vsub.f32 1.5, %v64
  %v66 = vmul.f32 %v61, %v65
  %vm67 = vweird.f32 %v59
  %vm68 = vweird.f32 %v61
  %vm69 = vmor %vm67, %vm68
  %v70 = vsel %vm69, %v61, %v66
  %v71 = vrsqrt.pop %v60
  %v72 = vmul.f32 %v71, %v60
  %v73 = vmul.f32 %v72, %v71
  %v74 = vmul.f32 0.5, %v73
  %v75 = vsub.f32 1.5, %v74
  %v76 = vmul.f32 %v71, %v75
  %vm77 = vweird.f32 %v60
  %vm78 = vweird.f32 %v71
  %vm79 = vmor %vm77, %vm78
  %v80 = vsel %vm79, %v71, %v76
  %v81 = vmul.f32 %v47, %v70
  %v82 = vmul.f32 %v48, %v80
  %v84 = vperm.slane %v29, 0
  %v86 = vmul.f32 %v81, %v84
  %v87 = vmul.f32 %v82, %v84
  %v89 = vperm.slane %v30, 0
  %v91 = vadd.f32 %v86, %v89
  %v92 = vadd.f32 %v87, %v89
  %v93 = vld [vmem:[%s3] sm:$0xf]
  %v94 = vld [vmem:[%s3 + $0x4] sm:$0xf]
  %v95 = vld [vmem:[%s3 + $0x8] sm:$0xf]
  %v96 = vld [vmem:[%s3 + $0xc] sm:$0xf]
  %v97 = vpack.c.bf16 %v92, %v91
  %v98 = vld [vmem:[%s4] sm:$0x1]
  %v100 = vperm.slane %v98, 0
  %v106 = vunpack.c.l.b16 %v93
  %v107 = vunpack.c.l.b16 %v94
  %v108 = vunpack.c.l.b16 %v95
  %v109 = vunpack.c.l.b16 %v96
  %v110 = vpack.c.b16 %v107, %v106
  %v111 = vpack.c.b16 %v109, %v108
  %v115 = vsel %vm31, %v97, 0
  %117 = vmatpush.bf16.msra.mxu0 0
  %118 = vmatpush.bf16.msra.mxu0 0
  %119 = vmatpush.bf16.msra.mxu0 0
  %120 = vmatpush.bf16.msra.mxu0 0
  %121 = vmatpush.bf16.msra.mxu0 0
  %122 = vmatpush.bf16.msra.mxu0 0
  %123 = vmatpush.bf16.msra.mxu0 %v111
  %124 = vmatpush.bf16.msra.mxu0 %v110
  %125 = vmatmul.bf16.gmra.mxu0 %v115
  %v126 = vpop.f32.mrf.mxu0
  %v127 = vadd.f32 %v100, %v126
  %v128 = vpop.f32.mrf.mxu0
  %v129 = vadd.f32 %v100, %v128
  %130 = vdwg.mxu0
  %v131 = vmax.f32 %v127, 0.0
  %v132 = vmax.f32 %v129, 0.0
  %v133 = vld [vmem:[%s5] sm:$0xf]
  %v134 = vld [vmem:[%s5 + $0x4] sm:$0xf]
  %v135 = vld [vmem:[%s5 + $0x8] sm:$0xf]
  %v136 = vld [vmem:[%s5 + $0xc] sm:$0xf]
  %v137 = vld [vmem:[%s5 + $0x10] sm:$0xf]
  %v138 = vld [vmem:[%s5 + $0x14] sm:$0xf]
  %v139 = vld [vmem:[%s5 + $0x18] sm:$0xf]
  %v140 = vld [vmem:[%s5 + $0x1c] sm:$0xf]
  %v141 = vpack.c.bf16 %v132, %v131
  %v142 = vld [vmem:[%s6] sm:$0x1]
  %v144 = vperm.slane %v142, 0
  %v154 = vunpack.c.l.b16 %v133
  %v155 = vunpack.c.l.b16 %v134
  %v156 = vunpack.c.l.b16 %v135
  %v157 = vunpack.c.l.b16 %v136
  %v158 = vunpack.c.l.b16 %v137
  %v159 = vunpack.c.l.b16 %v138
  %v160 = vunpack.c.l.b16 %v139
  %v161 = vunpack.c.l.b16 %v140
  %v162 = vpack.c.b16 %v155, %v154
  %v163 = vpack.c.b16 %v157, %v156
  %v164 = vpack.c.b16 %v159, %v158
  %v165 = vpack.c.b16 %v161, %v160
  %vm170 = vcmask 523264
  %v172 = vsel %vm170, %v141, 0
  %174 = vmatpush.bf16.msra.mxu0 0
  %175 = vmatpush.bf16.msra.mxu0 0
  %176 = vmatpush.bf16.msra.mxu0 0
  %177 = vmatpush.bf16.msra.mxu0 0
  %178 = vmatpush.bf16.msra.mxu0 %v165
  %179 = vmatpush.bf16.msra.mxu0 %v164
  %180 = vmatpush.bf16.msra.mxu0 %v163
  %181 = vmatpush.bf16.msra.mxu0 %v162
  %182 = vmatmul.bf16.gmra.mxu0 %v172
  %v183 = vpop.f32.mrf.mxu0
  %v184 = vadd.f32 %v144, %v183
  %v185 = vpop.f32.mrf.mxu0
  %v186 = vadd.f32 %v144, %v185
  %187 = vdwg.mxu0
  %v188 = vmul.f32 %v184, 0.5
  %v189 = vmul.f32 %v186, 0.5
  %v190 = vadd.f32 %v27, %v188
  %v191 = vadd.f32 %v28, %v189
  %192 = vst.msk [vmem:[%s7] sm:$0xff] %vm31, %v190
  %193 = vst.msk [vmem:[%s7 + $0x8] sm:$0xff] %vm31, %v191
  // Predicated region
  $region30: #{encoder_forward.16} parent=0 // pred_check
    _
  $region31: #{encoder_forward.16} parent=0 // pred_check_branch
    %195 = sbr.rel (0) target = $region33
  $region32: #{encoder_forward.16} parent=0 // pred_region
    _
  $region33: #{encoder_forward.16} parent=0 // pred_fallthru
    _
  // Predicated region
  $region34: #{encoder_forward.16} parent=0 // pred_check
    _
  $region35: #{encoder_forward.16} parent=0 // pred_check_branch
    %197 = sbr.rel (0) target = $region37
  $region36: #{encoder_forward.16} parent=0 // pred_region
    _
  $region37: #{encoder_forward.16} parent=0 // pred_fallthru
    _

// kernel: encoder_forward.18
$region0: #{encoder_forward.18}
  #allocation0 [shape = 'u32[]', space=smem, size = 0x4, offset = 0x4, fixed_abs, tag = 'smem constant byte address 0x4 - core index']
  #allocation1 [shape = 'u32[72,128]{1,0:T(1,128)}', space=vmem, size = 0x9000, scoped, tag = 'internal scratch']
  %s0 = inlined_call_operand.vmem [shape: f32[8,32], index: 0, kind: input, shape index: {}]
  %s1 = inlined_call_operand.vmem [shape: bf16[32,32], index: 1, kind: input, shape index: {}]
  %s2 = inlined_call_operand.vmem [shape: bf16[8,32], index: 2, kind: output, shape index: {}]
  %s3 = sld [smem:[#allocation0]]
  $region18: #{encoder_forward.18} parent=0
    _
  %s5 = ssub.s32 1, %s3
  %s6 = scalar_select 0, %s5, %s3
  // Predicated region
  $region2: #{encoder_forward.18} parent=0 // pred_check
    _
  $region3: #{encoder_forward.18} parent=0 // pred_check_branch
    %8 = sbr.rel (0) target = $region5
  $region4: #{encoder_forward.18} parent=0 // pred_region
    _
  $region5: #{encoder_forward.18} parent=0 // pred_fallthru
    _
  // Predicated region
  $region6: #{encoder_forward.18} parent=0 // pred_check
    _
  $region7: #{encoder_forward.18} parent=0 // pred_check_branch
    %10 = sbr.rel (0) target = $region9
  $region8: #{encoder_forward.18} parent=0 // pred_region
    _
  $region9: #{encoder_forward.18} parent=0 // pred_fallthru
    _
  %v12 = vld [vmem:[%s0] sm:$0xff]
  %v13 = vld [vmem:[%s1] sm:$0xf]
  %v14 = vld [vmem:[%s1 + $0x4] sm:$0xf]
  %v15 = vld [vmem:[%s1 + $0x8] sm:$0xf]
  %v16 = vld [vmem:[%s1 + $0xc] sm:$0xf]
  %v17 = vpack.c.bf16 %v12, %v12
  %v22 = vunpack.c.l.b16 %v13
  %v23 = vunpack.c.l.b16 %v14
  %v24 = vunpack.c.l.b16 %v15
  %v25 = vunpack.c.l.b16 %v16
  %v26 = vpack.c.b16 %v23, %v22
  %v27 = vpack.c.b16 %v25, %v24
  %vm30 = vcmask 261120
  %v32 = vsel %vm30, %v17, 0
  %34 = vmatpush.bf16.msra.mxu0 0
  %35 = vmatpush.bf16.msra.mxu0 0
  %36 = vmatpush.bf16.msra.mxu0 0
  %37 = vmatpush.bf16.msra.mxu0 0
  %38 = vmatpush.bf16.msra.mxu0 0
  %39 = vmatpush.bf16.msra.mxu0 0
  %40 = vmatpush.bf16.msra.mxu0 %v27
  %41 = vmatpush.bf16.msra.mxu0 %v26
  %42 = vmatmul.bf16.gmra.mxu0 %v32
  %v43 = vpop.f32.mrf.mxu0
  %v44 = vadd.f32 0.0, %v43
  %v45 = vpop.f32.mrf.mxu0
  %46 = vdwg.mxu0
  %v47 = vpack.c.bf16 %v44, %v44
  %vm48 = vcmask 257024
  %49 = vst.msk [vmem:[%s2] sm:$0xf] %vm48, %v47
  // Predicated region
  $region10: #{encoder_forward.18} parent=0 // pred_check
    _
  $region11: #{encoder_forward.18} parent=0 // pred_check_branch
    %51 = sbr.rel (0) target = $region13
  $region12: #{encoder_forward.18} parent=0 // pred_region
    _
  $region13: #{encoder_forward.18} parent=0 // pred_fallthru
    _
  // Predicated region
  $region14: #{encoder_forward.18} parent=0 // pred_check
    _
  $region15: #{encoder_forward.18} parent=0 // pred_check_branch
    %53 = sbr.rel (0) target = $region17
  $region16: #{encoder_forward.18} parent=0 // pred_region
    _
  $region17: #{encoder_forward.18} parent=0 // pred_fallthru
    _

// kernel: encoder_forward.20
$region0: #{encoder_forward.20}
  #allocation0 [shape = 'u32[]', space=smem, size = 0x4, offset = 0x4, fixed_abs, tag = 'smem constant byte address 0x4 - core index']
  #allocation1 [shape = 'u32[72,128]{1,0:T(1,128)}', space=vmem, size = 0x9000, scoped, tag = 'internal scratch']
  %s0 = inlined_call_operand.vmem [shape: f32[16,32], index: 0, kind: input, shape index: {}]
  %s1 = inlined_call_operand.vmem [shape: bf16[16,32], index: 1, kind: input, shape index: {}]
  %s2 = inlined_call_operand.vmem [shape: bf16[32,32], index: 2, kind: input, shape index: {}]
  %s3 = inlined_call_operand.vmem [shape: f32[1,32], index: 3, kind: input, shape index: {}]
  %s4 = inlined_call_operand.vmem [shape: f32[16,32], index: 4, kind: output, shape index: {}]
  %s5 = sld [smem:[#allocation0]]
  $region26: #{encoder_forward.20} parent=0
    _
  %s7 = ssub.s32 1, %s5
  %s8 = scalar_select 0, %s7, %s5
  // Predicated region
  $region2: #{encoder_forward.20} parent=0 // pred_check
    _
  $region3: #{encoder_forward.20} parent=0 // pred_check_branch
    %10 = sbr.rel (0) target = $region5
  $region4: #{encoder_forward.20} parent=0 // pred_region
    _
  $region5: #{encoder_forward.20} parent=0 // pred_fallthru
    _
  // Predicated region
  $region6: #{encoder_forward.20} parent=0 // pred_check
    _
  $region7: #{encoder_forward.20} parent=0 // pred_check_branch
    %12 = sbr.rel (0) target = $region9
  $region8: #{encoder_forward.20} parent=0 // pred_region
    _
  $region9: #{encoder_forward.20} parent=0 // pred_fallthru
    _
  // Predicated region
  $region10: #{encoder_forward.20} parent=0 // pred_check
    _
  $region11: #{encoder_forward.20} parent=0 // pred_check_branch
    %14 = sbr.rel (0) target = $region13
  $region12: #{encoder_forward.20} parent=0 // pred_region
    _
  $region13: #{encoder_forward.20} parent=0 // pred_fallthru
    _
  // Predicated region
  $region14: #{encoder_forward.20} parent=0 // pred_check
    _
  $region15: #{encoder_forward.20} parent=0 // pred_check_branch
    %16 = sbr.rel (0) target = $region17
  $region16: #{encoder_forward.20} parent=0 // pred_region
    _
  $region17: #{encoder_forward.20} parent=0 // pred_fallthru
    _
  %v18 = vld [vmem:[%s0] sm:$0xff]
  %v19 = vld [vmem:[%s0 + $0x8] sm:$0xff]
  %v20 = vld [vmem:[%s1] sm:$0xf]
  %v21 = vld [vmem:[%s1 + $0x4] sm:$0xf]
  %v22 = vld [vmem:[%s2] sm:$0xf]
  %v23 = vld [vmem:[%s2 + $0x4] sm:$0xf]
  %v24 = vld [vmem:[%s2 + $0x8] sm:$0xf]
  %v25 = vld [vmem:[%s2 + $0xc] sm:$0xf]
  %v28 = vunpack.c.l.b16 %v20
  %v29 = vunpack.c.l.b16 %v21
  %v30 = vpack.c.b16 %v29, %v28
  %v35 = vunpack.c.l.b16 %v22
  %v36 = vunpack.c.l.b16 %v23
  %v37 = vunpack.c.l.b16 %v24
  %v38 = vunpack.c.l.b16 %v25
  %v39 = vpack.c.b16 %v36, %v35
  %v40 = vpack.c.b16 %v38, %v37
  %vm43 = vcmask 261120
  %v45 = vsel %vm43, %v30, 0
  %47 = vmatpush.bf16.msra.mxu0 0
  %48 = vmatpush.bf16.msra.mxu0 0
  %49 = vmatpush.bf16.msra.mxu0 0
  %50 = vmatpush.bf16.msra.mxu0 0
  %51 = vmatpush.bf16.msra.mxu0 0
  %52 = vmatpush.bf16.msra.mxu0 0
  %53 = vmatpush.bf16.msra.mxu0 %v40
  %54 = vmatpush.bf16.msra.mxu0 %v39
  %55 = vmatmul.bf16.gmra.mxu0 %v45
  %v56 = vpop.f32.mrf.mxu0
  %v57 = vadd.f32 0.0, %v56
  %v58 = vpop.f32.mrf.mxu0
  %v59 = vadd.f32 0.0, %v58
  %60 = vdwg.mxu0
  %v61 = vadd.f32 %v18, %v57
  %v62 = vadd.f32 %v19, %v59
  %v63 = vld [vmem:[%s3] sm:$0x1]
  %v65 = vperm.slane %v63, 0
  %v67 = vadd.f32 %v61, %v65
  %v68 = vadd.f32 %v62, %v65
  %69 = vst.msk [vmem:[%s4] sm:$0xff] %vm43, %v67
  %70 = vst.msk [vmem:[%s4 + $0x8] sm:$0xff] %vm43, %v68
  // Predicated region
  $region18: #{encoder_forward.20} parent=0 // pred_check
    _
  $region19: #{encoder_forward.20} parent=0 // pred_check_branch
    %72 = sbr.rel (0) target = $region21
  $region20: #{encoder_forward.20} parent=0 // pred_region
    _
  $region21: #{encoder_forward.20} parent=0 // pred_fallthru
    _
  // Predicated region
  $region22: #{encoder_forward.20} parent=0 // pred_check
    _
  $region23: #{encoder_forward.20} parent=0 // pred_check_branch
    %74 = sbr.rel (0) target = $region25
  $region24: #{encoder_forward.20} parent=0 // pred_region
    _
  $region25: #{encoder_forward.20} parent=0 // pred_fallthru
    _

// kernel: encoder_forward.19
$region0: #{encoder_forward.19}
  #allocation0 [shape = 'u32[]', space=smem, size = 0x4, offset = 0x4, fixed_abs, tag = 'smem constant byte address 0x4 - core index']
  #allocation1 [shape = 'u32[72,128]{1,0:T(1,128)}', space=vmem, size = 0x9000, scoped, tag = 'internal scratch']
  %s0 = inlined_call_operand.vmem [shape: bf16[2,4,8,8], index: 0, kind: input, shape index: {}]
  %s1 = inlined_call_operand.vmem [shape: bf16[2,4,8,8], index: 1, kind: input, shape index: {}]
  %s2 = inlined_call_operand.vmem [shape: bf16[2,4,8,8], index: 2, kind: input, shape index: {}]
  %s3 = inlined_call_operand.vmem [shape: bf16[4,8,8], index: 3, kind: input, shape index: {}]
  %s4 = inlined_call_operand.vmem [shape: f32[4,1,8], index: 4, kind: input, shape index: {}]
  %s5 = inlined_call_operand.vmem [shape: f32[4,1,8], index: 5, kind: input, shape index: {}]
  %s6 = inlined_call_operand.vmem [shape: bf16[2,4,8,8], index: 6, kind: output, shape index: {}]
  %s7 = sld [smem:[#allocation0]]
  $region57: #{encoder_forward.19} parent=0
    _
  %s9 = ssub.s32 1, %s7
  %s10 = scalar_select 0, %s9, %s7
  loop: start=0, step=1, limit=10
  $region2: #{encoder_forward.19} parent=0 // loop_pre_header
    _
  $region3: #{encoder_forward.19} parent=0 // loop_header
    %s12 = sphi 0, %s16
    %p13 = scmp.ge.s32.totalorder %s12, 10
    %s19 = sphi 0, %s31
    %s20 = sphi 0, %s27
    %s21 = sphi 0, %s19
    %s22 = sphi 0, %s20
    %s23 = sphi 0, %s21
    %s24 = sphi 0, %s22
    %s36 = sphi 0, %s38
    %s39 = sphi 0, %s36
    %s40 = sphi 0, %s39
    %s56 = sphi 0, %s40
    %s64 = sphi 0, %s66
    %s67 = sphi 0, %s64
    %s68 = sphi 0, %s67
    %s84 = sphi 0, %s68
    %s92 = sphi 0, %s94
    %s95 = sphi 0, %s92
    %s96 = sphi 0, %s95
    %s112 = sphi 0, %s96
    %s118 = sphi 0, %s120
    %s121 = sphi 0, %s118
    %s122 = sphi 0, %s121
    %s138 = sphi 0, %s122
    %s144 = sphi 0, %s146
    %s147 = sphi 0, %s144
    %s148 = sphi 0, %s147
    %s164 = sphi 0, %s148
    %s170 = sphi 0, %s172
    %s173 = sphi 0, %s170
    %s174 = sphi 0, %s173
    %s190 = sphi 0, %s174
    %s198 = sphi 0, %s200
    %s201 = sphi 0, %s198
    %s202 = sphi 0, %s201
    %s218 = sphi 0, %s202
  $region4: #{encoder_forward.19} parent=0 // loop_header_branch
    %15 = sbr.rel (%p13) target = $region8
  $region5: #{encoder_forward.19} parent=0 // loop_body
    %s17 = ssub.s32 %s12, 1
    %s18 = ssub.s32 %s12, 2
    %s25 = sadd.s32 1, %s20
    %p26 = scmp.ge.s32.totalorder %s25, 4
    %s27 = scalar_select %p26, 0, %s25
    %s28 = sadd.s32 1, %s19
    %s29 = scalar_select %p26, %s28, %s19
    %p30 = scmp.ge.s32.totalorder %s29, 2
    %s31 = scalar_select %p30, 0, %s29
    %s32 = ssub.s32 %s19, %s31
    %s33 = ssub.s32 %s20, %s27
    %s34 = sor.u32 %s32, %s33
    %p35 = scmp.eq.s32.totalorder %s34, 0
    %s37 = sadd.s32 %s36, 1
    %s38 = scalar_select %p35, %s36, %s37
    %p41 = pneg %p35
    %p42 = scmp.eq.s32.totalorder %s12, 7
    %p43 = por %p41, %p42
    %p44 = scmp.ne.s32.totalorder %s36, %s39
    %p45 = scmp.eq.s32.totalorder %s12, 0
    %p46 = por %p44, %p45
    %p47 = scmp.ne.s32.totalorder %s36, %s39
    %p48 = scmp.eq.s32.totalorder %s17, 7
    %p49 = por %p47, %p48
    %p50 = scmp.ne.s32.totalorder %s39, %s40
    %p51 = scmp.eq.s32.totalorder %s17, 0
    %p52 = por %p50, %p51
    %p53 = scmp.ne.s32.totalorder %s39, %s40
    %p54 = scmp.eq.s32.totalorder %s18, 7
    %p55 = por %p53, %p54
    %p57 = scmp.ne.s32.totalorder %s40, %s56
    %p58 = scmp.eq.s32.totalorder %s18, 0
    %p59 = por %p57, %p58
    %s60 = ssub.s32 %s19, %s31
    %s61 = ssub.s32 %s20, %s27
    %s62 = sor.u32 %s60, %s61
    %p63 = scmp.eq.s32.totalorder %s62, 0
    %s65 = sadd.s32 %s64, 1
    %s66 = scalar_select %p63, %s64, %s65
    %p69 = pneg %p63
    %p70 = scmp.eq.s32.totalorder %s12, 7
    %p71 = por %p69, %p70
    %p72 = scmp.ne.s32.totalorder %s64, %s67
    %p73 = scmp.eq.s32.totalorder %s12, 0
    %p74 = por %p72, %p73
    %p75 = scmp.ne.s32.totalorder %s64, %s67
    %p76 = scmp.eq.s32.totalorder %s17, 7
    %p77 = por %p75, %p76
    %p78 = scmp.ne.s32.totalorder %s67, %s68
    %p79 = scmp.eq.s32.totalorder %s17, 0
    %p80 = por %p78, %p79
    %p81 = scmp.ne.s32.totalorder %s67, %s68
    %p82 = scmp.eq.s32.totalorder %s18, 7
    %p83 = por %p81, %p82
    %p85 = scmp.ne.s32.totalorder %s68, %s84
    %p86 = scmp.eq.s32.totalorder %s18, 0
    %p87 = por %p85, %p86
    %s88 = ssub.s32 %s19, %s31
    %s89 = ssub.s32 %s20, %s27
    %s90 = sor.u32 %s88, %s89
    %p91 = scmp.eq.s32.totalorder %s90, 0
    %s93 = sadd.s32 %s92, 1
    %s94 = scalar_select %p91, %s92, %s93
    %p97 = pneg %p91
    %p98 = scmp.eq.s32.totalorder %s12, 7
    %p99 = por %p97, %p98
    %p100 = scmp.ne.s32.totalorder %s92, %s95
    %p101 = scmp.eq.s32.totalorder %s12, 0
    %p102 = por %p100, %p101
    %p103 = scmp.ne.s32.totalorder %s92, %s95
    %p104 = scmp.eq.s32.totalorder %s17, 7
    %p105 = por %p103, %p104
    %p106 = scmp.ne.s32.totalorder %s95, %s96
    %p107 = scmp.eq.s32.totalorder %s17, 0
    %p108 = por %p106, %p107
    %p109 = scmp.ne.s32.totalorder %s95, %s96
    %p110 = scmp.eq.s32.totalorder %s18, 7
    %p111 = por %p109, %p110
    %p113 = scmp.ne.s32.totalorder %s96, %s112
    %p114 = scmp.eq.s32.totalorder %s18, 0
    %p115 = por %p113, %p114
    %s116 = ssub.s32 %s20, %s27
    %p117 = scmp.eq.s32.totalorder %s116, 0
    %s119 = sadd.s32 %s118, 1
    %s120 = scalar_select %p117, %s118, %s119
    %p123 = pneg %p117
    %p124 = scmp.eq.s32.totalorder %s12, 7
    %p125 = por %p123, %p124
    %p126 = scmp.ne.s32.totalorder %s118, %s121
    %p127 = scmp.eq.s32.totalorder %s12, 0
    %p128 = por %p126, %p127
    %p129 = scmp.ne.s32.totalorder %s118, %s121
    %p130 = scmp.eq.s32.totalorder %s17, 7
    %p131 = por %p129, %p130
    %p132 = scmp.ne.s32.totalorder %s121, %s122
    %p133 = scmp.eq.s32.totalorder %s17, 0
    %p134 = por %p132, %p133
    %p135 = scmp.ne.s32.totalorder %s121, %s122
    %p136 = scmp.eq.s32.totalorder %s18, 7
    %p137 = por %p135, %p136
    %p139 = scmp.ne.s32.totalorder %s122, %s138
    %p140 = scmp.eq.s32.totalorder %s18, 0
    %p141 = por %p139, %p140
    %s142 = ssub.s32 %s20, %s27
    %p143 = scmp.eq.s32.totalorder %s142, 0
    %s145 = sadd.s32 %s144, 1
    %s146 = scalar_select %p143, %s144, %s145
    %p149 = pneg %p143
    %p150 = scmp.eq.s32.totalorder %s12, 7
    %p151 = por %p149, %p150
    %p152 = scmp.ne.s32.totalorder %s144, %s147
    %p153 = scmp.eq.s32.totalorder %s12, 0
    %p154 = por %p152, %p153
    %p155 = scmp.ne.s32.totalorder %s144, %s147
    %p156 = scmp.eq.s32.totalorder %s17, 7
    %p157 = por %p155, %p156
    %p158 = scmp.ne.s32.totalorder %s147, %s148
    %p159 = scmp.eq.s32.totalorder %s17, 0
    %p160 = por %p158, %p159
    %p161 = scmp.ne.s32.totalorder %s147, %s148
    %p162 = scmp.eq.s32.totalorder %s18, 7
    %p163 = por %p161, %p162
    %p165 = scmp.ne.s32.totalorder %s148, %s164
    %p166 = scmp.eq.s32.totalorder %s18, 0
    %p167 = por %p165, %p166
    %s168 = ssub.s32 %s20, %s27
    %p169 = scmp.eq.s32.totalorder %s168, 0
    %s171 = sadd.s32 %s170, 1
    %s172 = scalar_select %p169, %s170, %s171
    %p175 = pneg %p169
    %p176 = scmp.eq.s32.totalorder %s12, 7
    %p177 = por %p175, %p176
    %p178 = scmp.ne.s32.totalorder %s170, %s173
    %p179 = scmp.eq.s32.totalorder %s12, 0
    %p180 = por %p178, %p179
    %p181 = scmp.ne.s32.totalorder %s170, %s173
    %p182 = scmp.eq.s32.totalorder %s17, 7
    %p183 = por %p181, %p182
    %p184 = scmp.ne.s32.totalorder %s173, %s174
    %p185 = scmp.eq.s32.totalorder %s17, 0
    %p186 = por %p184, %p185
    %p187 = scmp.ne.s32.totalorder %s173, %s174
    %p188 = scmp.eq.s32.totalorder %s18, 7
    %p189 = por %p187, %p188
    %p191 = scmp.ne.s32.totalorder %s174, %s190
    %p192 = scmp.eq.s32.totalorder %s18, 0
    %p193 = por %p191, %p192
    %s194 = ssub.s32 %s19, %s31
    %s195 = ssub.s32 %s20, %s27
    %s196 = sor.u32 %s194, %s195
    %p197 = scmp.eq.s32.totalorder %s196, 0
    %s199 = sadd.s32 %s198, 1
    %s200 = scalar_select %p197, %s198, %s199
    %p203 = pneg %p197
    %p204 = scmp.eq.s32.totalorder %s12, 7
    %p205 = por %p203, %p204
    %p206 = scmp.ne.s32.totalorder %s198, %s201
    %p207 = scmp.eq.s32.totalorder %s12, 0
    %p208 = por %p206, %p207
    %p209 = scmp.ne.s32.totalorder %s198, %s201
    %p210 = scmp.eq.s32.totalorder %s17, 7
    %p211 = por %p209, %p210
    %p212 = scmp.ne.s32.totalorder %s201, %s202
    %p213 = scmp.eq.s32.totalorder %s17, 0
    %p214 = por %p212, %p213
    %p215 = scmp.ne.s32.totalorder %s201, %s202
    %p216 = scmp.eq.s32.totalorder %s18, 7
    %p217 = por %p215, %p216
    %p219 = scmp.ne.s32.totalorder %s202, %s218
    %p220 = scmp.eq.s32.totalorder %s18, 0
    %p221 = por %p219, %p220
    %p222 = scmp.le.s32.totalorder 1, %s12
    %p223 = scmp.lt.s32.totalorder %s12, 9
    %p224 = pnand %p222, %p223
    %p225 = pneg %p224
    // Predicated region
    $region9: #{encoder_forward.19} parent=5 // pred_check
      _
    $region10: #{encoder_forward.19} parent=5 // pred_check_branch
      %227 = sbr.rel (%p224) target = $region12
    $region11: #{encoder_forward.19} parent=5 // pred_region
      %s228 = ssub.s32 %s12, 1
    $region12: #{encoder_forward.19} parent=5 // pred_fallthru
      _
    %p229 = scmp.lt.s32.totalorder %s12, 8
    // Predicated region
    $region13: #{encoder_forward.19} parent=5 // pred_check
      %p230 = pneg %p229
    $region14: #{encoder_forward.19} parent=5 // pred_check_branch
      %232 = sbr.rel (%p230) target = $region16
    $region15: #{encoder_forward.19} parent=5 // pred_region
      // Predicated region
      $region17: #{encoder_forward.19} parent=15 // pred_check
        %p233 = pneg %p46
      $region18: #{encoder_forward.19} parent=15 // pred_check_branch
        %235 = sbr.rel (%p233) target = $region20
      $region19: #{encoder_forward.19} parent=15 // pred_region
        %p236 = scmp.lt.s32.totalorder %s19, 1
        %s237 = scalar_select %p236, %s19, 1
        %p238 = scmp.lt.s32.totalorder %s20, 3
        %s239 = scalar_select %p238, %s20, 3
        %s240 = smul.addr %s237, 4
        %s241 = sadd.s32 %s239, %s240
        %s242 = smul.addr %s241, 4
        %s243 = scalar_lea.vmem %s0, %s242
      $region20: #{encoder_forward.19} parent=15 // pred_fallthru
        _
      // Predicated region
      $region21: #{encoder_forward.19} parent=15 // pred_check
        %p244 = pneg %p74
      $region22: #{encoder_forward.19} parent=15 // pred_check_branch
        %246 = sbr.rel (%p244) target = $region24
      $region23: #{encoder_forward.19} parent=15 // pred_region
        %p247 = scmp.lt.s32.totalorder %s19, 1
        %s248 = scalar_select %p247, %s19, 1
        %p249 = scmp.lt.s32.totalorder %s20, 3
        %s250 = scalar_select %p249, %s20, 3
        %s251 = smul.addr %s248, 4
        %s252 = sadd.s32 %s250, %s251
        %s253 = smul.addr %s252, 4
        %s254 = scalar_lea.vmem %s1, %s253
      $region24: #{encoder_forward.19} parent=15 // pred_fallthru
        _
      // Predicated region
      $region25: #{encoder_forward.19} parent=15 // pred_check
        %p255 = pneg %p102
      $region26: #{encoder_forward.19} parent=15 // pred_check_branch
        %257 = sbr.rel (%p255) target = $region28
      $region27: #{encoder_forward.19} parent=15 // pred_region
        %p258 = scmp.lt.s32.totalorder %s19, 1
        %s259 = scalar_select %p258, %s19, 1
        %p260 = scmp.lt.s32.totalorder %s20, 3
        %s261 = scalar_select %p260, %s20, 3
        %s262 = smul.addr %s259, 4
        %s263 = sadd.s32 %s261, %s262
        %s264 = smul.addr %s263, 4
        %s265 = scalar_lea.vmem %s2, %s264
      $region28: #{encoder_forward.19} parent=15 // pred_fallthru
        _
      // Predicated region
      $region29: #{encoder_forward.19} parent=15 // pred_check
        %p266 = pneg %p128
      $region30: #{encoder_forward.19} parent=15 // pred_check_branch
        %268 = sbr.rel (%p266) target = $region32
      $region31: #{encoder_forward.19} parent=15 // pred_region
        %p269 = scmp.lt.s32.totalorder %s20, 3
        %s270 = scalar_select %p269, %s20, 3
        %s271 = smul.addr %s270, 4
        %s272 = scalar_lea.vmem %s3, %s271
      $region32: #{encoder_forward.19} parent=15 // pred_fallthru
        _
      // Predicated region
      $region33: #{encoder_forward.19} parent=15 // pred_check
        %p273 = pneg %p154
      $region34: #{encoder_forward.19} parent=15 // pred_check_branch
        %275 = sbr.rel (%p273) target = $region36
      $region35: #{encoder_forward.19} parent=15 // pred_region
        %p276 = scmp.lt.s32.totalorder %s20, 3
        %s277 = scalar_select %p276, %s20, 3
        %s278 = scalar_lea.vmem %s4, %s277
      $region36: #{encoder_forward.19} parent=15 // pred_fallthru
        _
      // Predicated region
      $region37: #{encoder_forward.19} parent=15 // pred_check
        %p279 = pneg %p180
      $region38: #{encoder_forward.19} parent=15 // pred_check_branch
        %281 = sbr.rel (%p279) target = $region40
      $region39: #{encoder_forward.19} parent=15 // pred_region
        %p282 = scmp.lt.s32.totalorder %s20, 3
        %s283 = scalar_select %p282, %s20, 3
        %s284 = scalar_lea.vmem %s5, %s283
      $region40: #{encoder_forward.19} parent=15 // pred_fallthru
        _
    $region16: #{encoder_forward.19} parent=5 // pred_fallthru
      _
    %p285 = scmp.le.s32.totalorder 1, %s12
    %p286 = scmp.lt.s32.totalorder %s12, 9
    %p287 = pnand %p285, %p286
    %p288 = pneg %p287
    // Predicated region
    $region41: #{encoder_forward.19} parent=5 // pred_check
      _
    $region42: #{encoder_forward.19} parent=5 // pred_check_branch
      %290 = sbr.rel (%p287) target = $region44
    $region43: #{encoder_forward.19} parent=5 // pred_region
      %s291 = ssub.s32 %s12, 1
      %p292 = scmp.lt.s32.totalorder %s21, 1
      %s293 = scalar_select %p292, %s21, 1
      %p294 = scmp.lt.s32.totalorder %s22, 3
      %s295 = scalar_select %p294, %s22, 3
      %s296 = smul.addr %s293, 4
      %s297 = sadd.s32 %s295, %s296
      %s298 = smul.addr %s297, 4
      %s299 = scalar_lea.vmem %s0, %s298
      %p300 = pneg %p52
      %p301 = pneg %p49
      %p302 = scmp.lt.s32.totalorder %s21, 1
      %s303 = scalar_select %p302, %s21, 1
      %p304 = scmp.lt.s32.totalorder %s22, 3
      %s305 = scalar_select %p304, %s22, 3
      %s306 = smul.addr %s303, 4
      %s307 = sadd.s32 %s305, %s306
      %s308 = smul.addr %s307, 4
      %s309 = scalar_lea.vmem %s1, %s308
      %p310 = pneg %p80
      %p311 = pneg %p77
      %p312 = scmp.lt.s32.totalorder %s21, 1
      %s313 = scalar_select %p312, %s21, 1
      %p314 = scmp.lt.s32.totalorder %s22, 3
      %s315 = scalar_select %p314, %s22, 3
      %s316 = smul.addr %s313, 4
      %s317 = sadd.s32 %s315, %s316
      %s318 = smul.addr %s317, 4
      %s319 = scalar_lea.vmem %s2, %s318
      %p320 = pneg %p108
      %p321 = pneg %p105
      %p322 = scmp.lt.s32.totalorder %s22, 3
      %s323 = scalar_select %p322, %s22, 3
      %s324 = smul.addr %s323, 4
      %s325 = scalar_lea.vmem %s3, %s324
      %p326 = pneg %p134
      %p327 = pneg %p131
      %p328 = scmp.lt.s32.totalorder %s22, 3
      %s329 = scalar_select %p328, %s22, 3
      %s330 = scalar_lea.vmem %s4, %s329
      %p331 = pneg %p160
      %p332 = pneg %p157
      %p333 = scmp.lt.s32.totalorder %s22, 3
      %s334 = scalar_select %p333, %s22, 3
      %s335 = scalar_lea.vmem %s5, %s334
      %p336 = pneg %p186
      %p337 = pneg %p183
      %p338 = pneg %p214
      %p339 = pneg %p211
      %p340 = scmp.lt.s32.totalorder %s21, 1
      %s341 = scalar_select %p340, %s21, 1
      %p342 = scmp.lt.s32.totalorder %s22, 3
      %s343 = scalar_select %p342, %s22, 3
      %s344 = smul.addr %s341, 4
      %s345 = sadd.s32 %s343, %s344
      %s346 = smul.addr %s345, 4
      %s347 = scalar_lea.vmem %s6, %s346
      %p348 = scmp.lt.s32.totalorder %s21, 1
      %s349 = scalar_select %p348, %s21, 1
      %p350 = scmp.lt.s32.totalorder %s22, 3
      %s351 = scalar_select %p350, %s22, 3
      %s352 = smul.addr %s349, 4
      %s353 = sadd.s32 %s351, %s352
      %s354 = smul.addr %s353, 4
      %s355 = scalar_lea.vmem %s0, %s354
      %p356 = scmp.lt.s32.totalorder %s21, 1
      %s357 = scalar_select %p356, %s21, 1
      %p358 = scmp.lt.s32.totalorder %s22, 3
      %s359 = scalar_select %p358, %s22, 3
      %s360 = smul.addr %s357, 4
      %s361 = sadd.s32 %s359, %s360
      %s362 = smul.addr %s361, 4
      %s363 = scalar_lea.vmem %s1, %s362
      %p364 = scmp.lt.s32.totalorder %s21, 1
      %s365 = scalar_select %p364, %s21, 1
      %p366 = scmp.lt.s32.totalorder %s22, 3
      %s367 = scalar_select %p366, %s22, 3
      %s368 = smul.addr %s365, 4
      %s369 = sadd.s32 %s367, %s368
      %s370 = smul.addr %s369, 4
      %s371 = scalar_lea.vmem %s2, %s370
      %p372 = scmp.lt.s32.totalorder %s22, 3
      %s373 = scalar_select %p372, %s22, 3
      %s374 = smul.addr %s373, 4
      %s375 = scalar_lea.vmem %s3, %s374
      %p376 = scmp.lt.s32.totalorder %s22, 3
      %s377 = scalar_select %p376, %s22, 3
      %s378 = scalar_lea.vmem %s4, %s377
      %p379 = scmp.lt.s32.totalorder %s22, 3
      %s380 = scalar_select %p379, %s22, 3
      %s381 = scalar_lea.vmem %s5, %s380
      %p382 = scmp.lt.s32.totalorder %s21, 1
      %s383 = scalar_select %p382, %s21, 1
      %p384 = scmp.lt.s32.totalorder %s22, 3
      %s385 = scalar_select %p384, %s22, 3
      %s386 = smul.addr %s383, 4
      %s387 = sadd.s32 %s385, %s386
      %s388 = smul.addr %s387, 4
      %s389 = scalar_lea.vmem %s6, %s388
      %v391 = vld [vmem:[%s355] sm:$0xf]
      %v392 = vunpack.c.l.bf16 %v391
      %v393 = vld [vmem:[%s378] sm:$0x1]
      %v394 = vld [vmem:[%s381] sm:$0x1]
      %v396 = vperm.slane %v393, 0
      %v398 = vadd.f32 %v392, %v396
      %v399 = vpack.c.bf16 %v398, %v398
      %v401 = vperm.slane %v394, 0
      %v403 = vadd.f32 %v392, %v401
      %v404 = vpack.c.bf16 %v403, %v403
      %v405 = vld [vmem:[%s363] sm:$0xf]
      %v406 = vld [vmem:[%s375] sm:$0xf]
      %vm407 = vcmask 64512
      %v409 = vsel %vm407, %v404, 0
      %v412 = vsel %vm407, %v406, 0
      %414 = vmatpush.bf16.xpose.msra.mxu0 0
      %415 = vmatpush.bf16.xpose.msra.mxu0 0
      %416 = vmatpush.bf16.xpose.msra.mxu0 0
      %417 = vmatpush.bf16.xpose.msra.mxu0 0
      %418 = vmatpush.bf16.xpose.msra.mxu0 0
      %419 = vmatpush.bf16.xpose.msra.mxu0 0
      %420 = vmatpush.bf16.xpose.msra.mxu0 0
      %421 = vmatpush.bf16.xpose.msra.mxu0 %v412
      %422 = vmatmul.bf16.gmra.mxu0 %v409
      %v423 = vpop.f32.mrf.mxu0
      %v424 = vadd.f32 0.0, %v423
      %v425 = vpop.f32.mrf.mxu0
      %426 = vdwg.mxu0
      %v427 = vlaneseq
      %v428 = vshrl.u32 %v427, 7
      %v429 = vlaneseq
      %v430 = vand.u32 %v429, 127
      %v431 = vadd.s32 %v428, 1
      %vm432 = vcmp.ge.s32.totalorder %v431, 8
      %v433 = vsub.s32 %v431, 8
      %v434 = vsel %vm432, %v433, %v431
      %v435 = vadd.s32 %v428, 2
      %vm436 = vcmp.ge.s32.totalorder %v435, 8
      %v437 = vsub.s32 %v435, 8
      %v438 = vsel %vm436, %v437, %v435
      %v440 = vrot.slane %v424, 1
      %vm442 = vcmask 1046528
      %v443 = vsel %vm442, %v440, %v440
      %v444 = vand.u32 %v434, 1
      %vm445 = vcmp.ne.s32.totalorder %v444, 0
      %446 = vrot.lane.b32.xlu0 %v424, 121
      %v447 = vpop.permute.xlu0 %446
      %449 = vrot.lane.b32.xlu0 %v424, 1
      %v450 = vpop.permute.xlu0 %449
      %vm452 = vcmask 7168
      %v453 = vsel %vm452, %v447, %v450
      %v454 = vsel %vm445, %v453, %v424
      %v455 = vand.u32 %v434, 2
      %vm456 = vcmp.ne.s32.totalorder %v455, 0
      %458 = vrot.lane.b32.xlu0 %v454, 122
      %v459 = vpop.permute.xlu0 %458
      %461 = vrot.lane.b32.xlu0 %v454, 2
      %v462 = vpop.permute.xlu0 %461
      %vm464 = vcmask 15360
      %v465 = vsel %vm464, %v459, %v462
      %v466 = vsel %vm456, %v465, %v454
      %v467 = vand.u32 %v434, 4
      %vm468 = vcmp.ne.s32.totalorder %v467, 0
      %470 = vrot.lane.b32.xlu0 %v466, 124
      %v471 = vpop.permute.xlu0 %470
      %473 = vrot.lane.b32.xlu0 %v466, 4
      %v474 = vpop.permute.xlu0 %473
      %vm476 = vcmask 31744
      %v477 = vsel %vm476, %v471, %v474
      %v478 = vsel %vm468, %v477, %v466
      %v479 = vand.u32 %v438, 1
      %vm480 = vcmp.ne.s32.totalorder %v479, 0
      %482 = vrot.lane.b32.xlu0 %v443, 121
      %v483 = vpop.permute.xlu0 %482
      %485 = vrot.lane.b32.xlu0 %v443, 1
      %v486 = vpop.permute.xlu0 %485
      %v488 = vsel %vm452, %v483, %v486
      %v489 = vsel %vm480, %v488, %v443
      %v490 = vand.u32 %v438, 2
      %vm491 = vcmp.ne.s32.totalorder %v490, 0
      %493 = vrot.lane.b32.xlu0 %v489, 122
      %v494 = vpop.permute.xlu0 %493
      %496 = vrot.lane.b32.xlu0 %v489, 2
      %v497 = vpop.permute.xlu0 %496
      %v499 = vsel %vm464, %v494, %v497
      %v500 = vsel %vm491, %v499, %v489
      %v501 = vand.u32 %v438, 4
      %vm502 = vcmp.ne.s32.totalorder %v501, 0
      %504 = vrot.lane.b32.xlu0 %v500, 124
      %v505 = vpop.permute.xlu0 %504
      %507 = vrot.lane.b32.xlu0 %v500, 4
      %v508 = vpop.permute.xlu0 %507
      %v510 = vsel %vm476, %v505, %v508
      %v511 = vsel %vm502, %v510, %v500
      %vm512 = vcmp.le.s32.totalorder %v430, %v428
      %vm513 = vcmp.eq.s32.totalorder %v430, %v431
      %v514 = vsel %vm513, 0.0, %v511
      %v515 = vsel %vm512, %v478, %v514
      %v517 = vsel %vm407, %v399, 0
      %v520 = vsel %vm407, %v405, 0
      %522 = vmatpush.bf16.xpose.msra.mxu0 0
      %523 = vmatpush.bf16.xpose.msra.mxu0 0
      %524 = vmatpush.bf16.xpose.msra.mxu0 0
      %525 = vmatpush.bf16.xpose.msra.mxu0 0
      %526 = vmatpush.bf16.xpose.msra.mxu0 0
      %527 = vmatpush.bf16.xpose.msra.mxu0 0
      %528 = vmatpush.bf16.xpose.msra.mxu0 0
      %529 = vmatpush.bf16.xpose.msra.mxu0 %v520
      %530 = vmatmul.bf16.gmra.mxu0 %v517
      %v531 = vpop.f32.mrf.mxu0
      %v532 = vadd.f32 %v515, %v531
      %v533 = vpop.f32.mrf.mxu0
      %534 = vdwg.mxu0
      %v535 = vmul.f32 %v532, 0.35355338
      %v536 = vsel %vm407, %v535, -inf
      %537 = vmax.xlane.f32.xlu0 %v536
      %v538 = vpop.xlane.xlu0 %537
      %v539 = vsub.f32 %v535, %v538
      %v540 = vmul.f32 %v539, 1.442695
      %v541 = vpow.pop %v540
      %v542 = vsel %vm407, %v541, 0.0
      %543 = vadd.xlane.f32.xlu0 %v542
      %v544 = vpop.xlane.xlu0 %543
      %v545 = vrcp.pop %v544
      %v546 = vmul.f32 %v541, %v545
      %v547 = vpack.c.bf16 %v546, %v546
      %v548 = vld [vmem:[%s371] sm:$0xf]
      %v550 = vsel %vm407, %v547, 0
      %vm552 = vcmask 1043456
      %v554 = vsel %vm552, %v548, 0
      %556 = vmatpush.bf16.msra.mxu0 0
      %557 = vmatpush.bf16.msra.mxu0 0
      %558 = vmatpush.bf16.msra.mxu0 0
      %559 = vmatpush.bf16.msra.mxu0 0
      %560 = vmatpush.bf16.msra.mxu0 0
      %561 = vmatpush.bf16.msra.mxu0 0
      %562 = vmatpush.bf16.msra.mxu0 0
      %563 = vmatpush.bf16.msra.mxu0 %v554
      %564 = vmatmul.bf16.gmra.mxu0 %v550
      %v565 = vpop.f32.mrf.mxu0
      %v566 = vadd.f32 0.0, %v565
      %v567 = vpop.f32.mrf.mxu0
      %568 = vdwg.mxu0
      %v569 = vpack.c.bf16 %v566, %v566
      %vm570 = vcmask 60416
      %571 = vst.msk [vmem:[%s389] sm:$0xf] %vm570, %v569
      %p572 = scmp.lt.s32.totalorder %s21, 1
      %s573 = scalar_select %p572, %s21, 1
      %p574 = scmp.lt.s32.totalorder %s22, 3
      %s575 = scalar_select %p574, %s22, 3
      %s576 = smul.addr %s573, 4
      %s577 = sadd.s32 %s575, %s576
      %s578 = smul.addr %s577, 4
      %s579 = scalar_lea.vmem %s6, %s578
      // Predicated region
      $region45: #{encoder_forward.19} parent=43 // pred_check
        %p580 = pneg %p211
      $region46: #{encoder_forward.19} parent=43 // pred_check_branch
        %582 = sbr.rel (%p580) target = $region48
      $region47: #{encoder_forward.19} parent=43 // pred_region
        _
      $region48: #{encoder_forward.19} parent=43 // pred_fallthru
        _
    $region44: #{encoder_forward.19} parent=5 // pred_fallthru
      _
    %p583 = scmp.le.s32.totalorder 2, %s12
    // Predicated region
    $region49: #{encoder_forward.19} parent=5 // pred_check
      %p584 = pneg %p583
    $region50: #{encoder_forward.19} parent=5 // pred_check_branch
      %586 = sbr.rel (%p584) target = $region52
    $region51: #{encoder_forward.19} parent=5 // pred_region
      %s587 = ssub.s32 %s12, 2
      // Predicated region
      $region53: #{encoder_forward.19} parent=51 // pred_check
        %p588 = pneg %p217
      $region54: #{encoder_forward.19} parent=51 // pred_check_branch
        %590 = sbr.rel (%p588) target = $region56
      $region55: #{encoder_forward.19} parent=51 // pred_region
        %p591 = scmp.lt.s32.totalorder %s23, 1
        %s592 = scalar_select %p591, %s23, 1
        %p593 = scmp.lt.s32.totalorder %s24, 3
        %s594 = scalar_select %p593, %s24, 3
        %s595 = smul.addr %s592, 4
        %s596 = sadd.s32 %s594, %s595
        %s597 = smul.addr %s596, 4
        %s598 = scalar_lea.vmem %s6, %s597
      $region56: #{encoder_forward.19} parent=51 // pred_fallthru
        _
    $region52: #{encoder_forward.19} parent=5 // pred_fallthru
      _
  $region6: #{encoder_forward.19} parent=0 // loop_footer
    %s16 = sadd.s32 1, %s12
  $region7: #{encoder_forward.19} parent=0 // loop_footer_branch
    %11 = sbr.rel target = $region3
  $region8: #{encoder_forward.19} parent=0 // loop_exit
    _

// kernel: encoder_forward.22
$region0: #{encoder_forward.22}
  #allocation0 [shape = 'u32[]', space=smem, size = 0x4, offset = 0x4, fixed_abs, tag = 'smem constant byte address 0x4 - core index']
  #allocation1 [shape = 'u32[72,128]{1,0:T(1,128)}', space=vmem, size = 0x9000, scoped, tag = 'internal scratch']
  %s0 = inlined_call_operand.vmem [shape: f32[16,32], index: 0, kind: input, shape index: {}]
  %s1 = inlined_call_operand.vmem [shape: f32[1,32], index: 1, kind: input, shape index: {}]
  %s2 = inlined_call_operand.vmem [shape: f32[1,32], index: 2, kind: input, shape index: {}]
  %s3 = inlined_call_operand.vmem [shape: bf16[32,64], index: 3, kind: input, shape index: {}]
  %s4 = inlined_call_operand.vmem [shape: f32[1,64], index: 4, kind: input, shape index: {}]
  %s5 = inlined_call_operand.vmem [shape: bf16[64,32], index: 5, kind: input, shape index: {}]
  %s6 = inlined_call_operand.vmem [shape: f32[1,32], index: 6, kind: input, shape index: {}]
  %s7 = inlined_call_operand.vmem [shape: f32[16,32], index: 7, kind: output, shape index: {}]
  %s8 = sld [smem:[#allocation0]]
  $region38: #{encoder_forward.22} parent=0
    _
  %s10 = ssub.s32 1, %s8
  %s11 = scalar_select 0, %s10, %s8
  // Predicated region
  $region2: #{encoder_forward.22} parent=0 // pred_check
    _
  $region3: #{encoder_forward.22} parent=0 // pred_check_branch
    %13 = sbr.rel (0) target = $region5
  $region4: #{encoder_forward.22} parent=0 // pred_region
    _
  $region5: #{encoder_forward.22} parent=0 // pred_fallthru
    _
  // Predicated region
  $region6: #{encoder_forward.22} parent=0 // pred_check
    _
  $region7: #{encoder_forward.22} parent=0 // pred_check_branch
    %15 = sbr.rel (0) target = $region9
  $region8: #{encoder_forward.22} parent=0 // pred_region
    _
  $region9: #{encoder_forward.22} parent=0 // pred_fallthru
    _
  // Predicated region
  $region10: #{encoder_forward.22} parent=0 // pred_check
    _
  $region11: #{encoder_forward.22} parent=0 // pred_check_branch
    %17 = sbr.rel (0) target = $region13
  $region12: #{encoder_forward.22} parent=0 // pred_region
    _
  $region13: #{encoder_forward.22} parent=0 // pred_fallthru
    _
  // Predicated region
  $region14: #{encoder_forward.22} parent=0 // pred_check
    _
  $region15: #{encoder_forward.22} parent=0 // pred_check_branch
    %19 = sbr.rel (0) target = $region17
  $region16: #{encoder_forward.22} parent=0 // pred_region
    _
  $region17: #{encoder_forward.22} parent=0 // pred_fallthru
    _
  // Predicated region
  $region18: #{encoder_forward.22} parent=0 // pred_check
    _
  $region19: #{encoder_forward.22} parent=0 // pred_check_branch
    %21 = sbr.rel (0) target = $region21
  $region20: #{encoder_forward.22} parent=0 // pred_region
    _
  $region21: #{encoder_forward.22} parent=0 // pred_fallthru
    _
  // Predicated region
  $region22: #{encoder_forward.22} parent=0 // pred_check
    _
  $region23: #{encoder_forward.22} parent=0 // pred_check_branch
    %23 = sbr.rel (0) target = $region25
  $region24: #{encoder_forward.22} parent=0 // pred_region
    _
  $region25: #{encoder_forward.22} parent=0 // pred_fallthru
    _
  // Predicated region
  $region26: #{encoder_forward.22} parent=0 // pred_check
    _
  $region27: #{encoder_forward.22} parent=0 // pred_check_branch
    %25 = sbr.rel (0) target = $region29
  $region28: #{encoder_forward.22} parent=0 // pred_region
    _
  $region29: #{encoder_forward.22} parent=0 // pred_fallthru
    _
  %v27 = vld [vmem:[%s0] sm:$0xff]
  %v28 = vld [vmem:[%s0 + $0x8] sm:$0xff]
  %v29 = vld [vmem:[%s1] sm:$0x1]
  %v30 = vld [vmem:[%s2] sm:$0x1]
  %vm31 = vcmask 261120
  %v32 = vsel %vm31, %v27, 0.0
  %33 = vadd.xlane.f32.xlu0 %v32
  %v34 = vpop.xlane.xlu0 %33
  %v35 = vsel %vm31, %v28, 0.0
  %36 = vadd.xlane.f32.xlu0 %v35
  %v37 = vpop.xlane.xlu0 %36
  %v38 = vrcp.pop 32.0
  %v39 = vmul.f32 32.0, %v38
  %v40 = vsub.f32 1.0, %v39
  %v41 = vmul.f32 %v38, %v40
  %v42 = vadd.f32 %v38, %v41
  %vm43 = vweird.f32 %v38
  %v44 = vsel %vm43, %v38, %v42
  %v45 = vmul.f32 %v34, %v44
  %v46 = vmul.f32 %v37, %v44
  %v47 = vsub.f32 %v27, %v45
  %v48 = vsub.f32 %v28, %v46
  %v49 = vmul.f32 %v47, %v47
  %v50 = vmul.f32 %v48, %v48
  %v51 = vsel %vm31, %v49, 0.0
  %52 = vadd.xlane.f32.xlu0 %v51
  %v53 = vpop.xlane.xlu0 %52
  %v54 = vsel %vm31, %v50, 0.0
  %55 = vadd.xlane.f32.xlu0 %v54
  %v56 = vpop.xlane.xlu0 %55
  %v57 = vmul.f32 %v53, %v44
  %v58 = vmul.f32 %v56, %v44
  %v59 = vadd.f32 %v57, 1e-05
  %v60 = vadd.f32 %v58, 1e-05
  %v61 = vrsqrt.pop %v59
  %v62 = vmul.f32 %v61, %v59
  %v63 = vmul.f32 %v62, %v61
  %v64 = vmul.f32 0.5, %v63
  %v65 = vsub.f32 1.5, %v64
  %v66 = vmul.f32 %v61, %v65
  %vm67 = vweird.f32 %v59
  %vm68 = vweird.f32 %v61
  %vm69 = vmor %vm67, %vm68
  %v70 = vsel %vm69, %v61, %v66
  %v71 = vrsqrt.pop %v60
  %v72 = vmul.f32 %v71, %v60
  %v73 = vmul.f32 %v72, %v71
  %v74 = vmul.f32 0.5, %v73
  %v75 = vsub.f32 1.5, %v74
  %v76 = vmul.f32 %v71, %v75
  %vm77 = vweird.f32 %v60
  %vm78 = vweird.f32 %v71
  %vm79 = vmor %vm77, %vm78
  %v80 = vsel %vm79, %v71, %v76
  %v81 = vmul.f32 %v47, %v70
  %v82 = vmul.f32 %v48, %v80
  %v84 = vperm.slane %v29, 0
  %v86 = vmul.f32 %v81, %v84
  %v87 = vmul.f32 %v82, %v84
  %v89 = vperm.slane %v30, 0
  %v91 = vadd.f32 %v86, %v89
  %v92 = vadd.f32 %v87, %v89
  %v93 = vld [vmem:[%s3] sm:$0xf]
  %v94 = vld [vmem:[%s3 + $0x4] sm:$0xf]
  %v95 = vld [vmem:[%s3 + $0x8] sm:$0xf]
  %v96 = vld [vmem:[%s3 + $0xc] sm:$0xf]
  %v97 = vpack.c.bf16 %v92, %v91
  %v98 = vld [vmem:[%s4] sm:$0x1]
  %v100 = vperm.slane %v98, 0
  %v106 = vunpack.c.l.b16 %v93
  %v107 = vunpack.c.l.b16 %v94
  %v108 = vunpack.c.l.b16 %v95
  %v109 = vunpack.c.l.b16 %v96
  %v110 = vpack.c.b16 %v107, %v106
  %v111 = vpack.c.b16 %v109, %v108
  %v115 = vsel %vm31, %v97, 0
  %117 = vmatpush.bf16.msra.mxu0 0
  %118 = vmatpush.bf16.msra.mxu0 0
  %119 = vmatpush.bf16.msra.mxu0 0
  %120 = vmatpush.bf16.msra.mxu0 0
  %121 = vmatpush.bf16.msra.mxu0 0
  %122 = vmatpush.bf16.msra.mxu0 0
  %123 = vmatpush.bf16.msra.mxu0 %v111
  %124 = vmatpush.bf16.msra.mxu0 %v110
  %125 = vmatmul.bf16.gmra.mxu0 %v115
  %v126 = vpop.f32.mrf.mxu0
  %v127 = vadd.f32 %v100, %v126
  %v128 = vpop.f32.mrf.mxu0
  %v129 = vadd.f32 %v100, %v128
  %130 = vdwg.mxu0
  %v131 = vmax.f32 %v127, 0.0
  %v132 = vmax.f32 %v129, 0.0
  %v133 = vld [vmem:[%s5] sm:$0xf]
  %v134 = vld [vmem:[%s5 + $0x4] sm:$0xf]
  %v135 = vld [vmem:[%s5 + $0x8] sm:$0xf]
  %v136 = vld [vmem:[%s5 + $0xc] sm:$0xf]
  %v137 = vld [vmem:[%s5 + $0x10] sm:$0xf]
  %v138 = vld [vmem:[%s5 + $0x14] sm:$0xf]
  %v139 = vld [vmem:[%s5 + $0x18] sm:$0xf]
  %v140 = vld [vmem:[%s5 + $0x1c] sm:$0xf]
  %v141 = vpack.c.bf16 %v132, %v131
  %v142 = vld [vmem:[%s6] sm:$0x1]
  %v144 = vperm.slane %v142, 0
  %v154 = vunpack.c.l.b16 %v133
  %v155 = vunpack.c.l.b16 %v134
  %v156 = vunpack.c.l.b16 %v135
  %v157 = vunpack.c.l.b16 %v136
  %v158 = vunpack.c.l.b16 %v137
  %v159 = vunpack.c.l.b16 %v138
  %v160 = vunpack.c.l.b16 %v139
  %v161 = vunpack.c.l.b16 %v140
  %v162 = vpack.c.b16 %v155, %v154
  %v163 = vpack.c.b16 %v157, %v156
  %v164 = vpack.c.b16 %v159, %v158
  %v165 = vpack.c.b16 %v161, %v160
  %vm170 = vcmask 523264
  %v172 = vsel %vm170, %v141, 0
  %174 = vmatpush.bf16.msra.mxu0 0
  %175 = vmatpush.bf16.msra.mxu0 0
  %176 = vmatpush.bf16.msra.mxu0 0
  %177 = vmatpush.bf16.msra.mxu0 0
  %178 = vmatpush.bf16.msra.mxu0 %v165
  %179 = vmatpush.bf16.msra.mxu0 %v164
  %180 = vmatpush.bf16.msra.mxu0 %v163
  %181 = vmatpush.bf16.msra.mxu0 %v162
  %182 = vmatmul.bf16.gmra.mxu0 %v172
  %v183 = vpop.f32.mrf.mxu0
  %v184 = vadd.f32 %v144, %v183
  %v185 = vpop.f32.mrf.mxu0
  %v186 = vadd.f32 %v144, %v185
  %187 = vdwg.mxu0
  %v188 = vadd.f32 %v27, %v184
  %v189 = vadd.f32 %v28, %v186
  %190 = vst.msk [vmem:[%s7] sm:$0xff] %vm31, %v188
  %191 = vst.msk [vmem:[%s7 + $0x8] sm:$0xff] %vm31, %v189
  // Predicated region
  $region30: #{encoder_forward.22} parent=0 // pred_check
    _
  $region31: #{encoder_forward.22} parent=0 // pred_check_branch
    %193 = sbr.rel (0) target = $region33
  $region32: #{encoder_forward.22} parent=0 // pred_region
    _
  $region33: #{encoder_forward.22} parent=0 // pred_fallthru
    _
  // Predicated region
  $region34: #{encoder_forward.22} parent=0 // pred_check
    _
  $region35: #{encoder_forward.22} parent=0 // pred_check_branch
    %195 = sbr.rel (0) target = $region37
  $region36: #{encoder_forward.22} parent=0 // pred_region
    _
  $region37: #{encoder_forward.22} parent=0 // pred_fallthru
    _

// kernel: encoder_forward.29
$region0: #{encoder_forward.29}
  #allocation0 [shape = 'u32[]', space=smem, size = 0x4, offset = 0x4, fixed_abs, tag = 'smem constant byte address 0x4 - core index']
  #allocation1 [shape = 'u32[72,128]{1,0:T(1,128)}', space=vmem, size = 0x9000, scoped, tag = 'internal scratch']
  %s0 = inlined_call_operand.vmem [shape: f32[16,32], index: 0, kind: input, shape index: {}]
  %s1 = inlined_call_operand.vmem [shape: f32[1,32], index: 1, kind: input, shape index: {}]
  %s2 = inlined_call_operand.vmem [shape: f32[1,32], index: 2, kind: input, shape index: {}]
  %s3 = inlined_call_operand.vmem [shape: bf16[32,64], index: 3, kind: input, shape index: {}]
  %s4 = inlined_call_operand.vmem [shape: f32[1,64], index: 4, kind: input, shape index: {}]
  %s5 = inlined_call_operand.vmem [shape: bf16[64,32], index: 5, kind: input, shape index: {}]
  %s6 = inlined_call_operand.vmem [shape: f32[1,32], index: 6, kind: input, shape index: {}]
  %s7 = inlined_call_operand.hbm [shape: f32[16,32], index: 7, kind: output, shape index: {}]
  %s8 = sld [smem:[#allocation0]]
  $region38: #{encoder_forward.29} parent=0
    _
  %s10 = ssub.s32 1, %s8
  %s11 = scalar_select 0, %s10, %s8
  $region1: #{encoder_forward.29} parent=0
    #allocation2 [shape = 'u8[8192]{0}', space=vmem, size = 0x2000, scoped, tag = 'output window, operand 0, single buffered']
    #allocation3 [shape = 's32[1]{0}', space=sflag, size = 0x4, scoped, tag = 'scoped memory for encoder_forward.29']
    %12 = vsyncpa [#allocation3], 0
    // Predicated region
    $region2: #{encoder_forward.29} parent=1 // pred_check
      _
    $region3: #{encoder_forward.29} parent=1 // pred_check_branch
      %14 = sbr.rel (0) target = $region5
    $region4: #{encoder_forward.29} parent=1 // pred_region
      _
    $region5: #{encoder_forward.29} parent=1 // pred_fallthru
      _
    // Predicated region
    $region6: #{encoder_forward.29} parent=1 // pred_check
      _
    $region7: #{encoder_forward.29} parent=1 // pred_check_branch
      %16 = sbr.rel (0) target = $region9
    $region8: #{encoder_forward.29} parent=1 // pred_region
      _
    $region9: #{encoder_forward.29} parent=1 // pred_fallthru
      _
    // Predicated region
    $region10: #{encoder_forward.29} parent=1 // pred_check
      _
    $region11: #{encoder_forward.29} parent=1 // pred_check_branch
      %18 = sbr.rel (0) target = $region13
    $region12: #{encoder_forward.29} parent=1 // pred_region
      _
    $region13: #{encoder_forward.29} parent=1 // pred_fallthru
      _
    // Predicated region
    $region14: #{encoder_forward.29} parent=1 // pred_check
      _
    $region15: #{encoder_forward.29} parent=1 // pred_check_branch
      %20 = sbr.rel (0) target = $region17
    $region16: #{encoder_forward.29} parent=1 // pred_region
      _
    $region17: #{encoder_forward.29} parent=1 // pred_fallthru
      _
    // Predicated region
    $region18: #{encoder_forward.29} parent=1 // pred_check
      _
    $region19: #{encoder_forward.29} parent=1 // pred_check_branch
      %22 = sbr.rel (0) target = $region21
    $region20: #{encoder_forward.29} parent=1 // pred_region
      _
    $region21: #{encoder_forward.29} parent=1 // pred_fallthru
      _
    // Predicated region
    $region22: #{encoder_forward.29} parent=1 // pred_check
      _
    $region23: #{encoder_forward.29} parent=1 // pred_check_branch
      %24 = sbr.rel (0) target = $region25
    $region24: #{encoder_forward.29} parent=1 // pred_region
      _
    $region25: #{encoder_forward.29} parent=1 // pred_fallthru
      _
    // Predicated region
    $region26: #{encoder_forward.29} parent=1 // pred_check
      _
    $region27: #{encoder_forward.29} parent=1 // pred_check_branch
      %26 = sbr.rel (0) target = $region29
    $region28: #{encoder_forward.29} parent=1 // pred_region
      _
    $region29: #{encoder_forward.29} parent=1 // pred_fallthru
      _
    %v28 = vld [vmem:[%s0] sm:$0xff]
    %v29 = vld [vmem:[%s0 + $0x8] sm:$0xff]
    %v30 = vld [vmem:[%s1] sm:$0x1]
    %v31 = vld [vmem:[%s2] sm:$0x1]
    %vm32 = vcmask 261120
    %v33 = vsel %vm32, %v28, 0.0
    %34 = vadd.xlane.f32.xlu0 %v33
    %v35 = vpop.xlane.xlu0 %34
    %v36 = vsel %vm32, %v29, 0.0
    %37 = vadd.xlane.f32.xlu0 %v36
    %v38 = vpop.xlane.xlu0 %37
    %v39 = vrcp.pop 32.0
    %v40 = vmul.f32 32.0, %v39
    %v41 = vsub.f32 1.0, %v40
    %v42 = vmul.f32 %v39, %v41
    %v43 = vadd.f32 %v39, %v42
    %vm44 = vweird.f32 %v39
    %v45 = vsel %vm44, %v39, %v43
    %v46 = vmul.f32 %v35, %v45
    %v47 = vmul.f32 %v38, %v45
    %v48 = vsub.f32 %v28, %v46
    %v49 = vsub.f32 %v29, %v47
    %v50 = vmul.f32 %v48, %v48
    %v51 = vmul.f32 %v49, %v49
    %v52 = vsel %vm32, %v50, 0.0
    %53 = vadd.xlane.f32.xlu0 %v52
    %v54 = vpop.xlane.xlu0 %53
    %v55 = vsel %vm32, %v51, 0.0
    %56 = vadd.xlane.f32.xlu0 %v55
    %v57 = vpop.xlane.xlu0 %56
    %v58 = vmul.f32 %v54, %v45
    %v59 = vmul.f32 %v57, %v45
    %v60 = vadd.f32 %v58, 1e-05
    %v61 = vadd.f32 %v59, 1e-05
    %v62 = vrsqrt.pop %v60
    %v63 = vmul.f32 %v62, %v60
    %v64 = vmul.f32 %v63, %v62
    %v65 = vmul.f32 0.5, %v64
    %v66 = vsub.f32 1.5, %v65
    %v67 = vmul.f32 %v62, %v66
    %vm68 = vweird.f32 %v60
    %vm69 = vweird.f32 %v62
    %vm70 = vmor %vm68, %vm69
    %v71 = vsel %vm70, %v62, %v67
    %v72 = vrsqrt.pop %v61
    %v73 = vmul.f32 %v72, %v61
    %v74 = vmul.f32 %v73, %v72
    %v75 = vmul.f32 0.5, %v74
    %v76 = vsub.f32 1.5, %v75
    %v77 = vmul.f32 %v72, %v76
    %vm78 = vweird.f32 %v61
    %vm79 = vweird.f32 %v72
    %vm80 = vmor %vm78, %vm79
    %v81 = vsel %vm80, %v72, %v77
    %v82 = vmul.f32 %v48, %v71
    %v83 = vmul.f32 %v49, %v81
    %v85 = vperm.slane %v30, 0
    %v87 = vmul.f32 %v82, %v85
    %v88 = vmul.f32 %v83, %v85
    %v90 = vperm.slane %v31, 0
    %v92 = vadd.f32 %v87, %v90
    %v93 = vadd.f32 %v88, %v90
    %v94 = vld [vmem:[%s3] sm:$0xf]
    %v95 = vld [vmem:[%s3 + $0x4] sm:$0xf]
    %v96 = vld [vmem:[%s3 + $0x8] sm:$0xf]
    %v97 = vld [vmem:[%s3 + $0xc] sm:$0xf]
    %v98 = vpack.c.bf16 %v93, %v92
    %v99 = vld [vmem:[%s4] sm:$0x1]
    %v101 = vperm.slane %v99, 0
    %v107 = vunpack.c.l.b16 %v94
    %v108 = vunpack.c.l.b16 %v95
    %v109 = vunpack.c.l.b16 %v96
    %v110 = vunpack.c.l.b16 %v97
    %v111 = vpack.c.b16 %v108, %v107
    %v112 = vpack.c.b16 %v110, %v109
    %v116 = vsel %vm32, %v98, 0
    %118 = vmatpush.bf16.msra.mxu0 0
    %119 = vmatpush.bf16.msra.mxu0 0
    %120 = vmatpush.bf16.msra.mxu0 0
    %121 = vmatpush.bf16.msra.mxu0 0
    %122 = vmatpush.bf16.msra.mxu0 0
    %123 = vmatpush.bf16.msra.mxu0 0
    %124 = vmatpush.bf16.msra.mxu0 %v112
    %125 = vmatpush.bf16.msra.mxu0 %v111
    %126 = vmatmul.bf16.gmra.mxu0 %v116
    %v127 = vpop.f32.mrf.mxu0
    %v128 = vadd.f32 %v101, %v127
    %v129 = vpop.f32.mrf.mxu0
    %v130 = vadd.f32 %v101, %v129
    %131 = vdwg.mxu0
    %v132 = vmax.f32 %v128, 0.0
    %v133 = vmax.f32 %v130, 0.0
    %v134 = vld [vmem:[%s5] sm:$0xf]
    %v135 = vld [vmem:[%s5 + $0x4] sm:$0xf]
    %v136 = vld [vmem:[%s5 + $0x8] sm:$0xf]
    %v137 = vld [vmem:[%s5 + $0xc] sm:$0xf]
    %v138 = vld [vmem:[%s5 + $0x10] sm:$0xf]
    %v139 = vld [vmem:[%s5 + $0x14] sm:$0xf]
    %v140 = vld [vmem:[%s5 + $0x18] sm:$0xf]
    %v141 = vld [vmem:[%s5 + $0x1c] sm:$0xf]
    %v142 = vpack.c.bf16 %v133, %v132
    %v143 = vld [vmem:[%s6] sm:$0x1]
    %v145 = vperm.slane %v143, 0
    %v155 = vunpack.c.l.b16 %v134
    %v156 = vunpack.c.l.b16 %v135
    %v157 = vunpack.c.l.b16 %v136
    %v158 = vunpack.c.l.b16 %v137
    %v159 = vunpack.c.l.b16 %v138
    %v160 = vunpack.c.l.b16 %v139
    %v161 = vunpack.c.l.b16 %v140
    %v162 = vunpack.c.l.b16 %v141
    %v163 = vpack.c.b16 %v156, %v155
    %v164 = vpack.c.b16 %v158, %v157
    %v165 = vpack.c.b16 %v160, %v159
    %v166 = vpack.c.b16 %v162, %v161
    %vm171 = vcmask 523264
    %v173 = vsel %vm171, %v142, 0
    %175 = vmatpush.bf16.msra.mxu0 0
    %176 = vmatpush.bf16.msra.mxu0 0
    %177 = vmatpush.bf16.msra.mxu0 0
    %178 = vmatpush.bf16.msra.mxu0 0
    %179 = vmatpush.bf16.msra.mxu0 %v166
    %180 = vmatpush.bf16.msra.mxu0 %v165
    %181 = vmatpush.bf16.msra.mxu0 %v164
    %182 = vmatpush.bf16.msra.mxu0 %v163
    %183 = vmatmul.bf16.gmra.mxu0 %v173
    %v184 = vpop.f32.mrf.mxu0
    %v185 = vadd.f32 %v145, %v184
    %v186 = vpop.f32.mrf.mxu0
    %v187 = vadd.f32 %v145, %v186
    %188 = vdwg.mxu0
    %v189 = vadd.f32 %v28, %v185
    %v190 = vadd.f32 %v29, %v187
    %191 = vst.msk [vmem:[#allocation2] sm:$0xff] %vm32, %v189
    %192 = vst.msk [vmem:[#allocation2 + $0x8] sm:$0xff] %vm32, %v190
    // Predicated region
    $region30: #{encoder_forward.29} parent=1 // pred_check
      _
    $region31: #{encoder_forward.29} parent=1 // pred_check_branch
      %194 = sbr.rel (0) target = $region33
    $region32: #{encoder_forward.29} parent=1 // pred_region
      %196 = vsyncadd [#allocation3], 0
      %s197 = sshll.u32 [#allocation2], 4
      %s198 = int_to_ptr.vmem [resolvable:$true] %s197
      %s199 = sshll.u32 %s7, 4
      %s200 = int_to_ptr.hbm [resolvable:$true] %s199
      %205 = dma.vmem_to_hbm [thread:$0]  %s198, 256, %s200, [#allocation3], 128, 128, 8
    $region33: #{encoder_forward.29} parent=1 // pred_fallthru
      _
    // Predicated region
    $region34: #{encoder_forward.29} parent=1 // pred_check
      _
    $region35: #{encoder_forward.29} parent=1 // pred_check_branch
      %207 = sbr.rel (0) target = $region37
    $region36: #{encoder_forward.29} parent=1 // pred_region
      %209 = dma.done [#allocation3], 256
    $region37: #{encoder_forward.29} parent=1 // pred_fallthru
      _
    %210 = vsyncpa [#allocation3], 1

// kernel: encoder_forward.21
$region0: #{encoder_forward.21}
  #allocation0 [shape = 'u32[]', space=smem, size = 0x4, offset = 0x4, fixed_abs, tag = 'smem constant byte address 0x4 - core index']
  #allocation1 [shape = 'u32[72,128]{1,0:T(1,128)}', space=vmem, size = 0x9000, scoped, tag = 'internal scratch']
  %s0 = inlined_call_operand.vmem [shape: f32[2,8,32], index: 0, kind: input, shape index: {}]
  %s1 = inlined_call_operand.vmem [shape: f32[1,32], index: 1, kind: input, shape index: {}]
  %s2 = inlined_call_operand.vmem [shape: f32[1,32], index: 2, kind: input, shape index: {}]
  %s3 = inlined_call_operand.vmem [shape: bf16[32,32], index: 3, kind: input, shape index: {}]
  %s4 = inlined_call_operand.vmem [shape: f32[1,32], index: 4, kind: input, shape index: {}]
  %s5 = inlined_call_operand.vmem [shape: bf16[32,32], index: 5, kind: input, shape index: {}]
  %s6 = inlined_call_operand.vmem [shape: f32[1,32], index: 6, kind: input, shape index: {}]
  %s7 = inlined_call_operand.vmem [shape: f32[7,32], index: 7, kind: input, shape index: {}]
  %s8 = inlined_call_operand.vmem [shape: f32[1,32], index: 8, kind: input, shape index: {}]
  %s9 = inlined_call_operand.vmem [shape: f32[1,32], index: 9, kind: input, shape index: {}]
  %s10 = inlined_call_operand.vmem [shape: f32[1,32], index: 10, kind: input, shape index: {}]
  %s11 = inlined_call_operand.vmem [shape: f32[1,32], index: 11, kind: input, shape index: {}]
  %s12 = inlined_call_operand.vmem [shape: f32[1,32], index: 12, kind: input, shape index: {}]
  %s13 = inlined_call_operand.vmem [shape: bf16[32,32], index: 13, kind: input, shape index: {}]
  %s14 = inlined_call_operand.vmem [shape: f32[1,32], index: 14, kind: input, shape index: {}]
  %s15 = inlined_call_operand.vmem [shape: f32[2,8,32], index: 15, kind: output, shape index: {}]
  %s16 = sld [smem:[#allocation0]]
  $region93: #{encoder_forward.21} parent=0
    _
  %s18 = ssub.s32 1, %s16
  %s19 = scalar_select 0, %s18, %s16
  loop: start=0, step=1, limit=4
  $region2: #{encoder_forward.21} parent=0 // loop_pre_header
    _
  $region3: #{encoder_forward.21} parent=0 // loop_header
    %s21 = sphi 0, %s25
    %p22 = scmp.ge.s32.totalorder %s21, 4
    %s31 = sphi 0, %s33
    %s34 = sphi 0, %s31
    %s35 = sphi 0, %s34
    %s51 = sphi 0, %s35
    %s55 = sphi 0, %s55
    %s57 = sphi 0, %s55
    %s58 = sphi 0, %s57
    %s72 = sphi 0, %s58
    %s76 = sphi 0, %s76
    %s78 = sphi 0, %s76
    %s79 = sphi 0, %s78
    %s93 = sphi 0, %s79
    %s97 = sphi 0, %s97
    %s99 = sphi 0, %s97
    %s100 = sphi 0, %s99
    %s114 = sphi 0, %s100
    %s118 = sphi 0, %s118
    %s120 = sphi 0, %s118
    %s121 = sphi 0, %s120
    %s135 = sphi 0, %s121
    %s139 = sphi 0, %s139
    %s141 = sphi 0, %s139
    %s142 = sphi 0, %s141
    %s156 = sphi 0, %s142
    %s160 = sphi 0, %s160
    %s162 = sphi 0, %s160
    %s163 = sphi 0, %s162
    %s177 = sphi 0, %s163
    %s181 = sphi 0, %s181
    %s183 = sphi 0, %s181
    %s184 = sphi 0, %s183
    %s198 = sphi 0, %s184
    %s202 = sphi 0, %s202
    %s204 = sphi 0, %s202
    %s205 = sphi 0, %s204
    %s219 = sphi 0, %s205
    %s223 = sphi 0, %s223
    %s225 = sphi 0, %s223
    %s226 = sphi 0, %s225
    %s240 = sphi 0, %s226
    %s244 = sphi 0, %s244
    %s246 = sphi 0, %s244
    %s247 = sphi 0, %s246
    %s261 = sphi 0, %s247
    %s265 = sphi 0, %s265
    %s267 = sphi 0, %s265
    %s268 = sphi 0, %s267
    %s282 = sphi 0, %s268
    %s286 = sphi 0, %s286
    %s288 = sphi 0, %s286
    %s289 = sphi 0, %s288
    %s303 = sphi 0, %s289
    %s307 = sphi 0, %s307
    %s309 = sphi 0, %s307
    %s310 = sphi 0, %s309
    %s324 = sphi 0, %s310
    %s328 = sphi 0, %s328
    %s330 = sphi 0, %s328
    %s331 = sphi 0, %s330
    %s345 = sphi 0, %s331
    %s351 = sphi 0, %s353
    %s354 = sphi 0, %s351
    %s355 = sphi 0, %s354
    %s371 = sphi 0, %s355
  $region4: #{encoder_forward.21} parent=0 // loop_header_branch
    %24 = sbr.rel (%p22) target = $region8
  $region5: #{encoder_forward.21} parent=0 // loop_body
    %s26 = ssub.s32 %s21, 1
    %s27 = ssub.s32 %s21, 2
    %s28 = sadd.s32 %s21, 1
    %s29 = ssub.s32 %s21, %s28
    %p30 = scmp.eq.s32.totalorder %s29, 0
    %s32 = sadd.s32 %s31, 1
    %s33 = scalar_select %p30, %s31, %s32
    %p36 = pneg %p30
    %p37 = scmp.eq.s32.totalorder %s21, 1
    %p38 = por %p36, %p37
    %p39 = scmp.ne.s32.totalorder %s31, %s34
    %p40 = scmp.eq.s32.totalorder %s21, 0
    %p41 = por %p39, %p40
    %p42 = scmp.ne.s32.totalorder %s31, %s34
    %p43 = scmp.eq.s32.totalorder %s26, 1
    %p44 = por %p42, %p43
    %p45 = scmp.ne.s32.totalorder %s34, %s35
    %p46 = scmp.eq.s32.totalorder %s26, 0
    %p47 = por %p45, %p46
    %p48 = scmp.ne.s32.totalorder %s34, %s35
    %p49 = scmp.eq.s32.totalorder %s27, 1
    %p50 = por %p48, %p49
    %p52 = scmp.ne.s32.totalorder %s35, %s51
    %p53 = scmp.eq.s32.totalorder %s27, 0
    %p54 = por %p52, %p53
    %s56 = sadd.s32 %s55, 1
    %p59 = scmp.eq.s32.totalorder %s21, 1
    %p60 = scmp.ne.s32.totalorder %s55, %s57
    %p61 = scmp.eq.s32.totalorder %s21, 0
    %p62 = por %p60, %p61
    %p63 = scmp.ne.s32.totalorder %s55, %s57
    %p64 = scmp.eq.s32.totalorder %s26, 1
    %p65 = por %p63, %p64
    %p66 = scmp.ne.s32.totalorder %s57, %s58
    %p67 = scmp.eq.s32.totalorder %s26, 0
    %p68 = por %p66, %p67
    %p69 = scmp.ne.s32.totalorder %s57, %s58
    %p70 = scmp.eq.s32.totalorder %s27, 1
    %p71 = por %p69, %p70
    %p73 = scmp.ne.s32.totalorder %s58, %s72
    %p74 = scmp.eq.s32.totalorder %s27, 0
    %p75 = por %p73, %p74
    %s77 = sadd.s32 %s76, 1
    %p80 = scmp.eq.s32.totalorder %s21, 1
    %p81 = scmp.ne.s32.totalorder %s76, %s78
    %p82 = scmp.eq.s32.totalorder %s21, 0
    %p83 = por %p81, %p82
    %p84 = scmp.ne.s32.totalorder %s76, %s78
    %p85 = scmp.eq.s32.totalorder %s26, 1
    %p86 = por %p84, %p85
    %p87 = scmp.ne.s32.totalorder %s78, %s79
    %p88 = scmp.eq.s32.totalorder %s26, 0
    %p89 = por %p87, %p88
    %p90 = scmp.ne.s32.totalorder %s78, %s79
    %p91 = scmp.eq.s32.totalorder %s27, 1
    %p92 = por %p90, %p91
    %p94 = scmp.ne.s32.totalorder %s79, %s93
    %p95 = scmp.eq.s32.totalorder %s27, 0
    %p96 = por %p94, %p95
    %s98 = sadd.s32 %s97, 1
    %p101 = scmp.eq.s32.totalorder %s21, 1
    %p102 = scmp.ne.s32.totalorder %s97, %s99
    %p103 = scmp.eq.s32.totalorder %s21, 0
    %p104 = por %p102, %p103
    %p105 = scmp.ne.s32.totalorder %s97, %s99
    %p106 = scmp.eq.s32.totalorder %s26, 1
    %p107 = por %p105, %p106
    %p108 = scmp.ne.s32.totalorder %s99, %s100
    %p109 = scmp.eq.s32.totalorder %s26, 0
    %p110 = por %p108, %p109
    %p111 = scmp.ne.s32.totalorder %s99, %s100
    %p112 = scmp.eq.s32.totalorder %s27, 1
    %p113 = por %p111, %p112
    %p115 = scmp.ne.s32.totalorder %s100, %s114
    %p116 = scmp.eq.s32.totalorder %s27, 0
    %p117 = por %p115, %p116
    %s119 = sadd.s32 %s118, 1
    %p122 = scmp.eq.s32.totalorder %s21, 1
    %p123 = scmp.ne.s32.totalorder %s118, %s120
    %p124 = scmp.eq.s32.totalorder %s21, 0
    %p125 = por %p123, %p124
    %p126 = scmp.ne.s32.totalorder %s118, %s120
    %p127 = scmp.eq.s32.totalorder %s26, 1
    %p128 = por %p126, %p127
    %p129 = scmp.ne.s32.totalorder %s120, %s121
    %p130 = scmp.eq.s32.totalorder %s26, 0
    %p131 = por %p129, %p130
    %p132 = scmp.ne.s32.totalorder %s120, %s121
    %p133 = scmp.eq.s32.totalorder %s27, 1
    %p134 = por %p132, %p133
    %p136 = scmp.ne.s32.totalorder %s121, %s135
    %p137 = scmp.eq.s32.totalorder %s27, 0
    %p138 = por %p136, %p137
    %s140 = sadd.s32 %s139, 1
    %p143 = scmp.eq.s32.totalorder %s21, 1
    %p144 = scmp.ne.s32.totalorder %s139, %s141
    %p145 = scmp.eq.s32.totalorder %s21, 0
    %p146 = por %p144, %p145
    %p147 = scmp.ne.s32.totalorder %s139, %s141
    %p148 = scmp.eq.s32.totalorder %s26, 1
    %p149 = por %p147, %p148
    %p150 = scmp.ne.s32.totalorder %s141, %s142
    %p151 = scmp.eq.s32.totalorder %s26, 0
    %p152 = por %p150, %p151
    %p153 = scmp.ne.s32.totalorder %s141, %s142
    %p154 = scmp.eq.s32.totalorder %s27, 1
    %p155 = por %p153, %p154
    %p157 = scmp.ne.s32.totalorder %s142, %s156
    %p158 = scmp.eq.s32.totalorder %s27, 0
    %p159 = por %p157, %p158
    %s161 = sadd.s32 %s160, 1
    %p164 = scmp.eq.s32.totalorder %s21, 1
    %p165 = scmp.ne.s32.totalorder %s160, %s162
    %p166 = scmp.eq.s32.totalorder %s21, 0
    %p167 = por %p165, %p166
    %p168 = scmp.ne.s32.totalorder %s160, %s162
    %p169 = scmp.eq.s32.totalorder %s26, 1
    %p170 = por %p168, %p169
    %p171 = scmp.ne.s32.totalorder %s162, %s163
    %p172 = scmp.eq.s32.totalorder %s26, 0
    %p173 = por %p171, %p172
    %p174 = scmp.ne.s32.totalorder %s162, %s163
    %p175 = scmp.eq.s32.totalorder %s27, 1
    %p176 = por %p174, %p175
    %p178 = scmp.ne.s32.totalorder %s163, %s177
    %p179 = scmp.eq.s32.totalorder %s27, 0
    %p180 = por %p178, %p179
    %s182 = sadd.s32 %s181, 1
    %p185 = scmp.eq.s32.totalorder %s21, 1
    %p186 = scmp.ne.s32.totalorder %s181, %s183
    %p187 = scmp.eq.s32.totalorder %s21, 0
    %p188 = por %p186, %p187
    %p189 = scmp.ne.s32.totalorder %s181, %s183
    %p190 = scmp.eq.s32.totalorder %s26, 1
    %p191 = por %p189, %p190
    %p192 = scmp.ne.s32.totalorder %s183, %s184
    %p193 = scmp.eq.s32.totalorder %s26, 0
    %p194 = por %p192, %p193
    %p195 = scmp.ne.s32.totalorder %s183, %s184
    %p196 = scmp.eq.s32.totalorder %s27, 1
    %p197 = por %p195, %p196
    %p199 = scmp.ne.s32.totalorder %s184, %s198
    %p200 = scmp.eq.s32.totalorder %s27, 0
    %p201 = por %p199, %p200
    %s203 = sadd.s32 %s202, 1
    %p206 = scmp.eq.s32.totalorder %s21, 1
    %p207 = scmp.ne.s32.totalorder %s202, %s204
    %p208 = scmp.eq.s32.totalorder %s21, 0
    %p209 = por %p207, %p208
    %p210 = scmp.ne.s32.totalorder %s202, %s204
    %p211 = scmp.eq.s32.totalorder %s26, 1
    %p212 = por %p210, %p211
    %p213 = scmp.ne.s32.totalorder %s204, %s205
    %p214 = scmp.eq.s32.totalorder %s26, 0
    %p215 = por %p213, %p214
    %p216 = scmp.ne.s32.totalorder %s204, %s205
    %p217 = scmp.eq.s32.totalorder %s27, 1
    %p218 = por %p216, %p217
    %p220 = scmp.ne.s32.totalorder %s205, %s219
    %p221 = scmp.eq.s32.totalorder %s27, 0
    %p222 = por %p220, %p221
    %s224 = sadd.s32 %s223, 1
    %p227 = scmp.eq.s32.totalorder %s21, 1
    %p228 = scmp.ne.s32.totalorder %s223, %s225
    %p229 = scmp.eq.s32.totalorder %s21, 0
    %p230 = por %p228, %p229
    %p231 = scmp.ne.s32.totalorder %s223, %s225
    %p232 = scmp.eq.s32.totalorder %s26, 1
    %p233 = por %p231, %p232
    %p234 = scmp.ne.s32.totalorder %s225, %s226
    %p235 = scmp.eq.s32.totalorder %s26, 0
    %p236 = por %p234, %p235
    %p237 = scmp.ne.s32.totalorder %s225, %s226
    %p238 = scmp.eq.s32.totalorder %s27, 1
    %p239 = por %p237, %p238
    %p241 = scmp.ne.s32.totalorder %s226, %s240
    %p242 = scmp.eq.s32.totalorder %s27, 0
    %p243 = por %p241, %p242
    %s245 = sadd.s32 %s244, 1
    %p248 = scmp.eq.s32.totalorder %s21, 1
    %p249 = scmp.ne.s32.totalorder %s244, %s246
    %p250 = scmp.eq.s32.totalorder %s21, 0
    %p251 = por %p249, %p250
    %p252 = scmp.ne.s32.totalorder %s244, %s246
    %p253 = scmp.eq.s32.totalorder %s26, 1
    %p254 = por %p252, %p253
    %p255 = scmp.ne.s32.totalorder %s246, %s247
    %p256 = scmp.eq.s32.totalorder %s26, 0
    %p257 = por %p255, %p256
    %p258 = scmp.ne.s32.totalorder %s246, %s247
    %p259 = scmp.eq.s32.totalorder %s27, 1
    %p260 = por %p258, %p259
    %p262 = scmp.ne.s32.totalorder %s247, %s261
    %p263 = scmp.eq.s32.totalorder %s27, 0
    %p264 = por %p262, %p263
    %s266 = sadd.s32 %s265, 1
    %p269 = scmp.eq.s32.totalorder %s21, 1
    %p270 = scmp.ne.s32.totalorder %s265, %s267
    %p271 = scmp.eq.s32.totalorder %s21, 0
    %p272 = por %p270, %p271
    %p273 = scmp.ne.s32.totalorder %s265, %s267
    %p274 = scmp.eq.s32.totalorder %s26, 1
    %p275 = por %p273, %p274
    %p276 = scmp.ne.s32.totalorder %s267, %s268
    %p277 = scmp.eq.s32.totalorder %s26, 0
    %p278 = por %p276, %p277
    %p279 = scmp.ne.s32.totalorder %s267, %s268
    %p280 = scmp.eq.s32.totalorder %s27, 1
    %p281 = por %p279, %p280
    %p283 = scmp.ne.s32.totalorder %s268, %s282
    %p284 = scmp.eq.s32.totalorder %s27, 0
    %p285 = por %p283, %p284
    %s287 = sadd.s32 %s286, 1
    %p290 = scmp.eq.s32.totalorder %s21, 1
    %p291 = scmp.ne.s32.totalorder %s286, %s288
    %p292 = scmp.eq.s32.totalorder %s21, 0
    %p293 = por %p291, %p292
    %p294 = scmp.ne.s32.totalorder %s286, %s288
    %p295 = scmp.eq.s32.totalorder %s26, 1
    %p296 = por %p294, %p295
    %p297 = scmp.ne.s32.totalorder %s288, %s289
    %p298 = scmp.eq.s32.totalorder %s26, 0
    %p299 = por %p297, %p298
    %p300 = scmp.ne.s32.totalorder %s288, %s289
    %p301 = scmp.eq.s32.totalorder %s27, 1
    %p302 = por %p300, %p301
    %p304 = scmp.ne.s32.totalorder %s289, %s303
    %p305 = scmp.eq.s32.totalorder %s27, 0
    %p306 = por %p304, %p305
    %s308 = sadd.s32 %s307, 1
    %p311 = scmp.eq.s32.totalorder %s21, 1
    %p312 = scmp.ne.s32.totalorder %s307, %s309
    %p313 = scmp.eq.s32.totalorder %s21, 0
    %p314 = por %p312, %p313
    %p315 = scmp.ne.s32.totalorder %s307, %s309
    %p316 = scmp.eq.s32.totalorder %s26, 1
    %p317 = por %p315, %p316
    %p318 = scmp.ne.s32.totalorder %s309, %s310
    %p319 = scmp.eq.s32.totalorder %s26, 0
    %p320 = por %p318, %p319
    %p321 = scmp.ne.s32.totalorder %s309, %s310
    %p322 = scmp.eq.s32.totalorder %s27, 1
    %p323 = por %p321, %p322
    %p325 = scmp.ne.s32.totalorder %s310, %s324
    %p326 = scmp.eq.s32.totalorder %s27, 0
    %p327 = por %p325, %p326
    %s329 = sadd.s32 %s328, 1
    %p332 = scmp.eq.s32.totalorder %s21, 1
    %p333 = scmp.ne.s32.totalorder %s328, %s330
    %p334 = scmp.eq.s32.totalorder %s21, 0
    %p335 = por %p333, %p334
    %p336 = scmp.ne.s32.totalorder %s328, %s330
    %p337 = scmp.eq.s32.totalorder %s26, 1
    %p338 = por %p336, %p337
    %p339 = scmp.ne.s32.totalorder %s330, %s331
    %p340 = scmp.eq.s32.totalorder %s26, 0
    %p341 = por %p339, %p340
    %p342 = scmp.ne.s32.totalorder %s330, %s331
    %p343 = scmp.eq.s32.totalorder %s27, 1
    %p344 = por %p342, %p343
    %p346 = scmp.ne.s32.totalorder %s331, %s345
    %p347 = scmp.eq.s32.totalorder %s27, 0
    %p348 = por %p346, %p347
    %s349 = ssub.s32 %s21, %s28
    %p350 = scmp.eq.s32.totalorder %s349, 0
    %s352 = sadd.s32 %s351, 1
    %s353 = scalar_select %p350, %s351, %s352
    %p356 = pneg %p350
    %p357 = scmp.eq.s32.totalorder %s21, 1
    %p358 = por %p356, %p357
    %p359 = scmp.ne.s32.totalorder %s351, %s354
    %p360 = scmp.eq.s32.totalorder %s21, 0
    %p361 = por %p359, %p360
    %p362 = scmp.ne.s32.totalorder %s351, %s354
    %p363 = scmp.eq.s32.totalorder %s26, 1
    %p364 = por %p362, %p363
    %p365 = scmp.ne.s32.totalorder %s354, %s355
    %p366 = scmp.eq.s32.totalorder %s26, 0
    %p367 = por %p365, %p366
    %p368 = scmp.ne.s32.totalorder %s354, %s355
    %p369 = scmp.eq.s32.totalorder %s27, 1
    %p370 = por %p368, %p369
    %p372 = scmp.ne.s32.totalorder %s355, %s371
    %p373 = scmp.eq.s32.totalorder %s27, 0
    %p374 = por %p372, %p373
    %p375 = scmp.le.s32.totalorder 1, %s21
    %p376 = scmp.lt.s32.totalorder %s21, 3
    %p377 = pnand %p375, %p376
    %p378 = pneg %p377
    // Predicated region
    $region9: #{encoder_forward.21} parent=5 // pred_check
      _
    $region10: #{encoder_forward.21} parent=5 // pred_check_branch
      %380 = sbr.rel (%p377) target = $region12
    $region11: #{encoder_forward.21} parent=5 // pred_region
      %s381 = ssub.s32 %s21, 1
      // Predicated region
      $region13: #{encoder_forward.21} parent=11 // pred_check
        %p382 = pneg %p68
      $region14: #{encoder_forward.21} parent=11 // pred_check_branch
        %384 = sbr.rel (%p382) target = $region16
      $region15: #{encoder_forward.21} parent=11 // pred_region
        _
      $region16: #{encoder_forward.21} parent=11 // pred_fallthru
        _
      // Predicated region
      $region17: #{encoder_forward.21} parent=11 // pred_check
        %p385 = pneg %p89
      $region18: #{encoder_forward.21} parent=11 // pred_check_branch
        %387 = sbr.rel (%p385) target = $region20
      $region19: #{encoder_forward.21} parent=11 // pred_region
        _
      $region20: #{encoder_forward.21} parent=11 // pred_fallthru
        _
      // Predicated region
      $region21: #{encoder_forward.21} parent=11 // pred_check
        %p388 = pneg %p110
      $region22: #{encoder_forward.21} parent=11 // pred_check_branch
        %390 = sbr.rel (%p388) target = $region24
      $region23: #{encoder_forward.21} parent=11 // pred_region
        _
      $region24: #{encoder_forward.21} parent=11 // pred_fallthru
        _
      // Predicated region
      $region25: #{encoder_forward.21} parent=11 // pred_check
        %p391 = pneg %p131
      $region26: #{encoder_forward.21} parent=11 // pred_check_branch
        %393 = sbr.rel (%p391) target = $region28
      $region27: #{encoder_forward.21} parent=11 // pred_region
        _
      $region28: #{encoder_forward.21} parent=11 // pred_fallthru
        _
      // Predicated region
      $region29: #{encoder_forward.21} parent=11 // pred_check
        %p394 = pneg %p152
      $region30: #{encoder_forward.21} parent=11 // pred_check_branch
        %396 = sbr.rel (%p394) target = $region32
      $region31: #{encoder_forward.21} parent=11 // pred_region
        _
      $region32: #{encoder_forward.21} parent=11 // pred_fallthru
        _
      // Predicated region
      $region33: #{encoder_forward.21} parent=11 // pred_check
        %p397 = pneg %p173
      $region34: #{encoder_forward.21} parent=11 // pred_check_branch
        %399 = sbr.rel (%p397) target = $region36
      $region35: #{encoder_forward.21} parent=11 // pred_region
        _
      $region36: #{encoder_forward.21} parent=11 // pred_fallthru
        _
      // Predicated region
      $region37: #{encoder_forward.21} parent=11 // pred_check
        %p400 = pneg %p194
      $region38: #{encoder_forward.21} parent=11 // pred_check_branch
        %402 = sbr.rel (%p400) target = $region40
      $region39: #{encoder_forward.21} parent=11 // pred_region
        _
      $region40: #{encoder_forward.21} parent=11 // pred_fallthru
        _
      // Predicated region
      $region41: #{encoder_forward.21} parent=11 // pred_check
        %p403 = pneg %p215
      $region42: #{encoder_forward.21} parent=11 // pred_check_branch
        %405 = sbr.rel (%p403) target = $region44
      $region43: #{encoder_forward.21} parent=11 // pred_region
        _
      $region44: #{encoder_forward.21} parent=11 // pred_fallthru
        _
      // Predicated region
      $region45: #{encoder_forward.21} parent=11 // pred_check
        %p406 = pneg %p236
      $region46: #{encoder_forward.21} parent=11 // pred_check_branch
        %408 = sbr.rel (%p406) target = $region48
      $region47: #{encoder_forward.21} parent=11 // pred_region
        _
      $region48: #{encoder_forward.21} parent=11 // pred_fallthru
        _
      // Predicated region
      $region49: #{encoder_forward.21} parent=11 // pred_check
        %p409 = pneg %p257
      $region50: #{encoder_forward.21} parent=11 // pred_check_branch
        %411 = sbr.rel (%p409) target = $region52
      $region51: #{encoder_forward.21} parent=11 // pred_region
        _
      $region52: #{encoder_forward.21} parent=11 // pred_fallthru
        _
      // Predicated region
      $region53: #{encoder_forward.21} parent=11 // pred_check
        %p412 = pneg %p278
      $region54: #{encoder_forward.21} parent=11 // pred_check_branch
        %414 = sbr.rel (%p412) target = $region56
      $region55: #{encoder_forward.21} parent=11 // pred_region
        _
      $region56: #{encoder_forward.21} parent=11 // pred_fallthru
        _
      // Predicated region
      $region57: #{encoder_forward.21} parent=11 // pred_check
        %p415 = pneg %p299
      $region58: #{encoder_forward.21} parent=11 // pred_check_branch
        %417 = sbr.rel (%p415) target = $region60
      $region59: #{encoder_forward.21} parent=11 // pred_region
        _
      $region60: #{encoder_forward.21} parent=11 // pred_fallthru
        _
      // Predicated region
      $region61: #{encoder_forward.21} parent=11 // pred_check
        %p418 = pneg %p320
      $region62: #{encoder_forward.21} parent=11 // pred_check_branch
        %420 = sbr.rel (%p418) target = $region64
      $region63: #{encoder_forward.21} parent=11 // pred_region
        _
      $region64: #{encoder_forward.21} parent=11 // pred_fallthru
        _
      // Predicated region
      $region65: #{encoder_forward.21} parent=11 // pred_check
        %p421 = pneg %p341
      $region66: #{encoder_forward.21} parent=11 // pred_check_branch
        %423 = sbr.rel (%p421) target = $region68
      $region67: #{encoder_forward.21} parent=11 // pred_region
        _
      $region68: #{encoder_forward.21} parent=11 // pred_fallthru
        _
    $region12: #{encoder_forward.21} parent=5 // pred_fallthru
      _
    %p424 = scmp.lt.s32.totalorder %s21, 2
    // Predicated region
    $region69: #{encoder_forward.21} parent=5 // pred_check
      %p425 = pneg %p424
    $region70: #{encoder_forward.21} parent=5 // pred_check_branch
      %427 = sbr.rel (%p425) target = $region72
    $region71: #{encoder_forward.21} parent=5 // pred_region
      // Predicated region
      $region73: #{encoder_forward.21} parent=71 // pred_check
        %p428 = pneg %p41
      $region74: #{encoder_forward.21} parent=71 // pred_check_branch
        %430 = sbr.rel (%p428) target = $region76
      $region75: #{encoder_forward.21} parent=71 // pred_region
        %p431 = scmp.lt.s32.totalorder %s21, 1
        %s432 = scalar_select %p431, %s21, 1
        %s433 = smul.addr %s432, 8
        %s434 = scalar_lea.vmem %s0, %s433
      $region76: #{encoder_forward.21} parent=71 // pred_fallthru
        _
    $region72: #{encoder_forward.21} parent=5 // pred_fallthru
      _
    %p435 = scmp.le.s32.totalorder 1, %s21
    %p436 = scmp.lt.s32.totalorder %s21, 3
    %p437 = pnand %p435, %p436
    %p438 = pneg %p437
    // Predicated region
    $region77: #{encoder_forward.21} parent=5 // pred_check
      _
    $region78: #{encoder_forward.21} parent=5 // pred_check_branch
      %440 = sbr.rel (%p437) target = $region80
    $region79: #{encoder_forward.21} parent=5 // pred_region
      %s441 = ssub.s32 %s21, 1
      %p442 = scmp.lt.s32.totalorder %s26, 1
      %s443 = scalar_select %p442, %s26, 1
      %s444 = smul.addr %s443, 8
      %s445 = scalar_lea.vmem %s0, %s444
      %p446 = pneg %p47
      %p447 = pneg %p44
      %p448 = pneg %p68
      %p449 = pneg %p65
      %p450 = pneg %p89
      %p451 = pneg %p86
      %p452 = pneg %p110
      %p453 = pneg %p107
      %p454 = pneg %p131
      %p455 = pneg %p128
      %p456 = pneg %p152
      %p457 = pneg %p149
      %p458 = pneg %p173
      %p459 = pneg %p170
      %p460 = pneg %p194
      %p461 = pneg %p191
      %p462 = pneg %p215
      %p463 = pneg %p212
      %p464 = pneg %p236
      %p465 = pneg %p233
      %p466 = pneg %p257
      %p467 = pneg %p254
      %p468 = pneg %p278
      %p469 = pneg %p275
      %p470 = pneg %p299
      %p471 = pneg %p296
      %p472 = pneg %p320
      %p473 = pneg %p317
      %p474 = pneg %p341
      %p475 = pneg %p338
      %p476 = pneg %p367
      %p477 = pneg %p364
      %p478 = scmp.lt.s32.totalorder %s26, 1
      %s479 = scalar_select %p478, %s26, 1
      %s480 = smul.addr %s479, 8
      %s481 = scalar_lea.vmem %s15, %s480
      %p482 = scmp.lt.s32.totalorder %s26, 1
      %s483 = scalar_select %p482, %s26, 1
      %s484 = smul.addr %s483, 8
      %s485 = scalar_lea.vmem %s0, %s484
      %p486 = scmp.lt.s32.totalorder %s26, 1
      %s487 = scalar_select %p486, %s26, 1
      %s488 = smul.addr %s487, 8
      %s489 = scalar_lea.vmem %s15, %s488
      %v491 = vld [vmem:[%s485] sm:$0xff]
      %v492 = vld [vmem:[%s1] sm:$0x1]
      %v493 = vld [vmem:[%s2] sm:$0x1]
      %vm494 = vcmask 261120
      %v495 = vsel %vm494, %v491, 0.0
      %496 = vadd.xlane.f32.xlu0 %v495
      %v497 = vpop.xlane.xlu0 %496
      %v498 = vrcp.pop 32.0
      %v499 = vmul.f32 32.0, %v498
      %v500 = vsub.f32 1.0, %v499
      %v501 = vmul.f32 %v498, %v500
      %v502 = vadd.f32 %v498, %v501
      %vm503 = vweird.f32 %v498
      %v504 = vsel %vm503, %v498, %v502
      %v505 = vmul.f32 %v497, %v504
      %v506 = vsub.f32 %v491, %v505
      %v507 = vmul.f32 %v506, %v506
      %v508 = vsel %vm494, %v507, 0.0
      %509 = vadd.xlane.f32.xlu0 %v508
      %v510 = vpop.xlane.xlu0 %509
      %v511 = vmul.f32 %v510, %v504
      %v512 = vadd.f32 %v511, 1e-05
      %v513 = vrsqrt.pop %v512
      %v514 = vmul.f32 %v513, %v512
      %v515 = vmul.f32 %v514, %v513
      %v516 = vmul.f32 0.5, %v515
      %v517 = vsub.f32 1.5, %v516
      %v518 = vmul.f32 %v513, %v517
      %vm519 = vweird.f32 %v512
      %vm520 = vweird.f32 %v513
      %vm521 = vmor %vm519, %vm520
      %v522 = vsel %vm521, %v513, %v518
      %v523 = vmul.f32 %v506, %v522
      %v525 = vperm.slane %v492, 0
      %v527 = vmul.f32 %v523, %v525
      %v529 = vperm.slane %v493, 0
      %v531 = vadd.f32 %v527, %v529
      %v532 = vld [vmem:[%s3] sm:$0xf]
      %v533 = vld [vmem:[%s3 + $0x4] sm:$0xf]
      %v534 = vld [vmem:[%s3 + $0x8] sm:$0xf]
      %v535 = vld [vmem:[%s3 + $0xc] sm:$0xf]
      %v536 = vpack.c.bf16 %v531, %v531
      %v537 = vld [vmem:[%s4] sm:$0x1]
      %v539 = vperm.slane %v537, 0
      %v545 = vunpack.c.l.b16 %v532
      %v546 = vunpack.c.l.b16 %v533
      %v547 = vunpack.c.l.b16 %v534
      %v548 = vunpack.c.l.b16 %v535
      %v549 = vpack.c.b16 %v546, %v545
      %v550 = vpack.c.b16 %v548, %v547
      %v554 = vsel %vm494, %v536, 0
      %556 = vmatpush.bf16.msra.mxu0 0
      %557 = vmatpush.bf16.msra.mxu0 0
      %558 = vmatpush.bf16.msra.mxu0 0
      %559 = vmatpush.bf16.msra.mxu0 0
      %560 = vmatpush.bf16.msra.mxu0 0
      %561 = vmatpush.bf16.msra.mxu0 0
      %562 = vmatpush.bf16.msra.mxu0 %v550
      %563 = vmatpush.bf16.msra.mxu0 %v549
      %564 = vmatmul.bf16.gmra.mxu0 %v554
      %v565 = vpop.f32.mrf.mxu0
      %v566 = vadd.f32 %v539, %v565
      %v567 = vpop.f32.mrf.mxu0
      %568 = vdwg.mxu0
      %v569 = vld [vmem:[%s5] sm:$0xf]
      %v570 = vld [vmem:[%s5 + $0x4] sm:$0xf]
      %v571 = vld [vmem:[%s5 + $0x8] sm:$0xf]
      %v572 = vld [vmem:[%s5 + $0xc] sm:$0xf]
      %v573 = vld [vmem:[%s6] sm:$0x1]
      %v575 = vperm.slane %v573, 0
      %v581 = vunpack.c.l.b16 %v569
      %v582 = vunpack.c.l.b16 %v570
      %v583 = vunpack.c.l.b16 %v571
      %v584 = vunpack.c.l.b16 %v572
      %v585 = vpack.c.b16 %v582, %v581
      %v586 = vpack.c.b16 %v584, %v583
      %589 = vmatpush.bf16.msra.mxu0 0
      %590 = vmatpush.bf16.msra.mxu0 0
      %591 = vmatpush.bf16.msra.mxu0 0
      %592 = vmatpush.bf16.msra.mxu0 0
      %593 = vmatpush.bf16.msra.mxu0 0
      %594 = vmatpush.bf16.msra.mxu0 0
      %595 = vmatpush.bf16.msra.mxu0 %v586
      %596 = vmatpush.bf16.msra.mxu0 %v585
      %597 = vmatmul.bf16.gmra.mxu0 %v554
      %v598 = vpop.f32.mrf.mxu0
      %v599 = vadd.f32 %v575, %v598
      %v600 = vpop.f32.mrf.mxu0
      %601 = vdwg.mxu0
      %v602 = vxor.u32 %v599, 2147483648
      %v603 = vmul.f32 %v602, 1.442695
      %v604 = vpow.pop %v603
      %v605 = vadd.f32 %v604, 1.0
      %v606 = vrcp.pop %v605
      %v607 = vmul.f32 %v605, %v606
      %v608 = vsub.f32 1.0, %v607
      %v609 = vmul.f32 %v606, %v608
      %v610 = vadd.f32 %v606, %v609
      %vm611 = vweird.f32 %v605
      %vm612 = vweird.f32 %v606
      %vm613 = vmor %vm611, %vm612
      %v614 = vsel %vm613, %v606, %v610
      %v615 = vand.u32 2147483647, %v605
      %vm616 = vcmp.eq.f32.partialorder %v615, 8.507059e+37
      %v617 = vand.u32 %v605, 2147483648
      %v618 = vor.u32 1.1754944e-38, %v617
      %v619 = vsel %vm616, %v618, %v614
      %v620 = vmul.f32 1.0, %v619
      %v621 = vmul.f32 %v566, %v620
      %v622 = vlaneseq
      %v623 = vshrl.u32 %v622, 7
      %v624 = vld [vmem:[%s7] sm:$0x7f]
      %v625 = vld [vmem:[%s8] sm:$0x1]
      %v627 = vperm.slane %v625, 0
      %v629 = vadd.f32 %v627, 0.0
      %v631 = vrot.slane %v621, 5
      %vm633 = vcmask 1042432
      %v634 = vsel %vm633, %v631, %v631
      %v635 = vadd.s32 %v623, 4294967293
      %vm636 = vcmp.ge.s32.totalorder %v635, 0
      %vm637 = vcmp.lt.s32.totalorder %v635, 8
      %vm638 = vmand %vm636, %vm637
      %v639 = vsel %vm638, %v634, 0.0
      %v640 = vperm.slane %v624, 0
      %v641 = vmul.f32 %v639, %v640
      %v642 = vadd.f32 %v629, %v641
      %v643 = vrot.slane %v621, 6
      %vm645 = vcmask 1041408
      %v646 = vsel %vm645, %v643, %v643
      %v647 = vadd.s32 %v623, 4294967294
      %vm648 = vcmp.ge.s32.totalorder %v647, 0
      %vm649 = vcmp.lt.s32.totalorder %v647, 8
      %vm650 = vmand %vm648, %vm649
      %v651 = vsel %vm650, %v646, 0.0
      %v652 = vperm.slane %v624, 1
      %v653 = vmul.f32 %v651, %v652
      %v654 = vadd.f32 %v642, %v653
      %v655 = vrot.slane %v621, 7
      %vm657 = vcmask 1040384
      %v658 = vsel %vm657, %v655, %v655
      %v659 = vadd.s32 %v623, 4294967295
      %vm660 = vcmp.ge.s32.totalorder %v659, 0
      %vm661 = vcmp.lt.s32.totalorder %v659, 8
      %vm662 = vmand %vm660, %vm661
      %v663 = vsel %vm662, %v658, 0.0
      %v664 = vperm.slane %v624, 2
      %v665 = vmul.f32 %v663, %v664
      %v666 = vadd.f32 %v654, %v665
      %vm667 = vcmp.ge.s32.totalorder %v623, 0
      %vm668 = vcmp.lt.s32.totalorder %v623, 8
      %vm669 = vmand %vm667, %vm668
      %v670 = vsel %vm669, %v621, 0.0
      %v671 = vperm.slane %v624, 3
      %v672 = vmul.f32 %v670, %v671
      %v673 = vadd.f32 %v666, %v672
      %v674 = vrot.slane %v621, 1
      %vm676 = vcmask 1046528
      %v677 = vsel %vm676, %v674, %v674
      %v678 = vadd.s32 %v623, 1
      %vm679 = vcmp.ge.s32.totalorder %v678, 0
      %vm680 = vcmp.lt.s32.totalorder %v678, 8
      %vm681 = vmand %vm679, %vm680
      %v682 = vsel %vm681, %v677, 0.0
      %v683 = vperm.slane %v624, 4
      %v684 = vmul.f32 %v682, %v683
      %v685 = vadd.f32 %v673, %v684
      %v686 = vrot.slane %v621, 2
      %vm688 = vcmask 1045504
      %v689 = vsel %vm688, %v686, %v686
      %v690 = vadd.s32 %v623, 2
      %vm691 = vcmp.ge.s32.totalorder %v690, 0
      %vm692 = vcmp.lt.s32.totalorder %v690, 8
      %vm693 = vmand %vm691, %vm692
      %v694 = vsel %vm693, %v689, 0.0
      %v695 = vperm.slane %v624, 5
      %v696 = vmul.f32 %v694, %v695
      %v697 = vadd.f32 %v685, %v696
      %v698 = vrot.slane %v621, 3
      %vm700 = vcmask 1044480
      %v701 = vsel %vm700, %v698, %v698
      %v702 = vadd.s32 %v623, 3
      %vm703 = vcmp.ge.s32.totalorder %v702, 0
      %vm704 = vcmp.lt.s32.totalorder %v702, 8
      %vm705 = vmand %vm703, %vm704
      %v706 = vsel %vm705, %v701, 0.0
      %v707 = vperm.slane %v624, 6
      %v708 = vmul.f32 %v706, %v707
      %v709 = vadd.f32 %v697, %v708
      %v710 = vld [vmem:[%s11] sm:$0x1]
      %v712 = vperm.slane %v710, 0
      %v714 = vsub.f32 %v709, %v712
      %v715 = vld [vmem:[%s12] sm:$0x1]
      %v716 = vadd.f32 %v715, 1e-05
      %v717 = vrsqrt.pop %v716
      %v718 = vmul.f32 %v717, %v716
      %v719 = vmul.f32 %v718, %v717
      %v720 = vmul.f32 0.5, %v719
      %v721 = vsub.f32 1.5, %v720
      %v722 = vmul.f32 %v717, %v721
      %vm723 = vweird.f32 %v716
      %vm724 = vweird.f32 %v717
      %vm725 = vmor %vm723, %vm724
      %v726 = vsel %vm725, %v717, %v722
      %v728 = vperm.slane %v726, 0
      %v730 = vmul.f32 %v714, %v728
      %v731 = vld [vmem:[%s9] sm:$0x1]
      %v733 = vperm.slane %v731, 0
      %v735 = vmul.f32 %v730, %v733
      %v736 = vld [vmem:[%s10] sm:$0x1]
      %v738 = vperm.slane %v736, 0
      %v740 = vadd.f32 %v735, %v738
      %v741 = vmax.f32 %v740, 0.0
      %v742 = vld [vmem:[%s13] sm:$0xf]
      %v743 = vld [vmem:[%s13 + $0x4] sm:$0xf]
      %v744 = vld [vmem:[%s13 + $0x8] sm:$0xf]
      %v745 = vld [vmem:[%s13 + $0xc] sm:$0xf]
      %v746 = vpack.c.bf16 %v741, %v741
      %v751 = vunpack.c.l.b16 %v742
      %v752 = vunpack.c.l.b16 %v743
      %v753 = vunpack.c.l.b16 %v744
      %v754 = vunpack.c.l.b16 %v745
      %v755 = vpack.c.b16 %v752, %v751
      %v756 = vpack.c.b16 %v754, %v753
      %v760 = vsel %vm494, %v746, 0
      %762 = vmatpush.bf16.msra.mxu0 0
      %763 = vmatpush.bf16.msra.mxu0 0
      %764 = vmatpush.bf16.msra.mxu0 0
      %765 = vmatpush.bf16.msra.mxu0 0
      %766 = vmatpush.bf16.msra.mxu0 0
      %767 = vmatpush.bf16.msra.mxu0 0
      %768 = vmatpush.bf16.msra.mxu0 %v756
      %769 = vmatpush.bf16.msra.mxu0 %v755
      %770 = vmatmul.bf16.gmra.mxu0 %v760
      %v771 = vpop.f32.mrf.mxu0
      %v772 = vadd.f32 0.0, %v771
      %v773 = vpop.f32.mrf.mxu0
      %774 = vdwg.mxu0
      %v775 = vadd.f32 %v491, %v772
      %v776 = vld [vmem:[%s14] sm:$0x1]
      %v778 = vperm.slane %v776, 0
      %v780 = vadd.f32 %v775, %v778
      %781 = vst.msk [vmem:[%s489] sm:$0xff] %vm494, %v780
      %p782 = scmp.lt.s32.totalorder %s26, 1
      %s783 = scalar_select %p782, %s26, 1
      %s784 = smul.addr %s783, 8
      %s785 = scalar_lea.vmem %s15, %s784
      // Predicated region
      $region81: #{encoder_forward.21} parent=79 // pred_check
        %p786 = pneg %p364
      $region82: #{encoder_forward.21} parent=79 // pred_check_branch
        %788 = sbr.rel (%p786) target = $region84
      $region83: #{encoder_forward.21} parent=79 // pred_region
        _
      $region84: #{encoder_forward.21} parent=79 // pred_fallthru
        _
    $region80: #{encoder_forward.21} parent=5 // pred_fallthru
      _
    %p789 = scmp.le.s32.totalorder 2, %s21
    // Predicated region
    $region85: #{encoder_forward.21} parent=5 // pred_check
      %p790 = pneg %p789
    $region86: #{encoder_forward.21} parent=5 // pred_check_branch
      %792 = sbr.rel (%p790) target = $region88
    $region87: #{encoder_forward.21} parent=5 // pred_region
      %s793 = ssub.s32 %s21, 2
      // Predicated region
      $region89: #{encoder_forward.21} parent=87 // pred_check
        %p794 = pneg %p370
      $region90: #{encoder_forward.21} parent=87 // pred_check_branch
        %796 = sbr.rel (%p794) target = $region92
      $region91: #{encoder_forward.21} parent=87 // pred_region
        %p797 = scmp.lt.s32.totalorder %s27, 1
        %s798 = scalar_select %p797, %s27, 1
        %s799 = smul.addr %s798, 8
        %s800 = scalar_lea.vmem %s15, %s799
      $region92: #{encoder_forward.21} parent=87 // pred_fallthru
        _
    $region88: #{encoder_forward.21} parent=5 // pred_fallthru
      _
  $region6: #{encoder_forward.21} parent=0 // loop_footer
    %s25 = sadd.s32 1, %s21
  $region7: #{encoder_forward.21} parent=0 // loop_footer_branch
    %20 = sbr.rel target = $region3
  $region8: #{encoder_forward.21} parent=0 // loop_exit
    _

</llo_original>
